<compile_context>
chip_gen: v7x
topology: tpu7x:2x2x1
jax: 0.10.0
libtpu: 0.0.40
codegen_flags: <defaults>
</compile_context>

<pallas_src>
import functools

import jax
import jax.numpy as jnp
from jax import lax
from jax.experimental import pallas as pl
from jax.experimental.pallas import tpu as pltpu


# ------------------------------ fused kernel ---------------------------------

def _vqvae_fused_kernel(
    # inputs (one block of B images per grid step; weights/codebook shared)
    x_ref,        # (Cin, R)  f32  channel-major, zero-padded flattened images
    mask_ref,     # (1, R)    f32  1.0 on interior pixels, 0.0 elsewhere
    w1_ref, b1_ref,           # (9, CH, Cin) bf16 , (CH, 1) f32   (enc conv1)
    w2_ref, b2_ref,           # (CH, 9*CH)   bf16 , (CH, 1) f32   (enc conv2)
    wpv_ref, bpv_ref,         # (D, CH)      bf16 , (D, 1)  f32   (pre-VQ 1x1)
    e_ref, et_ref, e2_ref,    # (K, D) bf16 , (D, K) f32 , (K, 1) f32 = ||e||^2
    wd1_ref, bd1_ref,         # (CH, 9*D)    bf16 , (CH, 1) f32   (dec conv1)
    wd2_ref, bd2_ref,         # (Cin, 9*CH)  bf16 , (Cin, 1) f32  (dec conv2)
    # outputs (per image block; all channel-major / lane-dense)
    z_ref,        # (D, R)   f32
    q_ref,        # (D, R)   f32  quantize (0 outside interiors)
    idx_ref,      # (1, R)   i32
    xrec_ref,     # (Cin, R) f32
    hist_ref,     # (K, 1)   f32  per-step code histogram (partial sum)
    sse_ref,      # (2, 1)   f32  [vq SSE, recon SSE] (partial sums)
    # scratch
    im2col_scr,   # (9*max(CH,D), R) bf16  im2col staging for the fused convs
    *, taps,      # 9 static lane-roll shifts, tap order t = kh*3 + kw
):
    f32, bf16 = jnp.float32, jnp.bfloat16
    mask = mask_ref[...]                                  # (1, R)

    def shifted(x, s):
        # out[:, r] = x[:, r + ofs]; circular wrap only hits masked rows.
        return x if s == 0 else pltpu.roll(x, shift=s, axis=1)

    def conv3x3_fused(x, w_ref, b_ref, relu):
        """3x3/stride1/pad1 conv as ONE K=9*Cin matmul via bf16 im2col scratch."""
        cin = x.shape[0]
        for t, s in enumerate(taps):
            im2col_scr[pl.ds(t * cin, cin), :] = shifted(x, s).astype(bf16)
        acc = jnp.dot(w_ref[...], im2col_scr[pl.ds(0, 9 * cin), :],
                      preferred_element_type=f32) + b_ref[...]
        if relu:
            acc = jnp.maximum(acc, 0.0)
        return acc * mask                                  # zero pad/ring/gaps

    # ------------------------------ encoder ----------------------------------
    x = x_ref[...]                                         # (Cin, R) f32
    # conv1: Cin=4 is sublane-unaligned -> keep 9 small accumulated matmuls.
    acc = None
    for t, s in enumerate(taps):
        part = jnp.dot(w1_ref[t], shifted(x, s).astype(bf16),
                       preferred_element_type=f32)
        acc = part if acc is None else acc + part
    h1 = jnp.maximum(acc + b1_ref[...], 0.0) * mask        # (CH, R)
    h2 = conv3x3_fused(h1, w2_ref, b2_ref, relu=True)      # (CH, R)

    # pre-VQ 1x1 conv
    z = jnp.dot(wpv_ref[...], h2.astype(bf16),
                preferred_element_type=f32) + bpv_ref[...]  # (D, R)
    z_ref[...] = z

    # ------------------------- vector quantizer ------------------------------
    # argmin_k ||z - e_k||^2 ; the column-constant ||z||^2 term is dropped.
    scores = jnp.dot(e_ref[...], z.astype(bf16),
                     preferred_element_type=f32)            # (K, R)
    d = e2_ref[...] - 2.0 * scores
    dmin = jnp.min(d, axis=0, keepdims=True)                # (1, R)
    num_codes = d.shape[0]
    code_iota = lax.broadcasted_iota(jnp.int32, d.shape, 0)
    idx = jnp.min(jnp.where(d <= dmin, code_iota, num_codes),
                  axis=0, keepdims=True)                    # (1, R)
    idx_ref[...] = idx
    onehot = jnp.where(code_iota == idx, 1.0, 0.0) * mask   # (K, R), masked
    # exact codebook gather (f32): one nonzero per interior column
    q = jnp.dot(et_ref[...], onehot, preferred_element_type=f32)   # (D, R)
    q_ref[...] = q
    hist_ref[...] = jnp.sum(onehot, axis=1, keepdims=True)  # (K, 1)

    vdiff = (q - z) * mask
    vq_sse = jnp.sum(jnp.sum(vdiff * vdiff, axis=1, keepdims=True),
                     axis=0, keepdims=True)                 # (1, 1)

    # ------------------------------ decoder ----------------------------------
    d1 = conv3x3_fused(q, wd1_ref, bd1_ref, relu=True)      # (CH, R)
    xrec = conv3x3_fused(d1, wd2_ref, bd2_ref, relu=False)  # (Cin, R)
    xrec_ref[...] = xrec

    rdiff = (xrec - x) * mask
    rec_sse = jnp.sum(jnp.sum(rdiff * rdiff, axis=1, keepdims=True),
                      axis=0, keepdims=True)                # (1, 1)
    two = lax.broadcasted_iota(jnp.int32, (2, 1), 0)
    sse_ref[...] = jnp.where(two == 0, vq_sse, rec_sse)     # (2, 1)


# ------------------------------ model / wrapper -------------------------------

def init_params(key, cin, hidden, embedding_dim, num_embeddings):
    ks = jax.random.split(key, 8)

    def w(k, shape, fan_in):
        return jax.random.normal(k, shape, jnp.float32) / jnp.sqrt(float(fan_in))

    return {
        "enc1_w": w(ks[0], (3, 3, cin, hidden), 9 * cin),            # HWIO
        "enc1_b": jnp.zeros((hidden,), jnp.float32),
        "enc2_w": w(ks[1], (3, 3, hidden, hidden), 9 * hidden),
        "enc2_b": jnp.zeros((hidden,), jnp.float32),
        "prevq_w": w(ks[2], (hidden, embedding_dim), hidden),
        "prevq_b": jnp.zeros((embedding_dim,), jnp.float32),
        "codebook": w(ks[3], (num_embeddings, embedding_dim), embedding_dim),
        "dec1_w": w(ks[4], (3, 3, embedding_dim, hidden), 9 * embedding_dim),
        "dec1_b": jnp.zeros((hidden,), jnp.float32),
        "dec2_w": w(ks[5], (3, 3, hidden, cin), 9 * hidden),
        "dec2_b": jnp.zeros((cin,), jnp.float32),
    }


def _round_up(x, m):
    return ((x + m - 1) // m) * m


def _pick_images_per_step(n, max_block=8):
    """Largest divisor of n <= max_block that still leaves >=2 grid steps
    (so v7x's two TensorCores both get work); falls back to 1."""
    best = 1
    for b in range(2, max_block + 1):
        if n % b == 0 and n // b >= 2:
            best = b
    return best


def vqvae_forward(params, inputs_nchw, data_variance, commitment_cost=0.25,
                  max_images_per_step=8):
    N, Cin, H, W = inputs_nchw.shape
    CH = params["enc1_b"].shape[0]
    D = params["prevq_b"].shape[0]
    K = params["codebook"].shape[0]

    HP, WP = H + 2, W + 2                    # zero-padded spatial dims
    P = HP * WP                              # flattened padded image length
    PE = _round_up(P, 128)                   # lane-aligned per-image column count

    # Per-step VMEM footprint is roughly ~0.7 MiB per image (activations,
    # im2col scratch, double-buffered IO windows), so 8 images/step stays far
    # below the scoped VMEM limit on v5e/v6e (128 MiB) and v7x (64 MiB).
    B = _pick_images_per_step(N, max_images_per_step)
    G = N // B
    R = B * PE                               # rows (lanes) per grid step

    f32, bf16 = jnp.float32, jnp.bfloat16

    # ---- input: NCHW -> channel-major, zero-padded, flat (Cin, N*PE) ---------
    xp = jnp.pad(inputs_nchw.astype(f32), ((0, 0), (0, 0), (1, 1), (1, 1)))
    xp = xp.reshape(N, Cin, P)
    xp = jnp.pad(xp, ((0, 0), (0, 0), (0, PE - P)))
    x_cm = jnp.transpose(xp, (1, 0, 2)).reshape(Cin, N * PE)

    # ---- interior mask for one image block: (1, R) ---------------------------
    r = jnp.arange(PE, dtype=jnp.int32)
    hh, ww = r // WP, r % WP
    inside = (r < P) & (hh >= 1) & (hh <= H) & (ww >= 1) & (ww <= W)
    mask = jnp.tile(inside.astype(f32), (B,)).reshape(1, R)

    # ---- weights: channel-major, tap-stacked, bf16 for the MXU ---------------
    def stack9(w_hwio):                      # (3,3,Cin,Cout) -> (Cout, 9*Cin)
        cin, cout = w_hwio.shape[2], w_hwio.shape[3]
        return jnp.transpose(w_hwio, (3, 0, 1, 2)).reshape(cout, 9 * cin).astype(bf16)

    w1 = jnp.transpose(params["enc1_w"], (0, 1, 3, 2)).reshape(9, CH, Cin).astype(bf16)
    b1 = params["enc1_b"].reshape(CH, 1).astype(f32)
    w2 = stack9(params["enc2_w"])
    b2 = params["enc2_b"].reshape(CH, 1).astype(f32)
    wpv = params["prevq_w"].T.astype(bf16)                 # (D, CH)
    bpv = params["prevq_b"].reshape(D, 1).astype(f32)
    e = params["codebook"].astype(f32)                     # (K, D)
    e_bf = e.astype(bf16)
    et = e.T                                               # (D, K) f32
    e2 = jnp.sum(e * e, axis=1, keepdims=True)             # (K, 1)
    wd1 = stack9(params["dec1_w"])
    bd1 = params["dec1_b"].reshape(CH, 1).astype(f32)
    wd2 = stack9(params["dec2_w"])
    bd2 = params["dec2_b"].reshape(Cin, 1).astype(f32)

    # static lane-roll shifts, tap order t = kh*3 + kw (matches stack9)
    taps = tuple(int((-((kh - 1) * WP + (kw - 1))) % R)
                 for kh in range(3) for kw in range(3))

    kern = functools.partial(_vqvae_fused_kernel, taps=taps)

    def fullspec(a):
        nd = a.ndim
        return pl.BlockSpec(a.shape, lambda i, _nd=nd: (0,) * _nd)

    def step_cols(c):
        return pl.BlockSpec((c, R), lambda i: (0, i))

    in_specs = [
        step_cols(Cin),                      # x (channel-major, per block)
        fullspec(mask),
        fullspec(w1), fullspec(b1),
        fullspec(w2), fullspec(b2),
        fullspec(wpv), fullspec(bpv),
        fullspec(e_bf), fullspec(et), fullspec(e2),
        fullspec(wd1), fullspec(bd1),
        fullspec(wd2), fullspec(bd2),
    ]
    out_shapes = (
        jax.ShapeDtypeStruct((D, N * PE), f32),            # z
        jax.ShapeDtypeStruct((D, N * PE), f32),            # quantize
        jax.ShapeDtypeStruct((1, N * PE), jnp.int32),      # encoding indices
        jax.ShapeDtypeStruct((Cin, N * PE), f32),          # x_recon
        jax.ShapeDtypeStruct((G, K, 1), f32),              # per-step histogram
        jax.ShapeDtypeStruct((G, 2, 1), f32),              # per-step [vq, rec] SSE
    )
    out_specs = (
        step_cols(D), step_cols(D), step_cols(1), step_cols(Cin),
        pl.BlockSpec((None, K, 1), lambda i: (i, 0, 0)),
        pl.BlockSpec((None, 2, 1), lambda i: (i, 0, 0)),
    )

    scr_rows = 9 * max(CH, D)
    z_cm, q_cm, idx_cm, xr_cm, hist, sse = pl.pallas_call(
        kern,
        out_shape=out_shapes,
        grid=(G,),
        in_specs=in_specs,
        out_specs=out_specs,
        scratch_shapes=[pltpu.VMEM((scr_rows, R), bf16)],
        compiler_params=pltpu.CompilerParams(dimension_semantics=("parallel",)),
    )(x_cm, mask, w1, b1, w2, b2, wpv, bpv, e_bf, et, e2, wd1, bd1, wd2, bd2)

    # ---- tiny jnp epilogue: strip padding, finalize global losses ------------
    def strip(a_cm, c):                      # (c, N*PE) -> (N, c, H, W)
        a = a_cm.reshape(c, N, PE)[:, :, :P].reshape(c, N, HP, WP)
        a = a[:, :, 1:H + 1, 1:W + 1]
        return jnp.transpose(a, (1, 0, 2, 3))

    z = strip(z_cm, D)
    quantize = strip(q_cm, D)
    x_recon = strip(xr_cm, Cin)
    idx = idx_cm.reshape(N, PE)[:, :P].reshape(N, HP, WP)[:, 1:H + 1, 1:W + 1]

    nhw = float(N * H * W)
    vq_sse = jnp.sum(sse[:, 0, 0])
    rec_sse = jnp.sum(sse[:, 1, 0])
    e_latent_loss = vq_sse / (nhw * D)
    # forward value: q_latent_loss == e_latent_loss (stop-gradients only matter
    # for backward), so loss = (1 + commitment_cost) * e_latent_loss.
    vq_loss = (1.0 + commitment_cost) * e_latent_loss
    avg_probs = jnp.sum(hist[:, :, 0], axis=0) / nhw
    perplexity = jnp.exp(-jnp.sum(avg_probs * jnp.log(avg_probs + 1e-10)))
    recon_error = rec_sse / (nhw * Cin) / data_variance
    loss = recon_error + vq_loss

    vq_output = {
        "quantize": quantize,                              # NCHW
        "loss": vq_loss,
        "encoding_indices": idx,
        "perplexity": perplexity,
    }
    return {
        "z": z,                                            # NCHW
        "x_recon": x_recon,                                # NCHW
        "loss": loss,
        "recon_error": recon_error,
        "vq_output": vq_output,
    }


if __name__ == "__main__":
    key = jax.random.PRNGKey(0)
    k_in, k_par = jax.random.split(key)

    N, Cin, H, W = 2, 4, 16, 16
    hidden, embed_dim, num_embeddings = 32, 16, 32
    data_variance = 0.5

    inputs = jax.random.normal(k_in, (N, Cin, H, W), jnp.float32)  # NCHW (torch)
    params = init_params(k_par, Cin, hidden, embed_dim, num_embeddings)

    fwd = jax.jit(functools.partial(vqvae_forward, data_variance=data_variance))
    out = fwd(params, inputs)
    jax.block_until_ready(out)

    assert out["x_recon"].shape == (N, Cin, H, W)
    assert out["z"].shape == (N, embed_dim, H, W)
    assert out["vq_output"]["quantize"].shape == (N, embed_dim, H, W)
    assert out["vq_output"]["encoding_indices"].shape == (N, H, W)
    assert bool(jnp.isfinite(out["loss"]))
    print("KERNEL_OK")
</pallas_src>

<mosaic_0001>
module attributes {stable_mosaic.version = 11 : i64} {
  func.func @_vqvae_fused_kernel(%arg0: i32, %arg1: memref<4x384xf32, #tpu.memory_space<vmem>>, %arg2: memref<1x384xf32, #tpu.memory_space<vmem>>, %arg3: memref<9x32x4xbf16, #tpu.memory_space<vmem>>, %arg4: memref<32x1xf32, #tpu.memory_space<vmem>>, %arg5: memref<32x288xbf16, #tpu.memory_space<vmem>>, %arg6: memref<32x1xf32, #tpu.memory_space<vmem>>, %arg7: memref<16x32xbf16, #tpu.memory_space<vmem>>, %arg8: memref<16x1xf32, #tpu.memory_space<vmem>>, %arg9: memref<32x16xbf16, #tpu.memory_space<vmem>>, %arg10: memref<16x32xf32, #tpu.memory_space<vmem>>, %arg11: memref<32x1xf32, #tpu.memory_space<vmem>>, %arg12: memref<32x144xbf16, #tpu.memory_space<vmem>>, %arg13: memref<32x1xf32, #tpu.memory_space<vmem>>, %arg14: memref<4x288xbf16, #tpu.memory_space<vmem>>, %arg15: memref<4x1xf32, #tpu.memory_space<vmem>>, %arg16: memref<16x384xf32, #tpu.memory_space<vmem>>, %arg17: memref<16x384xf32, #tpu.memory_space<vmem>>, %arg18: memref<1x384xi32, #tpu.memory_space<vmem>>, %arg19: memref<4x384xf32, #tpu.memory_space<vmem>>, %arg20: memref<1x32x1xf32, #tpu.memory_space<vmem>>, %arg21: memref<1x2x1xf32, #tpu.memory_space<vmem>>, %arg22: memref<288x384xbf16, #tpu.memory_space<vmem>>) attributes {dimension_semantics = [#tpu.dimension_semantics<parallel>], iteration_bounds = array<i64: 2>, scalar_prefetch = 0 : i64, scratch_operands = 1 : i64, tpu.core_type = #tpu.core_type<tc>, window_params = [{transform_indices = @transform_0, window_bounds = array<i64: 4, 384>}, {pipeline_mode = #tpu.pipeline_mode<synchronous>, transform_indices = @transform_1, window_bounds = array<i64: 1, 384>}, {pipeline_mode = #tpu.pipeline_mode<synchronous>, transform_indices = @transform_2, window_bounds = array<i64: 9, 32, 4>}, {pipeline_mode = #tpu.pipeline_mode<synchronous>, transform_indices = @transform_3, window_bounds = array<i64: 32, 1>}, {pipeline_mode = #tpu.pipeline_mode<synchronous>, transform_indices = @transform_4, window_bounds = array<i64: 32, 288>}, {pipeline_mode = #tpu.pipeline_mode<synchronous>, transform_indices = @transform_5, window_bounds = array<i64: 32, 1>}, {pipeline_mode = #tpu.pipeline_mode<synchronous>, transform_indices = @transform_6, window_bounds = array<i64: 16, 32>}, {pipeline_mode = #tpu.pipeline_mode<synchronous>, transform_indices = @transform_7, window_bounds = array<i64: 16, 1>}, {pipeline_mode = #tpu.pipeline_mode<synchronous>, transform_indices = @transform_8, window_bounds = array<i64: 32, 16>}, {pipeline_mode = #tpu.pipeline_mode<synchronous>, transform_indices = @transform_9, window_bounds = array<i64: 16, 32>}, {pipeline_mode = #tpu.pipeline_mode<synchronous>, transform_indices = @transform_10, window_bounds = array<i64: 32, 1>}, {pipeline_mode = #tpu.pipeline_mode<synchronous>, transform_indices = @transform_11, window_bounds = array<i64: 32, 144>}, {pipeline_mode = #tpu.pipeline_mode<synchronous>, transform_indices = @transform_12, window_bounds = array<i64: 32, 1>}, {pipeline_mode = #tpu.pipeline_mode<synchronous>, transform_indices = @transform_13, window_bounds = array<i64: 4, 288>}, {pipeline_mode = #tpu.pipeline_mode<synchronous>, transform_indices = @transform_14, window_bounds = array<i64: 4, 1>}, {transform_indices = @transform_15, window_bounds = array<i64: 16, 384>}, {transform_indices = @transform_16, window_bounds = array<i64: 16, 384>}, {transform_indices = @transform_17, window_bounds = array<i64: 1, 384>}, {transform_indices = @transform_18, window_bounds = array<i64: 4, 384>}, {transform_indices = @transform_19, window_bounds = array<i64: 1, 32, 1>}, {transform_indices = @transform_20, window_bounds = array<i64: 1, 2, 1>}]} {
    %c0 = arith.constant 0 : index
    %c0_0 = arith.constant 0 : index
    %0 = vector.load %arg2[%c0, %c0_0] : memref<1x384xf32, #tpu.memory_space<vmem>>, vector<1x384xf32>
    %c0_1 = arith.constant 0 : index
    %c0_2 = arith.constant 0 : index
    %1 = vector.load %arg1[%c0_1, %c0_2] : memref<4x384xf32, #tpu.memory_space<vmem>>, vector<4x384xf32>
    %c0_3 = arith.constant 0 : index
    %c0_4 = arith.constant 0 : index
    %c0_5 = arith.constant 0 : index
    %2 = vector.load %arg3[%c0_3, %c0_4, %c0_5] : memref<9x32x4xbf16, #tpu.memory_space<vmem>>, vector<1x32x4xbf16>
    %3 = vector.shape_cast %2 : vector<1x32x4xbf16> to vector<32x4xbf16>
    %c19_i32 = arith.constant 19 : i32
    %4 = tpu.dynamic_rotate %1 by %c19_i32 dim 1 : vector<4x384xf32>, i32 -> vector<4x384xf32>
    %5 = arith.truncf %4 : vector<4x384xf32> to vector<4x384xbf16>
    %cst = arith.constant dense<0.000000e+00> : vector<32x384xf32>
    %6 = tpu.matmul %3, %5, %cst {dimension_numbers = #tpu.dot_dimension_numbers<[1], [0], [0], [1], [0, 0, 1, 1], [], []>} : vector<32x4xbf16>, vector<4x384xbf16>, vector<32x384xf32> -> vector<32x384xf32>
    %c1 = arith.constant 1 : index
    %c0_6 = arith.constant 0 : index
    %c0_7 = arith.constant 0 : index
    %7 = vector.load %arg3[%c1, %c0_6, %c0_7] : memref<9x32x4xbf16, #tpu.memory_space<vmem>>, vector<1x32x4xbf16>
    %8 = vector.shape_cast %7 : vector<1x32x4xbf16> to vector<32x4xbf16>
    %c18_i32 = arith.constant 18 : i32
    %9 = tpu.dynamic_rotate %1 by %c18_i32 dim 1 : vector<4x384xf32>, i32 -> vector<4x384xf32>
    %10 = arith.truncf %9 : vector<4x384xf32> to vector<4x384xbf16>
    %cst_8 = arith.constant dense<0.000000e+00> : vector<32x384xf32>
    %11 = tpu.matmul %8, %10, %cst_8 {dimension_numbers = #tpu.dot_dimension_numbers<[1], [0], [0], [1], [0, 0, 1, 1], [], []>} : vector<32x4xbf16>, vector<4x384xbf16>, vector<32x384xf32> -> vector<32x384xf32>
    %12 = arith.addf %6, %11 : vector<32x384xf32>
    %c2 = arith.constant 2 : index
    %c0_9 = arith.constant 0 : index
    %c0_10 = arith.constant 0 : index
    %13 = vector.load %arg3[%c2, %c0_9, %c0_10] : memref<9x32x4xbf16, #tpu.memory_space<vmem>>, vector<1x32x4xbf16>
    %14 = vector.shape_cast %13 : vector<1x32x4xbf16> to vector<32x4xbf16>
    %c17_i32 = arith.constant 17 : i32
    %15 = tpu.dynamic_rotate %1 by %c17_i32 dim 1 : vector<4x384xf32>, i32 -> vector<4x384xf32>
    %16 = arith.truncf %15 : vector<4x384xf32> to vector<4x384xbf16>
    %cst_11 = arith.constant dense<0.000000e+00> : vector<32x384xf32>
    %17 = tpu.matmul %14, %16, %cst_11 {dimension_numbers = #tpu.dot_dimension_numbers<[1], [0], [0], [1], [0, 0, 1, 1], [], []>} : vector<32x4xbf16>, vector<4x384xbf16>, vector<32x384xf32> -> vector<32x384xf32>
    %18 = arith.addf %12, %17 : vector<32x384xf32>
    %c3 = arith.constant 3 : index
    %c0_12 = arith.constant 0 : index
    %c0_13 = arith.constant 0 : index
    %19 = vector.load %arg3[%c3, %c0_12, %c0_13] : memref<9x32x4xbf16, #tpu.memory_space<vmem>>, vector<1x32x4xbf16>
    %20 = vector.shape_cast %19 : vector<1x32x4xbf16> to vector<32x4xbf16>
    %c1_i32 = arith.constant 1 : i32
    %21 = tpu.dynamic_rotate %1 by %c1_i32 dim 1 : vector<4x384xf32>, i32 -> vector<4x384xf32>
    %22 = arith.truncf %21 : vector<4x384xf32> to vector<4x384xbf16>
    %cst_14 = arith.constant dense<0.000000e+00> : vector<32x384xf32>
    %23 = tpu.matmul %20, %22, %cst_14 {dimension_numbers = #tpu.dot_dimension_numbers<[1], [0], [0], [1], [0, 0, 1, 1], [], []>} : vector<32x4xbf16>, vector<4x384xbf16>, vector<32x384xf32> -> vector<32x384xf32>
    %24 = arith.addf %18, %23 : vector<32x384xf32>
    %c4 = arith.constant 4 : index
    %c0_15 = arith.constant 0 : index
    %c0_16 = arith.constant 0 : index
    %25 = vector.load %arg3[%c4, %c0_15, %c0_16] : memref<9x32x4xbf16, #tpu.memory_space<vmem>>, vector<1x32x4xbf16>
    %26 = vector.shape_cast %25 : vector<1x32x4xbf16> to vector<32x4xbf16>
    %27 = arith.truncf %1 : vector<4x384xf32> to vector<4x384xbf16>
    %cst_17 = arith.constant dense<0.000000e+00> : vector<32x384xf32>
    %28 = tpu.matmul %26, %27, %cst_17 {dimension_numbers = #tpu.dot_dimension_numbers<[1], [0], [0], [1], [0, 0, 1, 1], [], []>} : vector<32x4xbf16>, vector<4x384xbf16>, vector<32x384xf32> -> vector<32x384xf32>
    %29 = arith.addf %24, %28 : vector<32x384xf32>
    %c5 = arith.constant 5 : index
    %c0_18 = arith.constant 0 : index
    %c0_19 = arith.constant 0 : index
    %30 = vector.load %arg3[%c5, %c0_18, %c0_19] : memref<9x32x4xbf16, #tpu.memory_space<vmem>>, vector<1x32x4xbf16>
    %31 = vector.shape_cast %30 : vector<1x32x4xbf16> to vector<32x4xbf16>
    %c383_i32 = arith.constant 383 : i32
    %32 = tpu.dynamic_rotate %1 by %c383_i32 dim 1 : vector<4x384xf32>, i32 -> vector<4x384xf32>
    %33 = arith.truncf %32 : vector<4x384xf32> to vector<4x384xbf16>
    %cst_20 = arith.constant dense<0.000000e+00> : vector<32x384xf32>
    %34 = tpu.matmul %31, %33, %cst_20 {dimension_numbers = #tpu.dot_dimension_numbers<[1], [0], [0], [1], [0, 0, 1, 1], [], []>} : vector<32x4xbf16>, vector<4x384xbf16>, vector<32x384xf32> -> vector<32x384xf32>
    %35 = arith.addf %29, %34 : vector<32x384xf32>
    %c6 = arith.constant 6 : index
    %c0_21 = arith.constant 0 : index
    %c0_22 = arith.constant 0 : index
    %36 = vector.load %arg3[%c6, %c0_21, %c0_22] : memref<9x32x4xbf16, #tpu.memory_space<vmem>>, vector<1x32x4xbf16>
    %37 = vector.shape_cast %36 : vector<1x32x4xbf16> to vector<32x4xbf16>
    %c367_i32 = arith.constant 367 : i32
    %38 = tpu.dynamic_rotate %1 by %c367_i32 dim 1 : vector<4x384xf32>, i32 -> vector<4x384xf32>
    %39 = arith.truncf %38 : vector<4x384xf32> to vector<4x384xbf16>
    %cst_23 = arith.constant dense<0.000000e+00> : vector<32x384xf32>
    %40 = tpu.matmul %37, %39, %cst_23 {dimension_numbers = #tpu.dot_dimension_numbers<[1], [0], [0], [1], [0, 0, 1, 1], [], []>} : vector<32x4xbf16>, vector<4x384xbf16>, vector<32x384xf32> -> vector<32x384xf32>
    %41 = arith.addf %35, %40 : vector<32x384xf32>
    %c7 = arith.constant 7 : index
    %c0_24 = arith.constant 0 : index
    %c0_25 = arith.constant 0 : index
    %42 = vector.load %arg3[%c7, %c0_24, %c0_25] : memref<9x32x4xbf16, #tpu.memory_space<vmem>>, vector<1x32x4xbf16>
    %43 = vector.shape_cast %42 : vector<1x32x4xbf16> to vector<32x4xbf16>
    %c366_i32 = arith.constant 366 : i32
    %44 = tpu.dynamic_rotate %1 by %c366_i32 dim 1 : vector<4x384xf32>, i32 -> vector<4x384xf32>
    %45 = arith.truncf %44 : vector<4x384xf32> to vector<4x384xbf16>
    %cst_26 = arith.constant dense<0.000000e+00> : vector<32x384xf32>
    %46 = tpu.matmul %43, %45, %cst_26 {dimension_numbers = #tpu.dot_dimension_numbers<[1], [0], [0], [1], [0, 0, 1, 1], [], []>} : vector<32x4xbf16>, vector<4x384xbf16>, vector<32x384xf32> -> vector<32x384xf32>
    %47 = arith.addf %41, %46 : vector<32x384xf32>
    %c8 = arith.constant 8 : index
    %c0_27 = arith.constant 0 : index
    %c0_28 = arith.constant 0 : index
    %48 = vector.load %arg3[%c8, %c0_27, %c0_28] : memref<9x32x4xbf16, #tpu.memory_space<vmem>>, vector<1x32x4xbf16>
    %49 = vector.shape_cast %48 : vector<1x32x4xbf16> to vector<32x4xbf16>
    %c365_i32 = arith.constant 365 : i32
    %50 = tpu.dynamic_rotate %1 by %c365_i32 dim 1 : vector<4x384xf32>, i32 -> vector<4x384xf32>
    %51 = arith.truncf %50 : vector<4x384xf32> to vector<4x384xbf16>
    %cst_29 = arith.constant dense<0.000000e+00> : vector<32x384xf32>
    %52 = tpu.matmul %49, %51, %cst_29 {dimension_numbers = #tpu.dot_dimension_numbers<[1], [0], [0], [1], [0, 0, 1, 1], [], []>} : vector<32x4xbf16>, vector<4x384xbf16>, vector<32x384xf32> -> vector<32x384xf32>
    %53 = arith.addf %47, %52 : vector<32x384xf32>
    %c0_30 = arith.constant 0 : index
    %c0_31 = arith.constant 0 : index
    %54 = vector.load %arg4[%c0_30, %c0_31] : memref<32x1xf32, #tpu.memory_space<vmem>>, vector<32x1xf32>
    %55 = vector.broadcast %54 : vector<32x1xf32> to vector<32x384xf32>
    %56 = arith.addf %53, %55 : vector<32x384xf32>
    %cst_32 = arith.constant 0.000000e+00 : f32
    %57 = vector.broadcast %cst_32 : f32 to vector<32x384xf32>
    %58 = arith.maximumf %56, %57 : vector<32x384xf32>
    %59 = vector.broadcast %0 : vector<1x384xf32> to vector<32x384xf32>
    %60 = arith.mulf %58, %59 : vector<32x384xf32>
    %c19_i32_33 = arith.constant 19 : i32
    %61 = tpu.dynamic_rotate %60 by %c19_i32_33 dim 1 : vector<32x384xf32>, i32 -> vector<32x384xf32>
    %62 = arith.truncf %61 : vector<32x384xf32> to vector<32x384xbf16>
    %c0_34 = arith.constant 0 : index
    %c0_35 = arith.constant 0 : index
    %63 = vector.load %arg22[%c0_34, %c0_35] : memref<288x384xbf16, #tpu.memory_space<vmem>>, vector<32x384xbf16>
    tpu.vector_store %arg22[%c0_34, %c0_35], %62 {strides = array<i32>} : memref<288x384xbf16, #tpu.memory_space<vmem>>, vector<32x384xbf16>,
    %c18_i32_36 = arith.constant 18 : i32
    %64 = tpu.dynamic_rotate %60 by %c18_i32_36 dim 1 : vector<32x384xf32>, i32 -> vector<32x384xf32>
    %65 = arith.truncf %64 : vector<32x384xf32> to vector<32x384xbf16>
    %c32 = arith.constant 32 : index
    %c0_37 = arith.constant 0 : index
    %66 = vector.load %arg22[%c32, %c0_37] : memref<288x384xbf16, #tpu.memory_space<vmem>>, vector<32x384xbf16>
    tpu.vector_store %arg22[%c32, %c0_37], %65 {strides = array<i32>} : memref<288x384xbf16, #tpu.memory_space<vmem>>, vector<32x384xbf16>,
    %c17_i32_38 = arith.constant 17 : i32
    %67 = tpu.dynamic_rotate %60 by %c17_i32_38 dim 1 : vector<32x384xf32>, i32 -> vector<32x384xf32>
    %68 = arith.truncf %67 : vector<32x384xf32> to vector<32x384xbf16>
    %c64 = arith.constant 64 : index
    %c0_39 = arith.constant 0 : index
    %69 = vector.load %arg22[%c64, %c0_39] : memref<288x384xbf16, #tpu.memory_space<vmem>>, vector<32x384xbf16>
    tpu.vector_store %arg22[%c64, %c0_39], %68 {strides = array<i32>} : memref<288x384xbf16, #tpu.memory_space<vmem>>, vector<32x384xbf16>,
    %c1_i32_40 = arith.constant 1 : i32
    %70 = tpu.dynamic_rotate %60 by %c1_i32_40 dim 1 : vector<32x384xf32>, i32 -> vector<32x384xf32>
    %71 = arith.truncf %70 : vector<32x384xf32> to vector<32x384xbf16>
    %c96 = arith.constant 96 : index
    %c0_41 = arith.constant 0 : index
    %72 = vector.load %arg22[%c96, %c0_41] : memref<288x384xbf16, #tpu.memory_space<vmem>>, vector<32x384xbf16>
    tpu.vector_store %arg22[%c96, %c0_41], %71 {strides = array<i32>} : memref<288x384xbf16, #tpu.memory_space<vmem>>, vector<32x384xbf16>,
    %73 = arith.truncf %60 : vector<32x384xf32> to vector<32x384xbf16>
    %c128 = arith.constant 128 : index
    %c0_42 = arith.constant 0 : index
    %74 = vector.load %arg22[%c128, %c0_42] : memref<288x384xbf16, #tpu.memory_space<vmem>>, vector<32x384xbf16>
    tpu.vector_store %arg22[%c128, %c0_42], %73 {strides = array<i32>} : memref<288x384xbf16, #tpu.memory_space<vmem>>, vector<32x384xbf16>,
    %c383_i32_43 = arith.constant 383 : i32
    %75 = tpu.dynamic_rotate %60 by %c383_i32_43 dim 1 : vector<32x384xf32>, i32 -> vector<32x384xf32>
    %76 = arith.truncf %75 : vector<32x384xf32> to vector<32x384xbf16>
    %c160 = arith.constant 160 : index
    %c0_44 = arith.constant 0 : index
    %77 = vector.load %arg22[%c160, %c0_44] : memref<288x384xbf16, #tpu.memory_space<vmem>>, vector<32x384xbf16>
    tpu.vector_store %arg22[%c160, %c0_44], %76 {strides = array<i32>} : memref<288x384xbf16, #tpu.memory_space<vmem>>, vector<32x384xbf16>,
    %c367_i32_45 = arith.constant 367 : i32
    %78 = tpu.dynamic_rotate %60 by %c367_i32_45 dim 1 : vector<32x384xf32>, i32 -> vector<32x384xf32>
    %79 = arith.truncf %78 : vector<32x384xf32> to vector<32x384xbf16>
    %c192 = arith.constant 192 : index
    %c0_46 = arith.constant 0 : index
    %80 = vector.load %arg22[%c192, %c0_46] : memref<288x384xbf16, #tpu.memory_space<vmem>>, vector<32x384xbf16>
    tpu.vector_store %arg22[%c192, %c0_46], %79 {strides = array<i32>} : memref<288x384xbf16, #tpu.memory_space<vmem>>, vector<32x384xbf16>,
    %c366_i32_47 = arith.constant 366 : i32
    %81 = tpu.dynamic_rotate %60 by %c366_i32_47 dim 1 : vector<32x384xf32>, i32 -> vector<32x384xf32>
    %82 = arith.truncf %81 : vector<32x384xf32> to vector<32x384xbf16>
    %c224 = arith.constant 224 : index
    %c0_48 = arith.constant 0 : index
    %83 = vector.load %arg22[%c224, %c0_48] : memref<288x384xbf16, #tpu.memory_space<vmem>>, vector<32x384xbf16>
    tpu.vector_store %arg22[%c224, %c0_48], %82 {strides = array<i32>} : memref<288x384xbf16, #tpu.memory_space<vmem>>, vector<32x384xbf16>,
    %c365_i32_49 = arith.constant 365 : i32
    %84 = tpu.dynamic_rotate %60 by %c365_i32_49 dim 1 : vector<32x384xf32>, i32 -> vector<32x384xf32>
    %85 = arith.truncf %84 : vector<32x384xf32> to vector<32x384xbf16>
    %c256 = arith.constant 256 : index
    %c0_50 = arith.constant 0 : index
    %86 = vector.load %arg22[%c256, %c0_50] : memref<288x384xbf16, #tpu.memory_space<vmem>>, vector<32x384xbf16>
    tpu.vector_store %arg22[%c256, %c0_50], %85 {strides = array<i32>} : memref<288x384xbf16, #tpu.memory_space<vmem>>, vector<32x384xbf16>,
    %c0_51 = arith.constant 0 : index
    %c0_52 = arith.constant 0 : index
    %87 = vector.load %arg5[%c0_51, %c0_52] : memref<32x288xbf16, #tpu.memory_space<vmem>>, vector<32x288xbf16>
    %c0_53 = arith.constant 0 : index
    %c0_54 = arith.constant 0 : index
    %88 = vector.load %arg22[%c0_53, %c0_54] : memref<288x384xbf16, #tpu.memory_space<vmem>>, vector<288x384xbf16>
    %cst_55 = arith.constant dense<0.000000e+00> : vector<32x384xf32>
    %89 = tpu.matmul %87, %88, %cst_55 {dimension_numbers = #tpu.dot_dimension_numbers<[1], [0], [0], [1], [0, 0, 1, 1], [], []>} : vector<32x288xbf16>, vector<288x384xbf16>, vector<32x384xf32> -> vector<32x384xf32>
    %c0_56 = arith.constant 0 : index
    %c0_57 = arith.constant 0 : index
    %90 = vector.load %arg6[%c0_56, %c0_57] : memref<32x1xf32, #tpu.memory_space<vmem>>, vector<32x1xf32>
    %91 = vector.broadcast %90 : vector<32x1xf32> to vector<32x384xf32>
    %92 = arith.addf %89, %91 : vector<32x384xf32>
    %cst_58 = arith.constant 0.000000e+00 : f32
    %93 = vector.broadcast %cst_58 : f32 to vector<32x384xf32>
    %94 = arith.maximumf %92, %93 : vector<32x384xf32>
    %95 = vector.broadcast %0 : vector<1x384xf32> to vector<32x384xf32>
    %96 = arith.mulf %94, %95 : vector<32x384xf32>
    %c0_59 = arith.constant 0 : index
    %c0_60 = arith.constant 0 : index
    %97 = vector.load %arg7[%c0_59, %c0_60] : memref<16x32xbf16, #tpu.memory_space<vmem>>, vector<16x32xbf16>
    %98 = arith.truncf %96 : vector<32x384xf32> to vector<32x384xbf16>
    %cst_61 = arith.constant dense<0.000000e+00> : vector<16x384xf32>
    %99 = tpu.matmul %97, %98, %cst_61 {dimension_numbers = #tpu.dot_dimension_numbers<[1], [0], [0], [1], [0, 0, 1, 1], [], []>} : vector<16x32xbf16>, vector<32x384xbf16>, vector<16x384xf32> -> vector<16x384xf32>
    %c0_62 = arith.constant 0 : index
    %c0_63 = arith.constant 0 : index
    %100 = vector.load %arg8[%c0_62, %c0_63] : memref<16x1xf32, #tpu.memory_space<vmem>>, vector<16x1xf32>
    %101 = vector.broadcast %100 : vector<16x1xf32> to vector<16x384xf32>
    %102 = arith.addf %99, %101 : vector<16x384xf32>
    %c0_64 = arith.constant 0 : index
    %c0_65 = arith.constant 0 : index
    %103 = vector.load %arg16[%c0_64, %c0_65] : memref<16x384xf32, #tpu.memory_space<vmem>>, vector<16x384xf32>
    tpu.vector_store %arg16[%c0_64, %c0_65], %102 {strides = array<i32>} : memref<16x384xf32, #tpu.memory_space<vmem>>, vector<16x384xf32>,
    %c0_66 = arith.constant 0 : index
    %c0_67 = arith.constant 0 : index
    %104 = vector.load %arg9[%c0_66, %c0_67] : memref<32x16xbf16, #tpu.memory_space<vmem>>, vector<32x16xbf16>
    %105 = arith.truncf %102 : vector<16x384xf32> to vector<16x384xbf16>
    %cst_68 = arith.constant dense<0.000000e+00> : vector<32x384xf32>
    %106 = tpu.matmul %104, %105, %cst_68 {dimension_numbers = #tpu.dot_dimension_numbers<[1], [0], [0], [1], [0, 0, 1, 1], [], []>} : vector<32x16xbf16>, vector<16x384xbf16>, vector<32x384xf32> -> vector<32x384xf32>
    %c0_69 = arith.constant 0 : index
    %c0_70 = arith.constant 0 : index
    %107 = vector.load %arg11[%c0_69, %c0_70] : memref<32x1xf32, #tpu.memory_space<vmem>>, vector<32x1xf32>
    %cst_71 = arith.constant 2.000000e+00 : f32
    %108 = vector.broadcast %cst_71 : f32 to vector<32x384xf32>
    %109 = arith.mulf %108, %106 : vector<32x384xf32>
    %110 = vector.broadcast %107 : vector<32x1xf32> to vector<32x384xf32>
    %111 = arith.subf %110, %109 : vector<32x384xf32>
    %cst_72 = arith.constant dense<0x7F800000> : vector<384xf32>
    %112 = vector.multi_reduction <minimumf>, %111, %cst_72 [0] : vector<32x384xf32> to vector<384xf32>
    %113 = vector.shape_cast %112 : vector<384xf32> to vector<1x384xf32>
    %114 = tpu.iota {dimensions = array<i32: 0>} : vector<32x384xi32>
    %115 = vector.broadcast %113 : vector<1x384xf32> to vector<32x384xf32>
    %116 = arith.cmpf ole, %111, %115 : vector<32x384xf32>
    %c32_i32 = arith.constant 32 : i32
    %117 = vector.broadcast %c32_i32 : i32 to vector<32x384xi32>
    %118 = arith.select %116, %114, %117 : vector<32x384xi1>, vector<32x384xi32>
    %cst_73 = arith.constant dense<2147483647> : vector<384xi32>
    %119 = vector.multi_reduction <minsi>, %118, %cst_73 [0] : vector<32x384xi32> to vector<384xi32>
    %120 = vector.shape_cast %119 : vector<384xi32> to vector<1x384xi32>
    %c0_74 = arith.constant 0 : index
    %c0_75 = arith.constant 0 : index
    %121 = vector.load %arg18[%c0_74, %c0_75] : memref<1x384xi32, #tpu.memory_space<vmem>>, vector<1x384xi32>
    tpu.vector_store %arg18[%c0_74, %c0_75], %120 {strides = array<i32>} : memref<1x384xi32, #tpu.memory_space<vmem>>, vector<1x384xi32>,
    %122 = vector.broadcast %120 : vector<1x384xi32> to vector<32x384xi32>
    %123 = arith.cmpi eq, %114, %122 : vector<32x384xi32>
    %cst_76 = arith.constant 1.000000e+00 : f32
    %cst_77 = arith.constant 0.000000e+00 : f32
    %124 = vector.broadcast %cst_76 : f32 to vector<32x384xf32>
    %125 = vector.broadcast %cst_77 : f32 to vector<32x384xf32>
    %126 = arith.select %123, %124, %125 : vector<32x384xi1>, vector<32x384xf32>
    %127 = vector.broadcast %0 : vector<1x384xf32> to vector<32x384xf32>
    %128 = arith.mulf %126, %127 : vector<32x384xf32>
    %c0_78 = arith.constant 0 : index
    %c0_79 = arith.constant 0 : index
    %129 = vector.load %arg10[%c0_78, %c0_79] : memref<16x32xf32, #tpu.memory_space<vmem>>, vector<16x32xf32>
    %cst_80 = arith.constant dense<0.000000e+00> : vector<16x384xf32>
    %130 = tpu.matmul %129, %128, %cst_80 {dimension_numbers = #tpu.dot_dimension_numbers<[1], [0], [0], [1], [0, 0, 1, 1], [], []>} : vector<16x32xf32>, vector<32x384xf32>, vector<16x384xf32> -> vector<16x384xf32>
    %c0_81 = arith.constant 0 : index
    %c0_82 = arith.constant 0 : index
    %131 = vector.load %arg17[%c0_81, %c0_82] : memref<16x384xf32, #tpu.memory_space<vmem>>, vector<16x384xf32>
    tpu.vector_store %arg17[%c0_81, %c0_82], %130 {strides = array<i32>} : memref<16x384xf32, #tpu.memory_space<vmem>>, vector<16x384xf32>,
    %cst_83 = arith.constant dense<0.000000e+00> : vector<32xf32>
    %132 = vector.multi_reduction <add>, %128, %cst_83 [1] : vector<32x384xf32> to vector<32xf32>
    %133 = vector.shape_cast %132 : vector<32xf32> to vector<32x1xf32>
    %c0_84 = arith.constant 0 : index
    %c0_85 = arith.constant 0 : index
    %c0_86 = arith.constant 0 : index
    %134 = vector.load %arg20[%c0_84, %c0_85, %c0_86] : memref<1x32x1xf32, #tpu.memory_space<vmem>>, vector<1x32x1xf32>
    %135 = vector.shape_cast %134 : vector<1x32x1xf32> to vector<32x1xf32>
    %136 = vector.shape_cast %133 : vector<32x1xf32> to vector<1x32x1xf32>
    tpu.vector_store %arg20[%c0_84, %c0_85, %c0_86], %136 {strides = array<i32>} : memref<1x32x1xf32, #tpu.memory_space<vmem>>, vector<1x32x1xf32>,
    %137 = arith.subf %130, %102 : vector<16x384xf32>
    %138 = vector.broadcast %0 : vector<1x384xf32> to vector<16x384xf32>
    %139 = arith.mulf %137, %138 : vector<16x384xf32>
    %140 = arith.mulf %139, %139 : vector<16x384xf32>
    %cst_87 = arith.constant dense<0.000000e+00> : vector<16xf32>
    %141 = vector.multi_reduction <add>, %140, %cst_87 [1] : vector<16x384xf32> to vector<16xf32>
    %142 = vector.shape_cast %141 : vector<16xf32> to vector<16x1xf32>
    %cst_88 = arith.constant dense<0.000000e+00> : vector<1xf32>
    %143 = vector.multi_reduction <add>, %142, %cst_88 [0] : vector<16x1xf32> to vector<1xf32>
    %144 = vector.shape_cast %143 : vector<1xf32> to vector<1x1xf32>
    %c19_i32_89 = arith.constant 19 : i32
    %145 = tpu.dynamic_rotate %130 by %c19_i32_89 dim 1 : vector<16x384xf32>, i32 -> vector<16x384xf32>
    %146 = arith.truncf %145 : vector<16x384xf32> to vector<16x384xbf16>
    %c0_90 = arith.constant 0 : index
    %c0_91 = arith.constant 0 : index
    %147 = vector.load %arg22[%c0_90, %c0_91] : memref<288x384xbf16, #tpu.memory_space<vmem>>, vector<16x384xbf16>
    tpu.vector_store %arg22[%c0_90, %c0_91], %146 {strides = array<i32>} : memref<288x384xbf16, #tpu.memory_space<vmem>>, vector<16x384xbf16>,
    %c18_i32_92 = arith.constant 18 : i32
    %148 = tpu.dynamic_rotate %130 by %c18_i32_92 dim 1 : vector<16x384xf32>, i32 -> vector<16x384xf32>
    %149 = arith.truncf %148 : vector<16x384xf32> to vector<16x384xbf16>
    %c16 = arith.constant 16 : index
    %c0_93 = arith.constant 0 : index
    %150 = vector.load %arg22[%c16, %c0_93] : memref<288x384xbf16, #tpu.memory_space<vmem>>, vector<16x384xbf16>
    tpu.vector_store %arg22[%c16, %c0_93], %149 {strides = array<i32>} : memref<288x384xbf16, #tpu.memory_space<vmem>>, vector<16x384xbf16>,
    %c17_i32_94 = arith.constant 17 : i32
    %151 = tpu.dynamic_rotate %130 by %c17_i32_94 dim 1 : vector<16x384xf32>, i32 -> vector<16x384xf32>
    %152 = arith.truncf %151 : vector<16x384xf32> to vector<16x384xbf16>
    %c32_95 = arith.constant 32 : index
    %c0_96 = arith.constant 0 : index
    %153 = vector.load %arg22[%c32_95, %c0_96] : memref<288x384xbf16, #tpu.memory_space<vmem>>, vector<16x384xbf16>
    tpu.vector_store %arg22[%c32_95, %c0_96], %152 {strides = array<i32>} : memref<288x384xbf16, #tpu.memory_space<vmem>>, vector<16x384xbf16>,
    %c1_i32_97 = arith.constant 1 : i32
    %154 = tpu.dynamic_rotate %130 by %c1_i32_97 dim 1 : vector<16x384xf32>, i32 -> vector<16x384xf32>
    %155 = arith.truncf %154 : vector<16x384xf32> to vector<16x384xbf16>
    %c48 = arith.constant 48 : index
    %c0_98 = arith.constant 0 : index
    %156 = vector.load %arg22[%c48, %c0_98] : memref<288x384xbf16, #tpu.memory_space<vmem>>, vector<16x384xbf16>
    tpu.vector_store %arg22[%c48, %c0_98], %155 {strides = array<i32>} : memref<288x384xbf16, #tpu.memory_space<vmem>>, vector<16x384xbf16>,
    %157 = arith.truncf %130 : vector<16x384xf32> to vector<16x384xbf16>
    %c64_99 = arith.constant 64 : index
    %c0_100 = arith.constant 0 : index
    %158 = vector.load %arg22[%c64_99, %c0_100] : memref<288x384xbf16, #tpu.memory_space<vmem>>, vector<16x384xbf16>
    tpu.vector_store %arg22[%c64_99, %c0_100], %157 {strides = array<i32>} : memref<288x384xbf16, #tpu.memory_space<vmem>>, vector<16x384xbf16>,
    %c383_i32_101 = arith.constant 383 : i32
    %159 = tpu.dynamic_rotate %130 by %c383_i32_101 dim 1 : vector<16x384xf32>, i32 -> vector<16x384xf32>
    %160 = arith.truncf %159 : vector<16x384xf32> to vector<16x384xbf16>
    %c80 = arith.constant 80 : index
    %c0_102 = arith.constant 0 : index
    %161 = vector.load %arg22[%c80, %c0_102] : memref<288x384xbf16, #tpu.memory_space<vmem>>, vector<16x384xbf16>
    tpu.vector_store %arg22[%c80, %c0_102], %160 {strides = array<i32>} : memref<288x384xbf16, #tpu.memory_space<vmem>>, vector<16x384xbf16>,
    %c367_i32_103 = arith.constant 367 : i32
    %162 = tpu.dynamic_rotate %130 by %c367_i32_103 dim 1 : vector<16x384xf32>, i32 -> vector<16x384xf32>
    %163 = arith.truncf %162 : vector<16x384xf32> to vector<16x384xbf16>
    %c96_104 = arith.constant 96 : index
    %c0_105 = arith.constant 0 : index
    %164 = vector.load %arg22[%c96_104, %c0_105] : memref<288x384xbf16, #tpu.memory_space<vmem>>, vector<16x384xbf16>
    tpu.vector_store %arg22[%c96_104, %c0_105], %163 {strides = array<i32>} : memref<288x384xbf16, #tpu.memory_space<vmem>>, vector<16x384xbf16>,
    %c366_i32_106 = arith.constant 366 : i32
    %165 = tpu.dynamic_rotate %130 by %c366_i32_106 dim 1 : vector<16x384xf32>, i32 -> vector<16x384xf32>
    %166 = arith.truncf %165 : vector<16x384xf32> to vector<16x384xbf16>
    %c112 = arith.constant 112 : index
    %c0_107 = arith.constant 0 : index
    %167 = vector.load %arg22[%c112, %c0_107] : memref<288x384xbf16, #tpu.memory_space<vmem>>, vector<16x384xbf16>
    tpu.vector_store %arg22[%c112, %c0_107], %166 {strides = array<i32>} : memref<288x384xbf16, #tpu.memory_space<vmem>>, vector<16x384xbf16>,
    %c365_i32_108 = arith.constant 365 : i32
    %168 = tpu.dynamic_rotate %130 by %c365_i32_108 dim 1 : vector<16x384xf32>, i32 -> vector<16x384xf32>
    %169 = arith.truncf %168 : vector<16x384xf32> to vector<16x384xbf16>
    %c128_109 = arith.constant 128 : index
    %c0_110 = arith.constant 0 : index
    %170 = vector.load %arg22[%c128_109, %c0_110] : memref<288x384xbf16, #tpu.memory_space<vmem>>, vector<16x384xbf16>
    tpu.vector_store %arg22[%c128_109, %c0_110], %169 {strides = array<i32>} : memref<288x384xbf16, #tpu.memory_space<vmem>>, vector<16x384xbf16>,
    %c0_111 = arith.constant 0 : index
    %c0_112 = arith.constant 0 : index
    %171 = vector.load %arg12[%c0_111, %c0_112] : memref<32x144xbf16, #tpu.memory_space<vmem>>, vector<32x144xbf16>
    %c0_113 = arith.constant 0 : index
    %c0_114 = arith.constant 0 : index
    %172 = vector.load %arg22[%c0_113, %c0_114] : memref<288x384xbf16, #tpu.memory_space<vmem>>, vector<144x384xbf16>
    %cst_115 = arith.constant dense<0.000000e+00> : vector<32x384xf32>
    %173 = tpu.matmul %171, %172, %cst_115 {dimension_numbers = #tpu.dot_dimension_numbers<[1], [0], [0], [1], [0, 0, 1, 1], [], []>} : vector<32x144xbf16>, vector<144x384xbf16>, vector<32x384xf32> -> vector<32x384xf32>
    %c0_116 = arith.constant 0 : index
    %c0_117 = arith.constant 0 : index
    %174 = vector.load %arg13[%c0_116, %c0_117] : memref<32x1xf32, #tpu.memory_space<vmem>>, vector<32x1xf32>
    %175 = vector.broadcast %174 : vector<32x1xf32> to vector<32x384xf32>
    %176 = arith.addf %173, %175 : vector<32x384xf32>
    %cst_118 = arith.constant 0.000000e+00 : f32
    %177 = vector.broadcast %cst_118 : f32 to vector<32x384xf32>
    %178 = arith.maximumf %176, %177 : vector<32x384xf32>
    %179 = vector.broadcast %0 : vector<1x384xf32> to vector<32x384xf32>
    %180 = arith.mulf %178, %179 : vector<32x384xf32>
    %c19_i32_119 = arith.constant 19 : i32
    %181 = tpu.dynamic_rotate %180 by %c19_i32_119 dim 1 : vector<32x384xf32>, i32 -> vector<32x384xf32>
    %182 = arith.truncf %181 : vector<32x384xf32> to vector<32x384xbf16>
    %c0_120 = arith.constant 0 : index
    %c0_121 = arith.constant 0 : index
    %183 = vector.load %arg22[%c0_120, %c0_121] : memref<288x384xbf16, #tpu.memory_space<vmem>>, vector<32x384xbf16>
    tpu.vector_store %arg22[%c0_120, %c0_121], %182 {strides = array<i32>} : memref<288x384xbf16, #tpu.memory_space<vmem>>, vector<32x384xbf16>,
    %c18_i32_122 = arith.constant 18 : i32
    %184 = tpu.dynamic_rotate %180 by %c18_i32_122 dim 1 : vector<32x384xf32>, i32 -> vector<32x384xf32>
    %185 = arith.truncf %184 : vector<32x384xf32> to vector<32x384xbf16>
    %c32_123 = arith.constant 32 : index
    %c0_124 = arith.constant 0 : index
    %186 = vector.load %arg22[%c32_123, %c0_124] : memref<288x384xbf16, #tpu.memory_space<vmem>>, vector<32x384xbf16>
    tpu.vector_store %arg22[%c32_123, %c0_124], %185 {strides = array<i32>} : memref<288x384xbf16, #tpu.memory_space<vmem>>, vector<32x384xbf16>,
    %c17_i32_125 = arith.constant 17 : i32
    %187 = tpu.dynamic_rotate %180 by %c17_i32_125 dim 1 : vector<32x384xf32>, i32 -> vector<32x384xf32>
    %188 = arith.truncf %187 : vector<32x384xf32> to vector<32x384xbf16>
    %c64_126 = arith.constant 64 : index
    %c0_127 = arith.constant 0 : index
    %189 = vector.load %arg22[%c64_126, %c0_127] : memref<288x384xbf16, #tpu.memory_space<vmem>>, vector<32x384xbf16>
    tpu.vector_store %arg22[%c64_126, %c0_127], %188 {strides = array<i32>} : memref<288x384xbf16, #tpu.memory_space<vmem>>, vector<32x384xbf16>,
    %c1_i32_128 = arith.constant 1 : i32
    %190 = tpu.dynamic_rotate %180 by %c1_i32_128 dim 1 : vector<32x384xf32>, i32 -> vector<32x384xf32>
    %191 = arith.truncf %190 : vector<32x384xf32> to vector<32x384xbf16>
    %c96_129 = arith.constant 96 : index
    %c0_130 = arith.constant 0 : index
    %192 = vector.load %arg22[%c96_129, %c0_130] : memref<288x384xbf16, #tpu.memory_space<vmem>>, vector<32x384xbf16>
    tpu.vector_store %arg22[%c96_129, %c0_130], %191 {strides = array<i32>} : memref<288x384xbf16, #tpu.memory_space<vmem>>, vector<32x384xbf16>,
    %193 = arith.truncf %180 : vector<32x384xf32> to vector<32x384xbf16>
    %c128_131 = arith.constant 128 : index
    %c0_132 = arith.constant 0 : index
    %194 = vector.load %arg22[%c128_131, %c0_132] : memref<288x384xbf16, #tpu.memory_space<vmem>>, vector<32x384xbf16>
    tpu.vector_store %arg22[%c128_131, %c0_132], %193 {strides = array<i32>} : memref<288x384xbf16, #tpu.memory_space<vmem>>, vector<32x384xbf16>,
    %c383_i32_133 = arith.constant 383 : i32
    %195 = tpu.dynamic_rotate %180 by %c383_i32_133 dim 1 : vector<32x384xf32>, i32 -> vector<32x384xf32>
    %196 = arith.truncf %195 : vector<32x384xf32> to vector<32x384xbf16>
    %c160_134 = arith.constant 160 : index
    %c0_135 = arith.constant 0 : index
    %197 = vector.load %arg22[%c160_134, %c0_135] : memref<288x384xbf16, #tpu.memory_space<vmem>>, vector<32x384xbf16>
    tpu.vector_store %arg22[%c160_134, %c0_135], %196 {strides = array<i32>} : memref<288x384xbf16, #tpu.memory_space<vmem>>, vector<32x384xbf16>,
    %c367_i32_136 = arith.constant 367 : i32
    %198 = tpu.dynamic_rotate %180 by %c367_i32_136 dim 1 : vector<32x384xf32>, i32 -> vector<32x384xf32>
    %199 = arith.truncf %198 : vector<32x384xf32> to vector<32x384xbf16>
    %c192_137 = arith.constant 192 : index
    %c0_138 = arith.constant 0 : index
    %200 = vector.load %arg22[%c192_137, %c0_138] : memref<288x384xbf16, #tpu.memory_space<vmem>>, vector<32x384xbf16>
    tpu.vector_store %arg22[%c192_137, %c0_138], %199 {strides = array<i32>} : memref<288x384xbf16, #tpu.memory_space<vmem>>, vector<32x384xbf16>,
    %c366_i32_139 = arith.constant 366 : i32
    %201 = tpu.dynamic_rotate %180 by %c366_i32_139 dim 1 : vector<32x384xf32>, i32 -> vector<32x384xf32>
    %202 = arith.truncf %201 : vector<32x384xf32> to vector<32x384xbf16>
    %c224_140 = arith.constant 224 : index
    %c0_141 = arith.constant 0 : index
    %203 = vector.load %arg22[%c224_140, %c0_141] : memref<288x384xbf16, #tpu.memory_space<vmem>>, vector<32x384xbf16>
    tpu.vector_store %arg22[%c224_140, %c0_141], %202 {strides = array<i32>} : memref<288x384xbf16, #tpu.memory_space<vmem>>, vector<32x384xbf16>,
    %c365_i32_142 = arith.constant 365 : i32
    %204 = tpu.dynamic_rotate %180 by %c365_i32_142 dim 1 : vector<32x384xf32>, i32 -> vector<32x384xf32>
    %205 = arith.truncf %204 : vector<32x384xf32> to vector<32x384xbf16>
    %c256_143 = arith.constant 256 : index
    %c0_144 = arith.constant 0 : index
    %206 = vector.load %arg22[%c256_143, %c0_144] : memref<288x384xbf16, #tpu.memory_space<vmem>>, vector<32x384xbf16>
    tpu.vector_store %arg22[%c256_143, %c0_144], %205 {strides = array<i32>} : memref<288x384xbf16, #tpu.memory_space<vmem>>, vector<32x384xbf16>,
    %c0_145 = arith.constant 0 : index
    %c0_146 = arith.constant 0 : index
    %207 = vector.load %arg14[%c0_145, %c0_146] : memref<4x288xbf16, #tpu.memory_space<vmem>>, vector<4x288xbf16>
    %c0_147 = arith.constant 0 : index
    %c0_148 = arith.constant 0 : index
    %208 = vector.load %arg22[%c0_147, %c0_148] : memref<288x384xbf16, #tpu.memory_space<vmem>>, vector<288x384xbf16>
    %cst_149 = arith.constant dense<0.000000e+00> : vector<4x384xf32>
    %209 = tpu.matmul %207, %208, %cst_149 {dimension_numbers = #tpu.dot_dimension_numbers<[1], [0], [0], [1], [0, 0, 1, 1], [], []>} : vector<4x288xbf16>, vector<288x384xbf16>, vector<4x384xf32> -> vector<4x384xf32>
    %c0_150 = arith.constant 0 : index
    %c0_151 = arith.constant 0 : index
    %210 = vector.load %arg15[%c0_150, %c0_151] : memref<4x1xf32, #tpu.memory_space<vmem>>, vector<4x1xf32>
    %211 = vector.broadcast %210 : vector<4x1xf32> to vector<4x384xf32>
    %212 = arith.addf %209, %211 : vector<4x384xf32>
    %213 = vector.broadcast %0 : vector<1x384xf32> to vector<4x384xf32>
    %214 = arith.mulf %212, %213 : vector<4x384xf32>
    %c0_152 = arith.constant 0 : index
    %c0_153 = arith.constant 0 : index
    %215 = vector.load %arg19[%c0_152, %c0_153] : memref<4x384xf32, #tpu.memory_space<vmem>>, vector<4x384xf32>
    tpu.vector_store %arg19[%c0_152, %c0_153], %214 {strides = array<i32>} : memref<4x384xf32, #tpu.memory_space<vmem>>, vector<4x384xf32>,
    %216 = arith.subf %214, %1 : vector<4x384xf32>
    %217 = vector.broadcast %0 : vector<1x384xf32> to vector<4x384xf32>
    %218 = arith.mulf %216, %217 : vector<4x384xf32>
    %219 = arith.mulf %218, %218 : vector<4x384xf32>
    %cst_154 = arith.constant dense<0.000000e+00> : vector<4xf32>
    %220 = vector.multi_reduction <add>, %219, %cst_154 [1] : vector<4x384xf32> to vector<4xf32>
    %221 = vector.shape_cast %220 : vector<4xf32> to vector<4x1xf32>
    %cst_155 = arith.constant dense<0.000000e+00> : vector<1xf32>
    %222 = vector.multi_reduction <add>, %221, %cst_155 [0] : vector<4x1xf32> to vector<1xf32>
    %223 = vector.shape_cast %222 : vector<1xf32> to vector<1x1xf32>
    %224 = tpu.iota {dimensions = array<i32: 0>} : vector<2x1xi32>
    %c0_i32 = arith.constant 0 : i32
    %225 = vector.broadcast %c0_i32 : i32 to vector<2x1xi32>
    %226 = arith.cmpi eq, %224, %225 : vector<2x1xi32>
    %227 = vector.shape_cast %144 : vector<1x1xf32> to vector<1x1xf32>
    %228 = vector.broadcast %227 : vector<1x1xf32> to vector<2x1xf32>
    %229 = vector.shape_cast %223 : vector<1x1xf32> to vector<1x1xf32>
    %230 = vector.broadcast %229 : vector<1x1xf32> to vector<2x1xf32>
    %231 = arith.select %226, %228, %230 : vector<2x1xi1>, vector<2x1xf32>
    %c0_156 = arith.constant 0 : index
    %c0_157 = arith.constant 0 : index
    %c0_158 = arith.constant 0 : index
    %232 = vector.load %arg21[%c0_156, %c0_157, %c0_158] : memref<1x2x1xf32, #tpu.memory_space<vmem>>, vector<1x2x1xf32>
    %233 = vector.shape_cast %232 : vector<1x2x1xf32> to vector<2x1xf32>
    %234 = vector.shape_cast %231 : vector<2x1xf32> to vector<1x2x1xf32>
    tpu.vector_store %arg21[%c0_156, %c0_157, %c0_158], %234 {strides = array<i32>} : memref<1x2x1xf32, #tpu.memory_space<vmem>>, vector<1x2x1xf32>,
    return
  }
  func.func @transform_0(%arg0: i32) -> (i32, i32) {
    %c0_i32 = arith.constant 0 : i32
    %c0_i32_0 = arith.constant 0 : i32
    return %c0_i32, %arg0 : i32, i32
  }
  func.func @transform_1(%arg0: i32) -> (i32, i32) {
    %c0_i32 = arith.constant 0 : i32
    %c0_i32_0 = arith.constant 0 : i32
    %c0_i32_1 = arith.constant 0 : i32
    return %c0_i32, %c0_i32_0 : i32, i32
  }
  func.func @transform_2(%arg0: i32) -> (i32, i32, i32) {
    %c0_i32 = arith.constant 0 : i32
    %c0_i32_0 = arith.constant 0 : i32
    %c0_i32_1 = arith.constant 0 : i32
    %c0_i32_2 = arith.constant 0 : i32
    return %c0_i32, %c0_i32_0, %c0_i32_1 : i32, i32, i32
  }
  func.func @transform_3(%arg0: i32) -> (i32, i32) {
    %c0_i32 = arith.constant 0 : i32
    %c0_i32_0 = arith.constant 0 : i32
    %c0_i32_1 = arith.constant 0 : i32
    return %c0_i32, %c0_i32_0 : i32, i32
  }
  func.func @transform_4(%arg0: i32) -> (i32, i32) {
    %c0_i32 = arith.constant 0 : i32
    %c0_i32_0 = arith.constant 0 : i32
    %c0_i32_1 = arith.constant 0 : i32
    return %c0_i32, %c0_i32_0 : i32, i32
  }
  func.func @transform_5(%arg0: i32) -> (i32, i32) {
    %c0_i32 = arith.constant 0 : i32
    %c0_i32_0 = arith.constant 0 : i32
    %c0_i32_1 = arith.constant 0 : i32
    return %c0_i32, %c0_i32_0 : i32, i32
  }
  func.func @transform_6(%arg0: i32) -> (i32, i32) {
    %c0_i32 = arith.constant 0 : i32
    %c0_i32_0 = arith.constant 0 : i32
    %c0_i32_1 = arith.constant 0 : i32
    return %c0_i32, %c0_i32_0 : i32, i32
  }
  func.func @transform_7(%arg0: i32) -> (i32, i32) {
    %c0_i32 = arith.constant 0 : i32
    %c0_i32_0 = arith.constant 0 : i32
    %c0_i32_1 = arith.constant 0 : i32
    return %c0_i32, %c0_i32_0 : i32, i32
  }
  func.func @transform_8(%arg0: i32) -> (i32, i32) {
    %c0_i32 = arith.constant 0 : i32
    %c0_i32_0 = arith.constant 0 : i32
    %c0_i32_1 = arith.constant 0 : i32
    return %c0_i32, %c0_i32_0 : i32, i32
  }
  func.func @transform_9(%arg0: i32) -> (i32, i32) {
    %c0_i32 = arith.constant 0 : i32
    %c0_i32_0 = arith.constant 0 : i32
    %c0_i32_1 = arith.constant 0 : i32
    return %c0_i32, %c0_i32_0 : i32, i32
  }
  func.func @transform_10(%arg0: i32) -> (i32, i32) {
    %c0_i32 = arith.constant 0 : i32
    %c0_i32_0 = arith.constant 0 : i32
    %c0_i32_1 = arith.constant 0 : i32
    return %c0_i32, %c0_i32_0 : i32, i32
  }
  func.func @transform_11(%arg0: i32) -> (i32, i32) {
    %c0_i32 = arith.constant 0 : i32
    %c0_i32_0 = arith.constant 0 : i32
    %c0_i32_1 = arith.constant 0 : i32
    return %c0_i32, %c0_i32_0 : i32, i32
  }
  func.func @transform_12(%arg0: i32) -> (i32, i32) {
    %c0_i32 = arith.constant 0 : i32
    %c0_i32_0 = arith.constant 0 : i32
    %c0_i32_1 = arith.constant 0 : i32
    return %c0_i32, %c0_i32_0 : i32, i32
  }
  func.func @transform_13(%arg0: i32) -> (i32, i32) {
    %c0_i32 = arith.constant 0 : i32
    %c0_i32_0 = arith.constant 0 : i32
    %c0_i32_1 = arith.constant 0 : i32
    return %c0_i32, %c0_i32_0 : i32, i32
  }
  func.func @transform_14(%arg0: i32) -> (i32, i32) {
    %c0_i32 = arith.constant 0 : i32
    %c0_i32_0 = arith.constant 0 : i32
    %c0_i32_1 = arith.constant 0 : i32
    return %c0_i32, %c0_i32_0 : i32, i32
  }
  func.func @transform_15(%arg0: i32) -> (i32, i32) {
    %c0_i32 = arith.constant 0 : i32
    %c0_i32_0 = arith.constant 0 : i32
    return %c0_i32, %arg0 : i32, i32
  }
  func.func @transform_16(%arg0: i32) -> (i32, i32) {
    %c0_i32 = arith.constant 0 : i32
    %c0_i32_0 = arith.constant 0 : i32
    return %c0_i32, %arg0 : i32, i32
  }
  func.func @transform_17(%arg0: i32) -> (i32, i32) {
    %c0_i32 = arith.constant 0 : i32
    %c0_i32_0 = arith.constant 0 : i32
    return %c0_i32, %arg0 : i32, i32
  }
  func.func @transform_18(%arg0: i32) -> (i32, i32) {
    %c0_i32 = arith.constant 0 : i32
    %c0_i32_0 = arith.constant 0 : i32
    return %c0_i32, %arg0 : i32, i32
  }
  func.func @transform_19(%arg0: i32) -> (i32, i32, i32) {
    %c0_i32 = arith.constant 0 : i32
    %c0_i32_0 = arith.constant 0 : i32
    %c0_i32_1 = arith.constant 0 : i32
    return %arg0, %c0_i32, %c0_i32_0 : i32, i32, i32
  }
  func.func @transform_20(%arg0: i32) -> (i32, i32, i32) {
    %c0_i32 = arith.constant 0 : i32
    %c0_i32_0 = arith.constant 0 : i32
    %c0_i32_1 = arith.constant 0 : i32
    return %arg0, %c0_i32, %c0_i32_0 : i32, i32, i32
  }
}

</mosaic_0001>

<llo_original>
// kernel: vqvae_forward.1
$region0: #{vqvae_forward.1}
  #allocation0 [shape = 'u32[]', space=smem, size = 0x4, offset = 0x4, fixed_abs, tag = 'smem constant byte address 0x4 - core index']
  #allocation1 [shape = 'u32[144,128]{1,0:T(1,128)}', space=vmem, size = 0x12000, scoped, tag = 'internal scratch']
  #allocation2 [shape = 'bf16[288,384]{1,0:T(16,128)(2,1)}', space=vmem, size = 0x36000, scoped, tag = 'scratch operand']
  %s0 = inlined_call_operand.vmem [shape: f32[4,768], index: 0, kind: input, shape index: {}]
  %s1 = inlined_call_operand.vmem [shape: f32[1,384], index: 1, kind: input, shape index: {}]
  %s2 = inlined_call_operand.vmem [shape: bf16[9,32,4], index: 2, kind: input, shape index: {}]
  %s3 = inlined_call_operand.vmem [shape: f32[32,1], index: 3, kind: input, shape index: {}]
  %s4 = inlined_call_operand.vmem [shape: bf16[32,288], index: 4, kind: input, shape index: {}]
  %s5 = inlined_call_operand.vmem [shape: f32[32,1], index: 5, kind: input, shape index: {}]
  %s6 = inlined_call_operand.vmem [shape: bf16[16,32], index: 6, kind: input, shape index: {}]
  %s7 = inlined_call_operand.vmem [shape: f32[16,1], index: 7, kind: input, shape index: {}]
  %s8 = inlined_call_operand.vmem [shape: bf16[32,16], index: 8, kind: input, shape index: {}]
  %s9 = inlined_call_operand.vmem [shape: f32[16,32], index: 9, kind: input, shape index: {}]
  %s10 = inlined_call_operand.vmem [shape: f32[32,1], index: 10, kind: input, shape index: {}]
  %s11 = inlined_call_operand.vmem [shape: bf16[32,144], index: 11, kind: input, shape index: {}]
  %s12 = inlined_call_operand.vmem [shape: f32[32,1], index: 12, kind: input, shape index: {}]
  %s13 = inlined_call_operand.vmem [shape: bf16[4,288], index: 13, kind: input, shape index: {}]
  %s14 = inlined_call_operand.vmem [shape: f32[4,1], index: 14, kind: input, shape index: {}]
  %s15 = inlined_call_operand.vmem [shape: f32[16,768], index: 15, kind: output, shape index: {0}]
  %s16 = inlined_call_operand.vmem [shape: f32[16,768], index: 16, kind: output, shape index: {1}]
  %s17 = inlined_call_operand.vmem [shape: s32[1,768], index: 17, kind: output, shape index: {2}]
  %s18 = inlined_call_operand.vmem [shape: f32[4,768], index: 18, kind: output, shape index: {3}]
  %s19 = inlined_call_operand.vmem [shape: f32[2,32,1], index: 19, kind: output, shape index: {4}]
  %s20 = inlined_call_operand.vmem [shape: f32[2,2,1], index: 20, kind: output, shape index: {5}]
  %21 = xla_tuple %s15, %s16, %s17, %s18, %s19, %s20
  %s22 = sld [smem:[#allocation0]]
  $region171: #{vqvae_forward.1} parent=0
    _
  %s24 = ssub.s32 1, %s22
  %s25 = scalar_select 0, %s24, %s22
  $region1: #{vqvae_forward.1} parent=0
    #allocation3 [shape = 'u8[49152]{0}', space=vmem, size = 0xc000, scoped, tag = 'output window, operand 0']
    #allocation4 [shape = 'u8[49152]{0}', space=vmem, size = 0xc000, scoped, tag = 'output window, operand 1']
    loop: start=0, step=1, limit=4
    $region2: #{vqvae_forward.1} parent=1 // loop_pre_header
      _
    $region3: #{vqvae_forward.1} parent=1 // loop_header
      %s27 = sphi 0, %s31
      %p28 = scmp.ge.s32.totalorder %s27, 4
      %s37 = sphi 0, %s39
      %s40 = sphi 0, %s37
      %s41 = sphi 0, %s40
      %s57 = sphi 0, %s41
      %s61 = sphi 0, %s61
      %s63 = sphi 0, %s61
      %s64 = sphi 0, %s63
      %s78 = sphi 0, %s64
      %s82 = sphi 0, %s82
      %s84 = sphi 0, %s82
      %s85 = sphi 0, %s84
      %s99 = sphi 0, %s85
      %s103 = sphi 0, %s103
      %s105 = sphi 0, %s103
      %s106 = sphi 0, %s105
      %s120 = sphi 0, %s106
      %s124 = sphi 0, %s124
      %s126 = sphi 0, %s124
      %s127 = sphi 0, %s126
      %s141 = sphi 0, %s127
      %s145 = sphi 0, %s145
      %s147 = sphi 0, %s145
      %s148 = sphi 0, %s147
      %s162 = sphi 0, %s148
      %s166 = sphi 0, %s166
      %s168 = sphi 0, %s166
      %s169 = sphi 0, %s168
      %s183 = sphi 0, %s169
      %s187 = sphi 0, %s187
      %s189 = sphi 0, %s187
      %s190 = sphi 0, %s189
      %s204 = sphi 0, %s190
      %s208 = sphi 0, %s208
      %s210 = sphi 0, %s208
      %s211 = sphi 0, %s210
      %s225 = sphi 0, %s211
      %s229 = sphi 0, %s229
      %s231 = sphi 0, %s229
      %s232 = sphi 0, %s231
      %s246 = sphi 0, %s232
      %s250 = sphi 0, %s250
      %s252 = sphi 0, %s250
      %s253 = sphi 0, %s252
      %s267 = sphi 0, %s253
      %s271 = sphi 0, %s271
      %s273 = sphi 0, %s271
      %s274 = sphi 0, %s273
      %s288 = sphi 0, %s274
      %s292 = sphi 0, %s292
      %s294 = sphi 0, %s292
      %s295 = sphi 0, %s294
      %s309 = sphi 0, %s295
      %s313 = sphi 0, %s313
      %s315 = sphi 0, %s313
      %s316 = sphi 0, %s315
      %s330 = sphi 0, %s316
      %s334 = sphi 0, %s334
      %s336 = sphi 0, %s334
      %s337 = sphi 0, %s336
      %s351 = sphi 0, %s337
      %s357 = sphi 0, %s359
      %s360 = sphi 0, %s357
      %s361 = sphi 0, %s360
      %s377 = sphi 0, %s361
      %s383 = sphi 0, %s385
      %s386 = sphi 0, %s383
      %s387 = sphi 0, %s386
      %s403 = sphi 0, %s387
      %s409 = sphi 0, %s411
      %s412 = sphi 0, %s409
      %s413 = sphi 0, %s412
      %s429 = sphi 0, %s413
      %s435 = sphi 0, %s437
      %s438 = sphi 0, %s435
      %s439 = sphi 0, %s438
      %s455 = sphi 0, %s439
      %s461 = sphi 0, %s463
      %s464 = sphi 0, %s461
      %s465 = sphi 0, %s464
      %s481 = sphi 0, %s465
      %s487 = sphi 0, %s489
      %s490 = sphi 0, %s487
      %s491 = sphi 0, %s490
      %s507 = sphi 0, %s491
    $region4: #{vqvae_forward.1} parent=1 // loop_header_branch
      %30 = sbr.rel (%p28) target = $region8
    $region5: #{vqvae_forward.1} parent=1 // loop_body
      %s32 = ssub.s32 %s27, 1
      %s33 = ssub.s32 %s27, 2
      %s34 = sadd.s32 %s27, 1
      %s35 = ssub.s32 %s27, %s34
      %p36 = scmp.eq.s32.totalorder %s35, 0
      %s38 = sadd.s32 %s37, 1
      %s39 = scalar_select %p36, %s37, %s38
      %p42 = pneg %p36
      %p43 = scmp.eq.s32.totalorder %s27, 1
      %p44 = por %p42, %p43
      %p45 = scmp.ne.s32.totalorder %s37, %s40
      %p46 = scmp.eq.s32.totalorder %s27, 0
      %p47 = por %p45, %p46
      %p48 = scmp.ne.s32.totalorder %s37, %s40
      %p49 = scmp.eq.s32.totalorder %s32, 1
      %p50 = por %p48, %p49
      %p51 = scmp.ne.s32.totalorder %s40, %s41
      %p52 = scmp.eq.s32.totalorder %s32, 0
      %p53 = por %p51, %p52
      %p54 = scmp.ne.s32.totalorder %s40, %s41
      %p55 = scmp.eq.s32.totalorder %s33, 1
      %p56 = por %p54, %p55
      %p58 = scmp.ne.s32.totalorder %s41, %s57
      %p59 = scmp.eq.s32.totalorder %s33, 0
      %p60 = por %p58, %p59
      %s62 = sadd.s32 %s61, 1
      %p65 = scmp.eq.s32.totalorder %s27, 1
      %p66 = scmp.ne.s32.totalorder %s61, %s63
      %p67 = scmp.eq.s32.totalorder %s27, 0
      %p68 = por %p66, %p67
      %p69 = scmp.ne.s32.totalorder %s61, %s63
      %p70 = scmp.eq.s32.totalorder %s32, 1
      %p71 = por %p69, %p70
      %p72 = scmp.ne.s32.totalorder %s63, %s64
      %p73 = scmp.eq.s32.totalorder %s32, 0
      %p74 = por %p72, %p73
      %p75 = scmp.ne.s32.totalorder %s63, %s64
      %p76 = scmp.eq.s32.totalorder %s33, 1
      %p77 = por %p75, %p76
      %p79 = scmp.ne.s32.totalorder %s64, %s78
      %p80 = scmp.eq.s32.totalorder %s33, 0
      %p81 = por %p79, %p80
      %s83 = sadd.s32 %s82, 1
      %p86 = scmp.eq.s32.totalorder %s27, 1
      %p87 = scmp.ne.s32.totalorder %s82, %s84
      %p88 = scmp.eq.s32.totalorder %s27, 0
      %p89 = por %p87, %p88
      %p90 = scmp.ne.s32.totalorder %s82, %s84
      %p91 = scmp.eq.s32.totalorder %s32, 1
      %p92 = por %p90, %p91
      %p93 = scmp.ne.s32.totalorder %s84, %s85
      %p94 = scmp.eq.s32.totalorder %s32, 0
      %p95 = por %p93, %p94
      %p96 = scmp.ne.s32.totalorder %s84, %s85
      %p97 = scmp.eq.s32.totalorder %s33, 1
      %p98 = por %p96, %p97
      %p100 = scmp.ne.s32.totalorder %s85, %s99
      %p101 = scmp.eq.s32.totalorder %s33, 0
      %p102 = por %p100, %p101
      %s104 = sadd.s32 %s103, 1
      %p107 = scmp.eq.s32.totalorder %s27, 1
      %p108 = scmp.ne.s32.totalorder %s103, %s105
      %p109 = scmp.eq.s32.totalorder %s27, 0
      %p110 = por %p108, %p109
      %p111 = scmp.ne.s32.totalorder %s103, %s105
      %p112 = scmp.eq.s32.totalorder %s32, 1
      %p113 = por %p111, %p112
      %p114 = scmp.ne.s32.totalorder %s105, %s106
      %p115 = scmp.eq.s32.totalorder %s32, 0
      %p116 = por %p114, %p115
      %p117 = scmp.ne.s32.totalorder %s105, %s106
      %p118 = scmp.eq.s32.totalorder %s33, 1
      %p119 = por %p117, %p118
      %p121 = scmp.ne.s32.totalorder %s106, %s120
      %p122 = scmp.eq.s32.totalorder %s33, 0
      %p123 = por %p121, %p122
      %s125 = sadd.s32 %s124, 1
      %p128 = scmp.eq.s32.totalorder %s27, 1
      %p129 = scmp.ne.s32.totalorder %s124, %s126
      %p130 = scmp.eq.s32.totalorder %s27, 0
      %p131 = por %p129, %p130
      %p132 = scmp.ne.s32.totalorder %s124, %s126
      %p133 = scmp.eq.s32.totalorder %s32, 1
      %p134 = por %p132, %p133
      %p135 = scmp.ne.s32.totalorder %s126, %s127
      %p136 = scmp.eq.s32.totalorder %s32, 0
      %p137 = por %p135, %p136
      %p138 = scmp.ne.s32.totalorder %s126, %s127
      %p139 = scmp.eq.s32.totalorder %s33, 1
      %p140 = por %p138, %p139
      %p142 = scmp.ne.s32.totalorder %s127, %s141
      %p143 = scmp.eq.s32.totalorder %s33, 0
      %p144 = por %p142, %p143
      %s146 = sadd.s32 %s145, 1
      %p149 = scmp.eq.s32.totalorder %s27, 1
      %p150 = scmp.ne.s32.totalorder %s145, %s147
      %p151 = scmp.eq.s32.totalorder %s27, 0
      %p152 = por %p150, %p151
      %p153 = scmp.ne.s32.totalorder %s145, %s147
      %p154 = scmp.eq.s32.totalorder %s32, 1
      %p155 = por %p153, %p154
      %p156 = scmp.ne.s32.totalorder %s147, %s148
      %p157 = scmp.eq.s32.totalorder %s32, 0
      %p158 = por %p156, %p157
      %p159 = scmp.ne.s32.totalorder %s147, %s148
      %p160 = scmp.eq.s32.totalorder %s33, 1
      %p161 = por %p159, %p160
      %p163 = scmp.ne.s32.totalorder %s148, %s162
      %p164 = scmp.eq.s32.totalorder %s33, 0
      %p165 = por %p163, %p164
      %s167 = sadd.s32 %s166, 1
      %p170 = scmp.eq.s32.totalorder %s27, 1
      %p171 = scmp.ne.s32.totalorder %s166, %s168
      %p172 = scmp.eq.s32.totalorder %s27, 0
      %p173 = por %p171, %p172
      %p174 = scmp.ne.s32.totalorder %s166, %s168
      %p175 = scmp.eq.s32.totalorder %s32, 1
      %p176 = por %p174, %p175
      %p177 = scmp.ne.s32.totalorder %s168, %s169
      %p178 = scmp.eq.s32.totalorder %s32, 0
      %p179 = por %p177, %p178
      %p180 = scmp.ne.s32.totalorder %s168, %s169
      %p181 = scmp.eq.s32.totalorder %s33, 1
      %p182 = por %p180, %p181
      %p184 = scmp.ne.s32.totalorder %s169, %s183
      %p185 = scmp.eq.s32.totalorder %s33, 0
      %p186 = por %p184, %p185
      %s188 = sadd.s32 %s187, 1
      %p191 = scmp.eq.s32.totalorder %s27, 1
      %p192 = scmp.ne.s32.totalorder %s187, %s189
      %p193 = scmp.eq.s32.totalorder %s27, 0
      %p194 = por %p192, %p193
      %p195 = scmp.ne.s32.totalorder %s187, %s189
      %p196 = scmp.eq.s32.totalorder %s32, 1
      %p197 = por %p195, %p196
      %p198 = scmp.ne.s32.totalorder %s189, %s190
      %p199 = scmp.eq.s32.totalorder %s32, 0
      %p200 = por %p198, %p199
      %p201 = scmp.ne.s32.totalorder %s189, %s190
      %p202 = scmp.eq.s32.totalorder %s33, 1
      %p203 = por %p201, %p202
      %p205 = scmp.ne.s32.totalorder %s190, %s204
      %p206 = scmp.eq.s32.totalorder %s33, 0
      %p207 = por %p205, %p206
      %s209 = sadd.s32 %s208, 1
      %p212 = scmp.eq.s32.totalorder %s27, 1
      %p213 = scmp.ne.s32.totalorder %s208, %s210
      %p214 = scmp.eq.s32.totalorder %s27, 0
      %p215 = por %p213, %p214
      %p216 = scmp.ne.s32.totalorder %s208, %s210
      %p217 = scmp.eq.s32.totalorder %s32, 1
      %p218 = por %p216, %p217
      %p219 = scmp.ne.s32.totalorder %s210, %s211
      %p220 = scmp.eq.s32.totalorder %s32, 0
      %p221 = por %p219, %p220
      %p222 = scmp.ne.s32.totalorder %s210, %s211
      %p223 = scmp.eq.s32.totalorder %s33, 1
      %p224 = por %p222, %p223
      %p226 = scmp.ne.s32.totalorder %s211, %s225
      %p227 = scmp.eq.s32.totalorder %s33, 0
      %p228 = por %p226, %p227
      %s230 = sadd.s32 %s229, 1
      %p233 = scmp.eq.s32.totalorder %s27, 1
      %p234 = scmp.ne.s32.totalorder %s229, %s231
      %p235 = scmp.eq.s32.totalorder %s27, 0
      %p236 = por %p234, %p235
      %p237 = scmp.ne.s32.totalorder %s229, %s231
      %p238 = scmp.eq.s32.totalorder %s32, 1
      %p239 = por %p237, %p238
      %p240 = scmp.ne.s32.totalorder %s231, %s232
      %p241 = scmp.eq.s32.totalorder %s32, 0
      %p242 = por %p240, %p241
      %p243 = scmp.ne.s32.totalorder %s231, %s232
      %p244 = scmp.eq.s32.totalorder %s33, 1
      %p245 = por %p243, %p244
      %p247 = scmp.ne.s32.totalorder %s232, %s246
      %p248 = scmp.eq.s32.totalorder %s33, 0
      %p249 = por %p247, %p248
      %s251 = sadd.s32 %s250, 1
      %p254 = scmp.eq.s32.totalorder %s27, 1
      %p255 = scmp.ne.s32.totalorder %s250, %s252
      %p256 = scmp.eq.s32.totalorder %s27, 0
      %p257 = por %p255, %p256
      %p258 = scmp.ne.s32.totalorder %s250, %s252
      %p259 = scmp.eq.s32.totalorder %s32, 1
      %p260 = por %p258, %p259
      %p261 = scmp.ne.s32.totalorder %s252, %s253
      %p262 = scmp.eq.s32.totalorder %s32, 0
      %p263 = por %p261, %p262
      %p264 = scmp.ne.s32.totalorder %s252, %s253
      %p265 = scmp.eq.s32.totalorder %s33, 1
      %p266 = por %p264, %p265
      %p268 = scmp.ne.s32.totalorder %s253, %s267
      %p269 = scmp.eq.s32.totalorder %s33, 0
      %p270 = por %p268, %p269
      %s272 = sadd.s32 %s271, 1
      %p275 = scmp.eq.s32.totalorder %s27, 1
      %p276 = scmp.ne.s32.totalorder %s271, %s273
      %p277 = scmp.eq.s32.totalorder %s27, 0
      %p278 = por %p276, %p277
      %p279 = scmp.ne.s32.totalorder %s271, %s273
      %p280 = scmp.eq.s32.totalorder %s32, 1
      %p281 = por %p279, %p280
      %p282 = scmp.ne.s32.totalorder %s273, %s274
      %p283 = scmp.eq.s32.totalorder %s32, 0
      %p284 = por %p282, %p283
      %p285 = scmp.ne.s32.totalorder %s273, %s274
      %p286 = scmp.eq.s32.totalorder %s33, 1
      %p287 = por %p285, %p286
      %p289 = scmp.ne.s32.totalorder %s274, %s288
      %p290 = scmp.eq.s32.totalorder %s33, 0
      %p291 = por %p289, %p290
      %s293 = sadd.s32 %s292, 1
      %p296 = scmp.eq.s32.totalorder %s27, 1
      %p297 = scmp.ne.s32.totalorder %s292, %s294
      %p298 = scmp.eq.s32.totalorder %s27, 0
      %p299 = por %p297, %p298
      %p300 = scmp.ne.s32.totalorder %s292, %s294
      %p301 = scmp.eq.s32.totalorder %s32, 1
      %p302 = por %p300, %p301
      %p303 = scmp.ne.s32.totalorder %s294, %s295
      %p304 = scmp.eq.s32.totalorder %s32, 0
      %p305 = por %p303, %p304
      %p306 = scmp.ne.s32.totalorder %s294, %s295
      %p307 = scmp.eq.s32.totalorder %s33, 1
      %p308 = por %p306, %p307
      %p310 = scmp.ne.s32.totalorder %s295, %s309
      %p311 = scmp.eq.s32.totalorder %s33, 0
      %p312 = por %p310, %p311
      %s314 = sadd.s32 %s313, 1
      %p317 = scmp.eq.s32.totalorder %s27, 1
      %p318 = scmp.ne.s32.totalorder %s313, %s315
      %p319 = scmp.eq.s32.totalorder %s27, 0
      %p320 = por %p318, %p319
      %p321 = scmp.ne.s32.totalorder %s313, %s315
      %p322 = scmp.eq.s32.totalorder %s32, 1
      %p323 = por %p321, %p322
      %p324 = scmp.ne.s32.totalorder %s315, %s316
      %p325 = scmp.eq.s32.totalorder %s32, 0
      %p326 = por %p324, %p325
      %p327 = scmp.ne.s32.totalorder %s315, %s316
      %p328 = scmp.eq.s32.totalorder %s33, 1
      %p329 = por %p327, %p328
      %p331 = scmp.ne.s32.totalorder %s316, %s330
      %p332 = scmp.eq.s32.totalorder %s33, 0
      %p333 = por %p331, %p332
      %s335 = sadd.s32 %s334, 1
      %p338 = scmp.eq.s32.totalorder %s27, 1
      %p339 = scmp.ne.s32.totalorder %s334, %s336
      %p340 = scmp.eq.s32.totalorder %s27, 0
      %p341 = por %p339, %p340
      %p342 = scmp.ne.s32.totalorder %s334, %s336
      %p343 = scmp.eq.s32.totalorder %s32, 1
      %p344 = por %p342, %p343
      %p345 = scmp.ne.s32.totalorder %s336, %s337
      %p346 = scmp.eq.s32.totalorder %s32, 0
      %p347 = por %p345, %p346
      %p348 = scmp.ne.s32.totalorder %s336, %s337
      %p349 = scmp.eq.s32.totalorder %s33, 1
      %p350 = por %p348, %p349
      %p352 = scmp.ne.s32.totalorder %s337, %s351
      %p353 = scmp.eq.s32.totalorder %s33, 0
      %p354 = por %p352, %p353
      %s355 = ssub.s32 %s27, %s34
      %p356 = scmp.eq.s32.totalorder %s355, 0
      %s358 = sadd.s32 %s357, 1
      %s359 = scalar_select %p356, %s357, %s358
      %p362 = pneg %p356
      %p363 = scmp.eq.s32.totalorder %s27, 1
      %p364 = por %p362, %p363
      %p365 = scmp.ne.s32.totalorder %s357, %s360
      %p366 = scmp.eq.s32.totalorder %s27, 0
      %p367 = por %p365, %p366
      %p368 = scmp.ne.s32.totalorder %s357, %s360
      %p369 = scmp.eq.s32.totalorder %s32, 1
      %p370 = por %p368, %p369
      %p371 = scmp.ne.s32.totalorder %s360, %s361
      %p372 = scmp.eq.s32.totalorder %s32, 0
      %p373 = por %p371, %p372
      %p374 = scmp.ne.s32.totalorder %s360, %s361
      %p375 = scmp.eq.s32.totalorder %s33, 1
      %p376 = por %p374, %p375
      %p378 = scmp.ne.s32.totalorder %s361, %s377
      %p379 = scmp.eq.s32.totalorder %s33, 0
      %p380 = por %p378, %p379
      %s381 = ssub.s32 %s27, %s34
      %p382 = scmp.eq.s32.totalorder %s381, 0
      %s384 = sadd.s32 %s383, 1
      %s385 = scalar_select %p382, %s383, %s384
      %p388 = pneg %p382
      %p389 = scmp.eq.s32.totalorder %s27, 1
      %p390 = por %p388, %p389
      %p391 = scmp.ne.s32.totalorder %s383, %s386
      %p392 = scmp.eq.s32.totalorder %s27, 0
      %p393 = por %p391, %p392
      %p394 = scmp.ne.s32.totalorder %s383, %s386
      %p395 = scmp.eq.s32.totalorder %s32, 1
      %p396 = por %p394, %p395
      %p397 = scmp.ne.s32.totalorder %s386, %s387
      %p398 = scmp.eq.s32.totalorder %s32, 0
      %p399 = por %p397, %p398
      %p400 = scmp.ne.s32.totalorder %s386, %s387
      %p401 = scmp.eq.s32.totalorder %s33, 1
      %p402 = por %p400, %p401
      %p404 = scmp.ne.s32.totalorder %s387, %s403
      %p405 = scmp.eq.s32.totalorder %s33, 0
      %p406 = por %p404, %p405
      %s407 = ssub.s32 %s27, %s34
      %p408 = scmp.eq.s32.totalorder %s407, 0
      %s410 = sadd.s32 %s409, 1
      %s411 = scalar_select %p408, %s409, %s410
      %p414 = pneg %p408
      %p415 = scmp.eq.s32.totalorder %s27, 1
      %p416 = por %p414, %p415
      %p417 = scmp.ne.s32.totalorder %s409, %s412
      %p418 = scmp.eq.s32.totalorder %s27, 0
      %p419 = por %p417, %p418
      %p420 = scmp.ne.s32.totalorder %s409, %s412
      %p421 = scmp.eq.s32.totalorder %s32, 1
      %p422 = por %p420, %p421
      %p423 = scmp.ne.s32.totalorder %s412, %s413
      %p424 = scmp.eq.s32.totalorder %s32, 0
      %p425 = por %p423, %p424
      %p426 = scmp.ne.s32.totalorder %s412, %s413
      %p427 = scmp.eq.s32.totalorder %s33, 1
      %p428 = por %p426, %p427
      %p430 = scmp.ne.s32.totalorder %s413, %s429
      %p431 = scmp.eq.s32.totalorder %s33, 0
      %p432 = por %p430, %p431
      %s433 = ssub.s32 %s27, %s34
      %p434 = scmp.eq.s32.totalorder %s433, 0
      %s436 = sadd.s32 %s435, 1
      %s437 = scalar_select %p434, %s435, %s436
      %p440 = pneg %p434
      %p441 = scmp.eq.s32.totalorder %s27, 1
      %p442 = por %p440, %p441
      %p443 = scmp.ne.s32.totalorder %s435, %s438
      %p444 = scmp.eq.s32.totalorder %s27, 0
      %p445 = por %p443, %p444
      %p446 = scmp.ne.s32.totalorder %s435, %s438
      %p447 = scmp.eq.s32.totalorder %s32, 1
      %p448 = por %p446, %p447
      %p449 = scmp.ne.s32.totalorder %s438, %s439
      %p450 = scmp.eq.s32.totalorder %s32, 0
      %p451 = por %p449, %p450
      %p452 = scmp.ne.s32.totalorder %s438, %s439
      %p453 = scmp.eq.s32.totalorder %s33, 1
      %p454 = por %p452, %p453
      %p456 = scmp.ne.s32.totalorder %s439, %s455
      %p457 = scmp.eq.s32.totalorder %s33, 0
      %p458 = por %p456, %p457
      %s459 = ssub.s32 %s27, %s34
      %p460 = scmp.eq.s32.totalorder %s459, 0
      %s462 = sadd.s32 %s461, 1
      %s463 = scalar_select %p460, %s461, %s462
      %p466 = pneg %p460
      %p467 = scmp.eq.s32.totalorder %s27, 1
      %p468 = por %p466, %p467
      %p469 = scmp.ne.s32.totalorder %s461, %s464
      %p470 = scmp.eq.s32.totalorder %s27, 0
      %p471 = por %p469, %p470
      %p472 = scmp.ne.s32.totalorder %s461, %s464
      %p473 = scmp.eq.s32.totalorder %s32, 1
      %p474 = por %p472, %p473
      %p475 = scmp.ne.s32.totalorder %s464, %s465
      %p476 = scmp.eq.s32.totalorder %s32, 0
      %p477 = por %p475, %p476
      %p478 = scmp.ne.s32.totalorder %s464, %s465
      %p479 = scmp.eq.s32.totalorder %s33, 1
      %p480 = por %p478, %p479
      %p482 = scmp.ne.s32.totalorder %s465, %s481
      %p483 = scmp.eq.s32.totalorder %s33, 0
      %p484 = por %p482, %p483
      %s485 = ssub.s32 %s27, %s34
      %p486 = scmp.eq.s32.totalorder %s485, 0
      %s488 = sadd.s32 %s487, 1
      %s489 = scalar_select %p486, %s487, %s488
      %p492 = pneg %p486
      %p493 = scmp.eq.s32.totalorder %s27, 1
      %p494 = por %p492, %p493
      %p495 = scmp.ne.s32.totalorder %s487, %s490
      %p496 = scmp.eq.s32.totalorder %s27, 0
      %p497 = por %p495, %p496
      %p498 = scmp.ne.s32.totalorder %s487, %s490
      %p499 = scmp.eq.s32.totalorder %s32, 1
      %p500 = por %p498, %p499
      %p501 = scmp.ne.s32.totalorder %s490, %s491
      %p502 = scmp.eq.s32.totalorder %s32, 0
      %p503 = por %p501, %p502
      %p504 = scmp.ne.s32.totalorder %s490, %s491
      %p505 = scmp.eq.s32.totalorder %s33, 1
      %p506 = por %p504, %p505
      %p508 = scmp.ne.s32.totalorder %s491, %s507
      %p509 = scmp.eq.s32.totalorder %s33, 0
      %p510 = por %p508, %p509
      %p511 = scmp.le.s32.totalorder 1, %s27
      %p512 = scmp.lt.s32.totalorder %s27, 3
      %p513 = pnand %p511, %p512
      %p514 = pneg %p513
      // Predicated region
      $region9: #{vqvae_forward.1} parent=5 // pred_check
        _
      $region10: #{vqvae_forward.1} parent=5 // pred_check_branch
        %516 = sbr.rel (%p513) target = $region12
      $region11: #{vqvae_forward.1} parent=5 // pred_region
        %s517 = ssub.s32 %s27, 1
        // Predicated region
        $region13: #{vqvae_forward.1} parent=11 // pred_check
          %p518 = pneg %p74
        $region14: #{vqvae_forward.1} parent=11 // pred_check_branch
          %520 = sbr.rel (%p518) target = $region16
        $region15: #{vqvae_forward.1} parent=11 // pred_region
          _
        $region16: #{vqvae_forward.1} parent=11 // pred_fallthru
          _
        // Predicated region
        $region17: #{vqvae_forward.1} parent=11 // pred_check
          %p521 = pneg %p95
        $region18: #{vqvae_forward.1} parent=11 // pred_check_branch
          %523 = sbr.rel (%p521) target = $region20
        $region19: #{vqvae_forward.1} parent=11 // pred_region
          _
        $region20: #{vqvae_forward.1} parent=11 // pred_fallthru
          _
        // Predicated region
        $region21: #{vqvae_forward.1} parent=11 // pred_check
          %p524 = pneg %p116
        $region22: #{vqvae_forward.1} parent=11 // pred_check_branch
          %526 = sbr.rel (%p524) target = $region24
        $region23: #{vqvae_forward.1} parent=11 // pred_region
          _
        $region24: #{vqvae_forward.1} parent=11 // pred_fallthru
          _
        // Predicated region
        $region25: #{vqvae_forward.1} parent=11 // pred_check
          %p527 = pneg %p137
        $region26: #{vqvae_forward.1} parent=11 // pred_check_branch
          %529 = sbr.rel (%p527) target = $region28
        $region27: #{vqvae_forward.1} parent=11 // pred_region
          _
        $region28: #{vqvae_forward.1} parent=11 // pred_fallthru
          _
        // Predicated region
        $region29: #{vqvae_forward.1} parent=11 // pred_check
          %p530 = pneg %p158
        $region30: #{vqvae_forward.1} parent=11 // pred_check_branch
          %532 = sbr.rel (%p530) target = $region32
        $region31: #{vqvae_forward.1} parent=11 // pred_region
          _
        $region32: #{vqvae_forward.1} parent=11 // pred_fallthru
          _
        // Predicated region
        $region33: #{vqvae_forward.1} parent=11 // pred_check
          %p533 = pneg %p179
        $region34: #{vqvae_forward.1} parent=11 // pred_check_branch
          %535 = sbr.rel (%p533) target = $region36
        $region35: #{vqvae_forward.1} parent=11 // pred_region
          _
        $region36: #{vqvae_forward.1} parent=11 // pred_fallthru
          _
        // Predicated region
        $region37: #{vqvae_forward.1} parent=11 // pred_check
          %p536 = pneg %p200
        $region38: #{vqvae_forward.1} parent=11 // pred_check_branch
          %538 = sbr.rel (%p536) target = $region40
        $region39: #{vqvae_forward.1} parent=11 // pred_region
          _
        $region40: #{vqvae_forward.1} parent=11 // pred_fallthru
          _
        // Predicated region
        $region41: #{vqvae_forward.1} parent=11 // pred_check
          %p539 = pneg %p221
        $region42: #{vqvae_forward.1} parent=11 // pred_check_branch
          %541 = sbr.rel (%p539) target = $region44
        $region43: #{vqvae_forward.1} parent=11 // pred_region
          _
        $region44: #{vqvae_forward.1} parent=11 // pred_fallthru
          _
        // Predicated region
        $region45: #{vqvae_forward.1} parent=11 // pred_check
          %p542 = pneg %p242
        $region46: #{vqvae_forward.1} parent=11 // pred_check_branch
          %544 = sbr.rel (%p542) target = $region48
        $region47: #{vqvae_forward.1} parent=11 // pred_region
          _
        $region48: #{vqvae_forward.1} parent=11 // pred_fallthru
          _
        // Predicated region
        $region49: #{vqvae_forward.1} parent=11 // pred_check
          %p545 = pneg %p263
        $region50: #{vqvae_forward.1} parent=11 // pred_check_branch
          %547 = sbr.rel (%p545) target = $region52
        $region51: #{vqvae_forward.1} parent=11 // pred_region
          _
        $region52: #{vqvae_forward.1} parent=11 // pred_fallthru
          _
        // Predicated region
        $region53: #{vqvae_forward.1} parent=11 // pred_check
          %p548 = pneg %p284
        $region54: #{vqvae_forward.1} parent=11 // pred_check_branch
          %550 = sbr.rel (%p548) target = $region56
        $region55: #{vqvae_forward.1} parent=11 // pred_region
          _
        $region56: #{vqvae_forward.1} parent=11 // pred_fallthru
          _
        // Predicated region
        $region57: #{vqvae_forward.1} parent=11 // pred_check
          %p551 = pneg %p305
        $region58: #{vqvae_forward.1} parent=11 // pred_check_branch
          %553 = sbr.rel (%p551) target = $region60
        $region59: #{vqvae_forward.1} parent=11 // pred_region
          _
        $region60: #{vqvae_forward.1} parent=11 // pred_fallthru
          _
        // Predicated region
        $region61: #{vqvae_forward.1} parent=11 // pred_check
          %p554 = pneg %p326
        $region62: #{vqvae_forward.1} parent=11 // pred_check_branch
          %556 = sbr.rel (%p554) target = $region64
        $region63: #{vqvae_forward.1} parent=11 // pred_region
          _
        $region64: #{vqvae_forward.1} parent=11 // pred_fallthru
          _
        // Predicated region
        $region65: #{vqvae_forward.1} parent=11 // pred_check
          %p557 = pneg %p347
        $region66: #{vqvae_forward.1} parent=11 // pred_check_branch
          %559 = sbr.rel (%p557) target = $region68
        $region67: #{vqvae_forward.1} parent=11 // pred_region
          _
        $region68: #{vqvae_forward.1} parent=11 // pred_fallthru
          _
      $region12: #{vqvae_forward.1} parent=5 // pred_fallthru
        _
      %p560 = scmp.lt.s32.totalorder %s27, 2
      // Predicated region
      $region69: #{vqvae_forward.1} parent=5 // pred_check
        %p561 = pneg %p560
      $region70: #{vqvae_forward.1} parent=5 // pred_check_branch
        %563 = sbr.rel (%p561) target = $region72
      $region71: #{vqvae_forward.1} parent=5 // pred_region
        // Predicated region
        $region73: #{vqvae_forward.1} parent=71 // pred_check
          %p564 = pneg %p47
        $region74: #{vqvae_forward.1} parent=71 // pred_check_branch
          %566 = sbr.rel (%p564) target = $region76
        $region75: #{vqvae_forward.1} parent=71 // pred_region
          %s567 = smul.u32 3, %s27
          %p568 = scmp.lt.s32.totalorder %s567, 5
          %s569 = scalar_select %p568, %s567, 5
          %s570 = smul.addr %s569, 4
          %s571 = scalar_lea.vmem %s0, %s570
          %s572 = smul.u32 3, %s27
        $region76: #{vqvae_forward.1} parent=71 // pred_fallthru
          _
      $region72: #{vqvae_forward.1} parent=5 // pred_fallthru
        _
      %p573 = scmp.le.s32.totalorder 1, %s27
      %p574 = scmp.lt.s32.totalorder %s27, 3
      %p575 = pnand %p573, %p574
      %p576 = pneg %p575
      // Predicated region
      $region77: #{vqvae_forward.1} parent=5 // pred_check
        _
      $region78: #{vqvae_forward.1} parent=5 // pred_check_branch
        %578 = sbr.rel (%p575) target = $region80
      $region79: #{vqvae_forward.1} parent=5 // pred_region
        %s579 = ssub.s32 %s27, 1
        %s580 = smul.u32 3, %s32
        %p581 = scmp.lt.s32.totalorder %s580, 5
        %s582 = scalar_select %p581, %s580, 5
        %s583 = smul.addr %s582, 4
        %s584 = scalar_lea.vmem %s0, %s583
        %p585 = pneg %p53
        %p586 = pneg %p50
        %p587 = pneg %p74
        %p588 = pneg %p71
        %p589 = pneg %p95
        %p590 = pneg %p92
        %p591 = pneg %p116
        %p592 = pneg %p113
        %p593 = pneg %p137
        %p594 = pneg %p134
        %p595 = pneg %p158
        %p596 = pneg %p155
        %p597 = pneg %p179
        %p598 = pneg %p176
        %p599 = pneg %p200
        %p600 = pneg %p197
        %p601 = pneg %p221
        %p602 = pneg %p218
        %p603 = pneg %p242
        %p604 = pneg %p239
        %p605 = pneg %p263
        %p606 = pneg %p260
        %p607 = pneg %p284
        %p608 = pneg %p281
        %p609 = pneg %p305
        %p610 = pneg %p302
        %p611 = pneg %p326
        %p612 = pneg %p323
        %p613 = pneg %p347
        %p614 = pneg %p344
        %p615 = pneg %p373
        %p616 = pneg %p370
        %s617 = sand.u32 %s360, 1
        %s618 = sand.u32 %s360, 1
        %s619 = smul.addr %s618, 48
        %s620 = scalar_lea.vmem [#allocation3], %s619
        %p621 = pneg %p399
        %p622 = pneg %p396
        %s623 = sand.u32 %s386, 1
        %s624 = sand.u32 %s386, 1
        %s625 = smul.addr %s624, 48
        %s626 = scalar_lea.vmem [#allocation4], %s625
        %p627 = pneg %p425
        %p628 = pneg %p422
        %s629 = smul.u32 3, %s32
        %p630 = scmp.lt.s32.totalorder %s629, 5
        %s631 = scalar_select %p630, %s629, 5
        %s632 = scalar_lea.vmem %s17, %s631
        %p633 = pneg %p451
        %p634 = pneg %p448
        %s635 = smul.u32 3, %s32
        %p636 = scmp.lt.s32.totalorder %s635, 5
        %s637 = scalar_select %p636, %s635, 5
        %s638 = smul.addr %s637, 4
        %s639 = scalar_lea.vmem %s18, %s638
        %p640 = pneg %p477
        %p641 = pneg %p474
        %p642 = scmp.lt.s32.totalorder %s32, 1
        %s643 = scalar_select %p642, %s32, 1
        %s644 = smul.addr %s643, 4
        %s645 = smul.addr %s644, 8
        %s646 = scalar_lea.vmem %s19, %s645
        %p647 = pneg %p503
        %p648 = pneg %p500
        %p649 = scmp.lt.s32.totalorder %s32, 1
        %s650 = scalar_select %p649, %s32, 1
        %s651 = smul.addr %s650, 2
        %s652 = scalar_lea.vmem %s20, %s651
        %s653 = smul.u32 3, %s32
        %p654 = scmp.lt.s32.totalorder %s653, 5
        %s655 = scalar_select %p654, %s653, 5
        %s656 = smul.addr %s655, 4
        %s657 = scalar_lea.vmem %s0, %s656
        %s658 = smul.u32 3, %s32
        %s659 = smul.u32 3, %s32
        %s660 = smul.u32 3, %s32
        %s661 = smul.u32 3, %s32
        %p662 = scmp.lt.s32.totalorder %s661, 5
        %s663 = scalar_select %p662, %s661, 5
        %s664 = scalar_lea.vmem %s17, %s663
        %s665 = smul.u32 3, %s32
        %s666 = smul.u32 3, %s32
        %p667 = scmp.lt.s32.totalorder %s666, 5
        %s668 = scalar_select %p667, %s666, 5
        %s669 = smul.addr %s668, 4
        %s670 = scalar_lea.vmem %s18, %s669
        %s671 = smul.u32 3, %s32
        %p672 = scmp.lt.s32.totalorder %s32, 1
        %s673 = scalar_select %p672, %s32, 1
        %s674 = smul.addr %s673, 4
        %s675 = smul.addr %s674, 8
        %s676 = scalar_lea.vmem %s19, %s675
        %p677 = scmp.lt.s32.totalorder %s32, 1
        %s678 = scalar_select %p677, %s32, 1
        %s679 = smul.addr %s678, 2
        %s680 = scalar_lea.vmem %s20, %s679
        %v682 = vld [vmem:[%s1] sm:$0x7]
        %v683 = vld [vmem:[%s657] sm:$0xff]
        %v684 = vld [vmem:[%s657 + $0x8] sm:$0xf]
        %v685 = vld [vmem:[%s2] sm:$0xf]
        %v686 = vld [vmem:[%s2 + $0x4] sm:$0xf]
        %v687 = vld [vmem:[%s2 + $0x8] sm:$0xf]
        %v688 = vld [vmem:[%s2 + $0xc] sm:$0xf]
        %v690 = vcombine.high %v683, %v683
        %692 = vrot.lane.b32.xlu0 %v683, 19
        %v693 = vpop.permute.xlu0 %692
        %694 = vrot.lane.b32.xlu0 %v690, 19
        %v695 = vpop.permute.xlu0 %694
        %696 = vrot.lane.b32.xlu0 %v684, 19
        %v697 = vpop.permute.xlu0 %696
        %v698 = vlaneseq
        %v699 = vand.u32 %v698, 127
        %vm700 = vcmp.lt.s32.totalorder %v699, 19
        %v701 = vsel %vm700, %v695, %v697
        %v702 = vsel %vm700, %v693, %v695
        %v703 = vsel %vm700, %v697, %v693
        %v704 = vpack.c.bf16 %v703, %v703
        %v705 = vpack.c.bf16 %v702, %v702
        %v706 = vpack.c.bf16 %v701, %v701
        %s707 = scalar_lea.vmem %s2, 16
        %v708 = vld [vmem:[%s707] sm:$0xf]
        %v709 = vld [vmem:[%s707 + $0x4] sm:$0xf]
        %v710 = vld [vmem:[%s707 + $0x8] sm:$0xf]
        %v711 = vld [vmem:[%s707 + $0xc] sm:$0xf]
        %712 = vrot.lane.b32.xlu0 %v683, 18
        %v713 = vpop.permute.xlu0 %712
        %714 = vrot.lane.b32.xlu0 %v690, 18
        %v715 = vpop.permute.xlu0 %714
        %716 = vrot.lane.b32.xlu0 %v684, 18
        %v717 = vpop.permute.xlu0 %716
        %vm718 = vcmp.lt.s32.totalorder %v699, 18
        %v719 = vsel %vm718, %v715, %v717
        %v720 = vsel %vm718, %v713, %v715
        %v721 = vsel %vm718, %v717, %v713
        %v722 = vpack.c.bf16 %v721, %v721
        %v723 = vpack.c.bf16 %v720, %v720
        %v724 = vpack.c.bf16 %v719, %v719
        %v729 = vunpack.c.l.b16 %v708
        %v730 = vunpack.c.l.b16 %v709
        %v731 = vunpack.c.l.b16 %v710
        %v732 = vunpack.c.l.b16 %v711
        %v733 = vpack.c.b16 %v730, %v729
        %v734 = vpack.c.b16 %v732, %v731
        %vm735 = vcmask 31744
        %v737 = vsel %vm735, %v733, 0
        %v740 = vsel %vm735, %v734, 0
        %vm742 = vcmask 1041408
        %v744 = vsel %vm742, %v722, 0
        %v747 = vsel %vm742, %v723, 0
        %v750 = vsel %vm742, %v724, 0
        %752 = vmatprep.subr.bf16.mxu0 %v747
        %753 = vmatpush1.bf16.msra.mxu0 %v744
        %754 = vmatprep.subr.bf16.mxu0 0
        %755 = vmatpush1.bf16.msra.mxu0 0
        %756 = vmatprep.subr.bf16.mxu0 0
        %757 = vmatpush1.bf16.msra.mxu0 0
        %758 = vmatprep.subr.bf16.mxu0 0
        %759 = vmatpush1.bf16.msra.mxu0 0
        %760 = vmatprep.subr.bf16.mxu0 0
        %761 = vmatpush1.bf16.msra.mxu0 0
        %762 = vmatprep.subr.bf16.mxu0 0
        %763 = vmatpush1.bf16.msra.mxu0 0
        %764 = vmatprep.subr.bf16.mxu0 0
        %765 = vmatpush1.bf16.msra.mxu0 0
        %766 = vmatprep.subr.bf16.mxu0 0
        %767 = vmatpush1.bf16.msra.mxu0 0
        %768 = vmatprep.subr.bf16.mxu0 0
        %769 = vmatpush1.bf16.msra.mxu0 0
        %770 = vmatprep.subr.bf16.mxu0 0
        %771 = vmatpush1.bf16.msra.mxu0 0
        %772 = vmatprep.subr.bf16.mxu0 0
        %773 = vmatpush1.bf16.msra.mxu0 0
        %774 = vmatprep.subr.bf16.mxu0 0
        %775 = vmatpush1.bf16.msra.mxu0 0
        %776 = vmatprep.subr.bf16.mxu0 0
        %777 = vmatpush1.bf16.msra.mxu0 0
        %778 = vmatprep.subr.bf16.mxu0 0
        %779 = vmatpush1.bf16.msra.mxu0 0
        %780 = vmatprep.subr.bf16.mxu0 0
        %781 = vmatpush1.bf16.msra.mxu0 0
        %782 = vmatprep.subr.bf16.mxu0 0
        %783 = vmatpush1.bf16.msra.mxu0 0
        %784 = vmatprep.mubr.bf16.mxu0 0
        %785 = vmatmul.mubr.bf16.gmra.mrb[0].mxu0 %v737
        %v786 = vpop.f32.mrb[0].mxu0
        %v787 = vadd.f32 0.0, %v786
        %v788 = vpop.f32.mrb[0].mxu0
        %v789 = vadd.f32 0.0, %v788
        %v790 = vpop.f32.mrb[0].mxu0
        %v791 = vadd.f32 0.0, %v790
        %v792 = vpop.f32.mrb[0].mxu0
        %v793 = vadd.f32 0.0, %v792
        %794 = vmatprep.mubr.bf16.mxu0 0
        %795 = vmatmul.mubr.bf16.gmra.mrb[0].mxu0 %v740
        %v796 = vpop.f32.mrb[0].mxu0
        %v797 = vadd.f32 0.0, %v796
        %v798 = vpop.f32.mrb[0].mxu0
        %v799 = vadd.f32 0.0, %v798
        %v800 = vpop.f32.mrb[0].mxu0
        %v801 = vadd.f32 0.0, %v800
        %v802 = vpop.f32.mrb[0].mxu0
        %v803 = vadd.f32 0.0, %v802
        %804 = vdwg.mxu0
        %805 = vmatprep.subr.bf16.mxu0 0
        %806 = vmatpush1.bf16.msra.mxu0 %v750
        %807 = vmatprep.subr.bf16.mxu0 0
        %808 = vmatpush1.bf16.msra.mxu0 0
        %809 = vmatprep.subr.bf16.mxu0 0
        %810 = vmatpush1.bf16.msra.mxu0 0
        %811 = vmatprep.subr.bf16.mxu0 0
        %812 = vmatpush1.bf16.msra.mxu0 0
        %813 = vmatprep.subr.bf16.mxu0 0
        %814 = vmatpush1.bf16.msra.mxu0 0
        %815 = vmatprep.subr.bf16.mxu0 0
        %816 = vmatpush1.bf16.msra.mxu0 0
        %817 = vmatprep.subr.bf16.mxu0 0
        %818 = vmatpush1.bf16.msra.mxu0 0
        %819 = vmatprep.subr.bf16.mxu0 0
        %820 = vmatpush1.bf16.msra.mxu0 0
        %821 = vmatprep.subr.bf16.mxu0 0
        %822 = vmatpush1.bf16.msra.mxu0 0
        %823 = vmatprep.subr.bf16.mxu0 0
        %824 = vmatpush1.bf16.msra.mxu0 0
        %825 = vmatprep.subr.bf16.mxu0 0
        %826 = vmatpush1.bf16.msra.mxu0 0
        %827 = vmatprep.subr.bf16.mxu0 0
        %828 = vmatpush1.bf16.msra.mxu0 0
        %829 = vmatprep.subr.bf16.mxu0 0
        %830 = vmatpush1.bf16.msra.mxu0 0
        %831 = vmatprep.subr.bf16.mxu0 0
        %832 = vmatpush1.bf16.msra.mxu0 0
        %833 = vmatprep.subr.bf16.mxu0 0
        %834 = vmatpush1.bf16.msra.mxu0 0
        %835 = vmatprep.subr.bf16.mxu0 0
        %836 = vmatpush1.bf16.msra.mxu0 0
        %837 = vmatprep.mubr.bf16.mxu0 0
        %838 = vmatmul.mubr.bf16.gmra.mrb[0].mxu0 %v737
        %v839 = vpop.f32.mrb[0].mxu0
        %v840 = vadd.f32 0.0, %v839
        %v841 = vpop.f32.mrb[0].mxu0
        %v842 = vpop.f32.mrb[0].mxu0
        %v843 = vadd.f32 0.0, %v842
        %v844 = vpop.f32.mrb[0].mxu0
        %845 = vmatprep.mubr.bf16.mxu0 0
        %846 = vmatmul.mubr.bf16.gmra.mrb[0].mxu0 %v740
        %v847 = vpop.f32.mrb[0].mxu0
        %v848 = vadd.f32 0.0, %v847
        %v849 = vpop.f32.mrb[0].mxu0
        %v850 = vpop.f32.mrb[0].mxu0
        %v851 = vadd.f32 0.0, %v850
        %v852 = vpop.f32.mrb[0].mxu0
        %853 = vdwg.mxu0
        %v858 = vunpack.c.l.b16 %v685
        %v859 = vunpack.c.l.b16 %v686
        %v860 = vunpack.c.l.b16 %v687
        %v861 = vunpack.c.l.b16 %v688
        %v862 = vpack.c.b16 %v859, %v858
        %v863 = vpack.c.b16 %v861, %v860
        %v865 = vsel %vm735, %v862, 0
        %v868 = vsel %vm735, %v863, 0
        %v871 = vsel %vm742, %v704, 0
        %v874 = vsel %vm742, %v705, 0
        %v877 = vsel %vm742, %v706, 0
        %879 = vmatprep.subr.bf16.mxu0 %v874
        %880 = vmatpush1.bf16.msra.mxu0 %v871
        %881 = vmatprep.subr.bf16.mxu0 0
        %882 = vmatpush1.bf16.msra.mxu0 0
        %883 = vmatprep.subr.bf16.mxu0 0
        %884 = vmatpush1.bf16.msra.mxu0 0
        %885 = vmatprep.subr.bf16.mxu0 0
        %886 = vmatpush1.bf16.msra.mxu0 0
        %887 = vmatprep.subr.bf16.mxu0 0
        %888 = vmatpush1.bf16.msra.mxu0 0
        %889 = vmatprep.subr.bf16.mxu0 0
        %890 = vmatpush1.bf16.msra.mxu0 0
        %891 = vmatprep.subr.bf16.mxu0 0
        %892 = vmatpush1.bf16.msra.mxu0 0
        %893 = vmatprep.subr.bf16.mxu0 0
        %894 = vmatpush1.bf16.msra.mxu0 0
        %895 = vmatprep.subr.bf16.mxu0 0
        %896 = vmatpush1.bf16.msra.mxu0 0
        %897 = vmatprep.subr.bf16.mxu0 0
        %898 = vmatpush1.bf16.msra.mxu0 0
        %899 = vmatprep.subr.bf16.mxu0 0
        %900 = vmatpush1.bf16.msra.mxu0 0
        %901 = vmatprep.subr.bf16.mxu0 0
        %902 = vmatpush1.bf16.msra.mxu0 0
        %903 = vmatprep.subr.bf16.mxu0 0
        %904 = vmatpush1.bf16.msra.mxu0 0
        %905 = vmatprep.subr.bf16.mxu0 0
        %906 = vmatpush1.bf16.msra.mxu0 0
        %907 = vmatprep.subr.bf16.mxu0 0
        %908 = vmatpush1.bf16.msra.mxu0 0
        %909 = vmatprep.subr.bf16.mxu0 0
        %910 = vmatpush1.bf16.msra.mxu0 0
        %911 = vmatprep.mubr.bf16.mxu0 0
        %912 = vmatmul.mubr.bf16.gmra.mrb[0].mxu0 %v865
        %v913 = vpop.f32.mrb[0].mxu0
        %v914 = vadd.f32 %v787, %v913
        %v915 = vpop.f32.mrb[0].mxu0
        %v916 = vadd.f32 %v789, %v915
        %v917 = vpop.f32.mrb[0].mxu0
        %v918 = vadd.f32 %v791, %v917
        %v919 = vpop.f32.mrb[0].mxu0
        %v920 = vadd.f32 %v793, %v919
        %921 = vmatprep.mubr.bf16.mxu0 0
        %922 = vmatmul.mubr.bf16.gmra.mrb[0].mxu0 %v868
        %v923 = vpop.f32.mrb[0].mxu0
        %v924 = vadd.f32 %v797, %v923
        %v925 = vpop.f32.mrb[0].mxu0
        %v926 = vadd.f32 %v799, %v925
        %v927 = vpop.f32.mrb[0].mxu0
        %v928 = vadd.f32 %v801, %v927
        %v929 = vpop.f32.mrb[0].mxu0
        %v930 = vadd.f32 %v803, %v929
        %931 = vdwg.mxu0
        %932 = vmatprep.subr.bf16.mxu0 0
        %933 = vmatpush1.bf16.msra.mxu0 %v877
        %934 = vmatprep.subr.bf16.mxu0 0
        %935 = vmatpush1.bf16.msra.mxu0 0
        %936 = vmatprep.subr.bf16.mxu0 0
        %937 = vmatpush1.bf16.msra.mxu0 0
        %938 = vmatprep.subr.bf16.mxu0 0
        %939 = vmatpush1.bf16.msra.mxu0 0
        %940 = vmatprep.subr.bf16.mxu0 0
        %941 = vmatpush1.bf16.msra.mxu0 0
        %942 = vmatprep.subr.bf16.mxu0 0
        %943 = vmatpush1.bf16.msra.mxu0 0
        %944 = vmatprep.subr.bf16.mxu0 0
        %945 = vmatpush1.bf16.msra.mxu0 0
        %946 = vmatprep.subr.bf16.mxu0 0
        %947 = vmatpush1.bf16.msra.mxu0 0
        %948 = vmatprep.subr.bf16.mxu0 0
        %949 = vmatpush1.bf16.msra.mxu0 0
        %950 = vmatprep.subr.bf16.mxu0 0
        %951 = vmatpush1.bf16.msra.mxu0 0
        %952 = vmatprep.subr.bf16.mxu0 0
        %953 = vmatpush1.bf16.msra.mxu0 0
        %954 = vmatprep.subr.bf16.mxu0 0
        %955 = vmatpush1.bf16.msra.mxu0 0
        %956 = vmatprep.subr.bf16.mxu0 0
        %957 = vmatpush1.bf16.msra.mxu0 0
        %958 = vmatprep.subr.bf16.mxu0 0
        %959 = vmatpush1.bf16.msra.mxu0 0
        %960 = vmatprep.subr.bf16.mxu0 0
        %961 = vmatpush1.bf16.msra.mxu0 0
        %962 = vmatprep.subr.bf16.mxu0 0
        %963 = vmatpush1.bf16.msra.mxu0 0
        %964 = vmatprep.mubr.bf16.mxu0 0
        %965 = vmatmul.mubr.bf16.gmra.mrb[0].mxu0 %v865
        %v966 = vpop.f32.mrb[0].mxu0
        %v967 = vadd.f32 %v840, %v966
        %v968 = vpop.f32.mrb[0].mxu0
        %v969 = vpop.f32.mrb[0].mxu0
        %v970 = vadd.f32 %v843, %v969
        %v971 = vpop.f32.mrb[0].mxu0
        %972 = vmatprep.mubr.bf16.mxu0 0
        %973 = vmatmul.mubr.bf16.gmra.mrb[0].mxu0 %v868
        %v974 = vpop.f32.mrb[0].mxu0
        %v975 = vadd.f32 %v848, %v974
        %v976 = vpop.f32.mrb[0].mxu0
        %v977 = vpop.f32.mrb[0].mxu0
        %v978 = vadd.f32 %v851, %v977
        %v979 = vpop.f32.mrb[0].mxu0
        %980 = vdwg.mxu0
        %s981 = scalar_lea.vmem %s2, 32
        %v982 = vld [vmem:[%s981] sm:$0xf]
        %v983 = vld [vmem:[%s981 + $0x4] sm:$0xf]
        %v984 = vld [vmem:[%s981 + $0x8] sm:$0xf]
        %v985 = vld [vmem:[%s981 + $0xc] sm:$0xf]
        %986 = vrot.lane.b32.xlu0 %v683, 17
        %v987 = vpop.permute.xlu0 %986
        %988 = vrot.lane.b32.xlu0 %v690, 17
        %v989 = vpop.permute.xlu0 %988
        %990 = vrot.lane.b32.xlu0 %v684, 17
        %v991 = vpop.permute.xlu0 %990
        %vm992 = vcmp.lt.s32.totalorder %v699, 17
        %v993 = vsel %vm992, %v989, %v991
        %v994 = vsel %vm992, %v987, %v989
        %v995 = vsel %vm992, %v991, %v987
        %v996 = vpack.c.bf16 %v995, %v995
        %v997 = vpack.c.bf16 %v994, %v994
        %v998 = vpack.c.bf16 %v993, %v993
        %v1003 = vunpack.c.l.b16 %v982
        %v1004 = vunpack.c.l.b16 %v983
        %v1005 = vunpack.c.l.b16 %v984
        %v1006 = vunpack.c.l.b16 %v985
        %v1007 = vpack.c.b16 %v1004, %v1003
        %v1008 = vpack.c.b16 %v1006, %v1005
        %v1010 = vsel %vm735, %v1007, 0
        %v1013 = vsel %vm735, %v1008, 0
        %v1016 = vsel %vm742, %v996, 0
        %v1019 = vsel %vm742, %v997, 0
        %v1022 = vsel %vm742, %v998, 0
        %1024 = vmatprep.subr.bf16.mxu0 %v1019
        %1025 = vmatpush1.bf16.msra.mxu0 %v1016
        %1026 = vmatprep.subr.bf16.mxu0 0
        %1027 = vmatpush1.bf16.msra.mxu0 0
        %1028 = vmatprep.subr.bf16.mxu0 0
        %1029 = vmatpush1.bf16.msra.mxu0 0
        %1030 = vmatprep.subr.bf16.mxu0 0
        %1031 = vmatpush1.bf16.msra.mxu0 0
        %1032 = vmatprep.subr.bf16.mxu0 0
        %1033 = vmatpush1.bf16.msra.mxu0 0
        %1034 = vmatprep.subr.bf16.mxu0 0
        %1035 = vmatpush1.bf16.msra.mxu0 0
        %1036 = vmatprep.subr.bf16.mxu0 0
        %1037 = vmatpush1.bf16.msra.mxu0 0
        %1038 = vmatprep.subr.bf16.mxu0 0
        %1039 = vmatpush1.bf16.msra.mxu0 0
        %1040 = vmatprep.subr.bf16.mxu0 0
        %1041 = vmatpush1.bf16.msra.mxu0 0
        %1042 = vmatprep.subr.bf16.mxu0 0
        %1043 = vmatpush1.bf16.msra.mxu0 0
        %1044 = vmatprep.subr.bf16.mxu0 0
        %1045 = vmatpush1.bf16.msra.mxu0 0
        %1046 = vmatprep.subr.bf16.mxu0 0
        %1047 = vmatpush1.bf16.msra.mxu0 0
        %1048 = vmatprep.subr.bf16.mxu0 0
        %1049 = vmatpush1.bf16.msra.mxu0 0
        %1050 = vmatprep.subr.bf16.mxu0 0
        %1051 = vmatpush1.bf16.msra.mxu0 0
        %1052 = vmatprep.subr.bf16.mxu0 0
        %1053 = vmatpush1.bf16.msra.mxu0 0
        %1054 = vmatprep.subr.bf16.mxu0 0
        %1055 = vmatpush1.bf16.msra.mxu0 0
        %1056 = vmatprep.mubr.bf16.mxu0 0
        %1057 = vmatmul.mubr.bf16.gmra.mrb[0].mxu0 %v1010
        %v1058 = vpop.f32.mrb[0].mxu0
        %v1059 = vadd.f32 0.0, %v1058
        %v1060 = vpop.f32.mrb[0].mxu0
        %v1061 = vadd.f32 0.0, %v1060
        %v1062 = vpop.f32.mrb[0].mxu0
        %v1063 = vadd.f32 0.0, %v1062
        %v1064 = vpop.f32.mrb[0].mxu0
        %v1065 = vadd.f32 0.0, %v1064
        %1066 = vmatprep.mubr.bf16.mxu0 0
        %1067 = vmatmul.mubr.bf16.gmra.mrb[0].mxu0 %v1013
        %v1068 = vpop.f32.mrb[0].mxu0
        %v1069 = vadd.f32 0.0, %v1068
        %v1070 = vpop.f32.mrb[0].mxu0
        %v1071 = vadd.f32 0.0, %v1070
        %v1072 = vpop.f32.mrb[0].mxu0
        %v1073 = vadd.f32 0.0, %v1072
        %v1074 = vpop.f32.mrb[0].mxu0
        %v1075 = vadd.f32 0.0, %v1074
        %1076 = vdwg.mxu0
        %1077 = vmatprep.subr.bf16.mxu0 0
        %1078 = vmatpush1.bf16.msra.mxu0 %v1022
        %1079 = vmatprep.subr.bf16.mxu0 0
        %1080 = vmatpush1.bf16.msra.mxu0 0
        %1081 = vmatprep.subr.bf16.mxu0 0
        %1082 = vmatpush1.bf16.msra.mxu0 0
        %1083 = vmatprep.subr.bf16.mxu0 0
        %1084 = vmatpush1.bf16.msra.mxu0 0
        %1085 = vmatprep.subr.bf16.mxu0 0
        %1086 = vmatpush1.bf16.msra.mxu0 0
        %1087 = vmatprep.subr.bf16.mxu0 0
        %1088 = vmatpush1.bf16.msra.mxu0 0
        %1089 = vmatprep.subr.bf16.mxu0 0
        %1090 = vmatpush1.bf16.msra.mxu0 0
        %1091 = vmatprep.subr.bf16.mxu0 0
        %1092 = vmatpush1.bf16.msra.mxu0 0
        %1093 = vmatprep.subr.bf16.mxu0 0
        %1094 = vmatpush1.bf16.msra.mxu0 0
        %1095 = vmatprep.subr.bf16.mxu0 0
        %1096 = vmatpush1.bf16.msra.mxu0 0
        %1097 = vmatprep.subr.bf16.mxu0 0
        %1098 = vmatpush1.bf16.msra.mxu0 0
        %1099 = vmatprep.subr.bf16.mxu0 0
        %1100 = vmatpush1.bf16.msra.mxu0 0
        %1101 = vmatprep.subr.bf16.mxu0 0
        %1102 = vmatpush1.bf16.msra.mxu0 0
        %1103 = vmatprep.subr.bf16.mxu0 0
        %1104 = vmatpush1.bf16.msra.mxu0 0
        %1105 = vmatprep.subr.bf16.mxu0 0
        %1106 = vmatpush1.bf16.msra.mxu0 0
        %1107 = vmatprep.subr.bf16.mxu0 0
        %1108 = vmatpush1.bf16.msra.mxu0 0
        %1109 = vmatprep.mubr.bf16.mxu0 0
        %1110 = vmatmul.mubr.bf16.gmra.mrb[0].mxu0 %v1010
        %v1111 = vpop.f32.mrb[0].mxu0
        %v1112 = vadd.f32 0.0, %v1111
        %v1113 = vpop.f32.mrb[0].mxu0
        %v1114 = vpop.f32.mrb[0].mxu0
        %v1115 = vadd.f32 0.0, %v1114
        %v1116 = vpop.f32.mrb[0].mxu0
        %1117 = vmatprep.mubr.bf16.mxu0 0
        %1118 = vmatmul.mubr.bf16.gmra.mrb[0].mxu0 %v1013
        %v1119 = vpop.f32.mrb[0].mxu0
        %v1120 = vadd.f32 0.0, %v1119
        %v1121 = vpop.f32.mrb[0].mxu0
        %v1122 = vpop.f32.mrb[0].mxu0
        %v1123 = vadd.f32 0.0, %v1122
        %v1124 = vpop.f32.mrb[0].mxu0
        %1125 = vdwg.mxu0
        %v1126 = vadd.f32 %v914, %v1059
        %v1127 = vadd.f32 %v916, %v1061
        %v1128 = vadd.f32 %v967, %v1112
        %v1129 = vadd.f32 %v918, %v1063
        %v1130 = vadd.f32 %v920, %v1065
        %v1131 = vadd.f32 %v970, %v1115
        %v1132 = vadd.f32 %v924, %v1069
        %v1133 = vadd.f32 %v926, %v1071
        %v1134 = vadd.f32 %v975, %v1120
        %v1135 = vadd.f32 %v928, %v1073
        %v1136 = vadd.f32 %v930, %v1075
        %v1137 = vadd.f32 %v978, %v1123
        %s1138 = scalar_lea.vmem %s2, 48
        %v1139 = vld [vmem:[%s1138] sm:$0xf]
        %v1140 = vld [vmem:[%s1138 + $0x4] sm:$0xf]
        %v1141 = vld [vmem:[%s1138 + $0x8] sm:$0xf]
        %v1142 = vld [vmem:[%s1138 + $0xc] sm:$0xf]
        %1143 = vrot.lane.b32.xlu0 %v683, 1
        %v1144 = vpop.permute.xlu0 %1143
        %1145 = vrot.lane.b32.xlu0 %v690, 1
        %v1146 = vpop.permute.xlu0 %1145
        %1147 = vrot.lane.b32.xlu0 %v684, 1
        %v1148 = vpop.permute.xlu0 %1147
        %vm1149 = vcmp.lt.s32.totalorder %v699, 1
        %v1150 = vsel %vm1149, %v1146, %v1148
        %v1151 = vsel %vm1149, %v1144, %v1146
        %v1152 = vsel %vm1149, %v1148, %v1144
        %v1153 = vpack.c.bf16 %v1152, %v1152
        %v1154 = vpack.c.bf16 %v1151, %v1151
        %v1155 = vpack.c.bf16 %v1150, %v1150
        %v1160 = vunpack.c.l.b16 %v1139
        %v1161 = vunpack.c.l.b16 %v1140
        %v1162 = vunpack.c.l.b16 %v1141
        %v1163 = vunpack.c.l.b16 %v1142
        %v1164 = vpack.c.b16 %v1161, %v1160
        %v1165 = vpack.c.b16 %v1163, %v1162
        %v1167 = vsel %vm735, %v1164, 0
        %v1170 = vsel %vm735, %v1165, 0
        %v1173 = vsel %vm742, %v1153, 0
        %v1176 = vsel %vm742, %v1154, 0
        %v1179 = vsel %vm742, %v1155, 0
        %1181 = vmatprep.subr.bf16.mxu0 %v1176
        %1182 = vmatpush1.bf16.msra.mxu0 %v1173
        %1183 = vmatprep.subr.bf16.mxu0 0
        %1184 = vmatpush1.bf16.msra.mxu0 0
        %1185 = vmatprep.subr.bf16.mxu0 0
        %1186 = vmatpush1.bf16.msra.mxu0 0
        %1187 = vmatprep.subr.bf16.mxu0 0
        %1188 = vmatpush1.bf16.msra.mxu0 0
        %1189 = vmatprep.subr.bf16.mxu0 0
        %1190 = vmatpush1.bf16.msra.mxu0 0
        %1191 = vmatprep.subr.bf16.mxu0 0
        %1192 = vmatpush1.bf16.msra.mxu0 0
        %1193 = vmatprep.subr.bf16.mxu0 0
        %1194 = vmatpush1.bf16.msra.mxu0 0
        %1195 = vmatprep.subr.bf16.mxu0 0
        %1196 = vmatpush1.bf16.msra.mxu0 0
        %1197 = vmatprep.subr.bf16.mxu0 0
        %1198 = vmatpush1.bf16.msra.mxu0 0
        %1199 = vmatprep.subr.bf16.mxu0 0
        %1200 = vmatpush1.bf16.msra.mxu0 0
        %1201 = vmatprep.subr.bf16.mxu0 0
        %1202 = vmatpush1.bf16.msra.mxu0 0
        %1203 = vmatprep.subr.bf16.mxu0 0
        %1204 = vmatpush1.bf16.msra.mxu0 0
        %1205 = vmatprep.subr.bf16.mxu0 0
        %1206 = vmatpush1.bf16.msra.mxu0 0
        %1207 = vmatprep.subr.bf16.mxu0 0
        %1208 = vmatpush1.bf16.msra.mxu0 0
        %1209 = vmatprep.subr.bf16.mxu0 0
        %1210 = vmatpush1.bf16.msra.mxu0 0
        %1211 = vmatprep.subr.bf16.mxu0 0
        %1212 = vmatpush1.bf16.msra.mxu0 0
        %1213 = vmatprep.mubr.bf16.mxu0 0
        %1214 = vmatmul.mubr.bf16.gmra.mrb[0].mxu0 %v1167
        %v1215 = vpop.f32.mrb[0].mxu0
        %v1216 = vadd.f32 0.0, %v1215
        %v1217 = vpop.f32.mrb[0].mxu0
        %v1218 = vadd.f32 0.0, %v1217
        %v1219 = vpop.f32.mrb[0].mxu0
        %v1220 = vadd.f32 0.0, %v1219
        %v1221 = vpop.f32.mrb[0].mxu0
        %v1222 = vadd.f32 0.0, %v1221
        %1223 = vmatprep.mubr.bf16.mxu0 0
        %1224 = vmatmul.mubr.bf16.gmra.mrb[0].mxu0 %v1170
        %v1225 = vpop.f32.mrb[0].mxu0
        %v1226 = vadd.f32 0.0, %v1225
        %v1227 = vpop.f32.mrb[0].mxu0
        %v1228 = vadd.f32 0.0, %v1227
        %v1229 = vpop.f32.mrb[0].mxu0
        %v1230 = vadd.f32 0.0, %v1229
        %v1231 = vpop.f32.mrb[0].mxu0
        %v1232 = vadd.f32 0.0, %v1231
        %1233 = vdwg.mxu0
        %1234 = vmatprep.subr.bf16.mxu0 0
        %1235 = vmatpush1.bf16.msra.mxu0 %v1179
        %1236 = vmatprep.subr.bf16.mxu0 0
        %1237 = vmatpush1.bf16.msra.mxu0 0
        %1238 = vmatprep.subr.bf16.mxu0 0
        %1239 = vmatpush1.bf16.msra.mxu0 0
        %1240 = vmatprep.subr.bf16.mxu0 0
        %1241 = vmatpush1.bf16.msra.mxu0 0
        %1242 = vmatprep.subr.bf16.mxu0 0
        %1243 = vmatpush1.bf16.msra.mxu0 0
        %1244 = vmatprep.subr.bf16.mxu0 0
        %1245 = vmatpush1.bf16.msra.mxu0 0
        %1246 = vmatprep.subr.bf16.mxu0 0
        %1247 = vmatpush1.bf16.msra.mxu0 0
        %1248 = vmatprep.subr.bf16.mxu0 0
        %1249 = vmatpush1.bf16.msra.mxu0 0
        %1250 = vmatprep.subr.bf16.mxu0 0
        %1251 = vmatpush1.bf16.msra.mxu0 0
        %1252 = vmatprep.subr.bf16.mxu0 0
        %1253 = vmatpush1.bf16.msra.mxu0 0
        %1254 = vmatprep.subr.bf16.mxu0 0
        %1255 = vmatpush1.bf16.msra.mxu0 0
        %1256 = vmatprep.subr.bf16.mxu0 0
        %1257 = vmatpush1.bf16.msra.mxu0 0
        %1258 = vmatprep.subr.bf16.mxu0 0
        %1259 = vmatpush1.bf16.msra.mxu0 0
        %1260 = vmatprep.subr.bf16.mxu0 0
        %1261 = vmatpush1.bf16.msra.mxu0 0
        %1262 = vmatprep.subr.bf16.mxu0 0
        %1263 = vmatpush1.bf16.msra.mxu0 0
        %1264 = vmatprep.subr.bf16.mxu0 0
        %1265 = vmatpush1.bf16.msra.mxu0 0
        %1266 = vmatprep.mubr.bf16.mxu0 0
        %1267 = vmatmul.mubr.bf16.gmra.mrb[0].mxu0 %v1167
        %v1268 = vpop.f32.mrb[0].mxu0
        %v1269 = vadd.f32 0.0, %v1268
        %v1270 = vpop.f32.mrb[0].mxu0
        %v1271 = vpop.f32.mrb[0].mxu0
        %v1272 = vadd.f32 0.0, %v1271
        %v1273 = vpop.f32.mrb[0].mxu0
        %1274 = vmatprep.mubr.bf16.mxu0 0
        %1275 = vmatmul.mubr.bf16.gmra.mrb[0].mxu0 %v1170
        %v1276 = vpop.f32.mrb[0].mxu0
        %v1277 = vadd.f32 0.0, %v1276
        %v1278 = vpop.f32.mrb[0].mxu0
        %v1279 = vpop.f32.mrb[0].mxu0
        %v1280 = vadd.f32 0.0, %v1279
        %v1281 = vpop.f32.mrb[0].mxu0
        %1282 = vdwg.mxu0
        %v1283 = vadd.f32 %v1126, %v1216
        %v1284 = vadd.f32 %v1127, %v1218
        %v1285 = vadd.f32 %v1128, %v1269
        %v1286 = vadd.f32 %v1129, %v1220
        %v1287 = vadd.f32 %v1130, %v1222
        %v1288 = vadd.f32 %v1131, %v1272
        %v1289 = vadd.f32 %v1132, %v1226
        %v1290 = vadd.f32 %v1133, %v1228
        %v1291 = vadd.f32 %v1134, %v1277
        %v1292 = vadd.f32 %v1135, %v1230
        %v1293 = vadd.f32 %v1136, %v1232
        %v1294 = vadd.f32 %v1137, %v1280
        %s1295 = scalar_lea.vmem %s2, 64
        %v1296 = vld [vmem:[%s1295] sm:$0xf]
        %v1297 = vld [vmem:[%s1295 + $0x4] sm:$0xf]
        %v1298 = vld [vmem:[%s1295 + $0x8] sm:$0xf]
        %v1299 = vld [vmem:[%s1295 + $0xc] sm:$0xf]
        %v1300 = vpack.c.bf16 %v683, %v683
        %v1301 = vpack.c.bf16 %v690, %v690
        %v1302 = vpack.c.bf16 %v684, %v684
        %v1307 = vunpack.c.l.b16 %v1296
        %v1308 = vunpack.c.l.b16 %v1297
        %v1309 = vunpack.c.l.b16 %v1298
        %v1310 = vunpack.c.l.b16 %v1299
        %v1311 = vpack.c.b16 %v1308, %v1307
        %v1312 = vpack.c.b16 %v1310, %v1309
        %v1314 = vsel %vm735, %v1311, 0
        %v1317 = vsel %vm735, %v1312, 0
        %v1320 = vsel %vm742, %v1300, 0
        %v1323 = vsel %vm742, %v1301, 0
        %v1326 = vsel %vm742, %v1302, 0
        %1328 = vmatprep.subr.bf16.mxu0 %v1323
        %1329 = vmatpush1.bf16.msra.mxu0 %v1320
        %1330 = vmatprep.subr.bf16.mxu0 0
        %1331 = vmatpush1.bf16.msra.mxu0 0
        %1332 = vmatprep.subr.bf16.mxu0 0
        %1333 = vmatpush1.bf16.msra.mxu0 0
        %1334 = vmatprep.subr.bf16.mxu0 0
        %1335 = vmatpush1.bf16.msra.mxu0 0
        %1336 = vmatprep.subr.bf16.mxu0 0
        %1337 = vmatpush1.bf16.msra.mxu0 0
        %1338 = vmatprep.subr.bf16.mxu0 0
        %1339 = vmatpush1.bf16.msra.mxu0 0
        %1340 = vmatprep.subr.bf16.mxu0 0
        %1341 = vmatpush1.bf16.msra.mxu0 0
        %1342 = vmatprep.subr.bf16.mxu0 0
        %1343 = vmatpush1.bf16.msra.mxu0 0
        %1344 = vmatprep.subr.bf16.mxu0 0
        %1345 = vmatpush1.bf16.msra.mxu0 0
        %1346 = vmatprep.subr.bf16.mxu0 0
        %1347 = vmatpush1.bf16.msra.mxu0 0
        %1348 = vmatprep.subr.bf16.mxu0 0
        %1349 = vmatpush1.bf16.msra.mxu0 0
        %1350 = vmatprep.subr.bf16.mxu0 0
        %1351 = vmatpush1.bf16.msra.mxu0 0
        %1352 = vmatprep.subr.bf16.mxu0 0
        %1353 = vmatpush1.bf16.msra.mxu0 0
        %1354 = vmatprep.subr.bf16.mxu0 0
        %1355 = vmatpush1.bf16.msra.mxu0 0
        %1356 = vmatprep.subr.bf16.mxu0 0
        %1357 = vmatpush1.bf16.msra.mxu0 0
        %1358 = vmatprep.subr.bf16.mxu0 0
        %1359 = vmatpush1.bf16.msra.mxu0 0
        %1360 = vmatprep.mubr.bf16.mxu0 0
        %1361 = vmatmul.mubr.bf16.gmra.mrb[0].mxu0 %v1314
        %v1362 = vpop.f32.mrb[0].mxu0
        %v1363 = vadd.f32 0.0, %v1362
        %v1364 = vpop.f32.mrb[0].mxu0
        %v1365 = vadd.f32 0.0, %v1364
        %v1366 = vpop.f32.mrb[0].mxu0
        %v1367 = vadd.f32 0.0, %v1366
        %v1368 = vpop.f32.mrb[0].mxu0
        %v1369 = vadd.f32 0.0, %v1368
        %1370 = vmatprep.mubr.bf16.mxu0 0
        %1371 = vmatmul.mubr.bf16.gmra.mrb[0].mxu0 %v1317
        %v1372 = vpop.f32.mrb[0].mxu0
        %v1373 = vadd.f32 0.0, %v1372
        %v1374 = vpop.f32.mrb[0].mxu0
        %v1375 = vadd.f32 0.0, %v1374
        %v1376 = vpop.f32.mrb[0].mxu0
        %v1377 = vadd.f32 0.0, %v1376
        %v1378 = vpop.f32.mrb[0].mxu0
        %v1379 = vadd.f32 0.0, %v1378
        %1380 = vdwg.mxu0
        %1381 = vmatprep.subr.bf16.mxu0 0
        %1382 = vmatpush1.bf16.msra.mxu0 %v1326
        %1383 = vmatprep.subr.bf16.mxu0 0
        %1384 = vmatpush1.bf16.msra.mxu0 0
        %1385 = vmatprep.subr.bf16.mxu0 0
        %1386 = vmatpush1.bf16.msra.mxu0 0
        %1387 = vmatprep.subr.bf16.mxu0 0
        %1388 = vmatpush1.bf16.msra.mxu0 0
        %1389 = vmatprep.subr.bf16.mxu0 0
        %1390 = vmatpush1.bf16.msra.mxu0 0
        %1391 = vmatprep.subr.bf16.mxu0 0
        %1392 = vmatpush1.bf16.msra.mxu0 0
        %1393 = vmatprep.subr.bf16.mxu0 0
        %1394 = vmatpush1.bf16.msra.mxu0 0
        %1395 = vmatprep.subr.bf16.mxu0 0
        %1396 = vmatpush1.bf16.msra.mxu0 0
        %1397 = vmatprep.subr.bf16.mxu0 0
        %1398 = vmatpush1.bf16.msra.mxu0 0
        %1399 = vmatprep.subr.bf16.mxu0 0
        %1400 = vmatpush1.bf16.msra.mxu0 0
        %1401 = vmatprep.subr.bf16.mxu0 0
        %1402 = vmatpush1.bf16.msra.mxu0 0
        %1403 = vmatprep.subr.bf16.mxu0 0
        %1404 = vmatpush1.bf16.msra.mxu0 0
        %1405 = vmatprep.subr.bf16.mxu0 0
        %1406 = vmatpush1.bf16.msra.mxu0 0
        %1407 = vmatprep.subr.bf16.mxu0 0
        %1408 = vmatpush1.bf16.msra.mxu0 0
        %1409 = vmatprep.subr.bf16.mxu0 0
        %1410 = vmatpush1.bf16.msra.mxu0 0
        %1411 = vmatprep.subr.bf16.mxu0 0
        %1412 = vmatpush1.bf16.msra.mxu0 0
        %1413 = vmatprep.mubr.bf16.mxu0 0
        %1414 = vmatmul.mubr.bf16.gmra.mrb[0].mxu0 %v1314
        %v1415 = vpop.f32.mrb[0].mxu0
        %v1416 = vadd.f32 0.0, %v1415
        %v1417 = vpop.f32.mrb[0].mxu0
        %v1418 = vpop.f32.mrb[0].mxu0
        %v1419 = vadd.f32 0.0, %v1418
        %v1420 = vpop.f32.mrb[0].mxu0
        %1421 = vmatprep.mubr.bf16.mxu0 0
        %1422 = vmatmul.mubr.bf16.gmra.mrb[0].mxu0 %v1317
        %v1423 = vpop.f32.mrb[0].mxu0
        %v1424 = vadd.f32 0.0, %v1423
        %v1425 = vpop.f32.mrb[0].mxu0
        %v1426 = vpop.f32.mrb[0].mxu0
        %v1427 = vadd.f32 0.0, %v1426
        %v1428 = vpop.f32.mrb[0].mxu0
        %1429 = vdwg.mxu0
        %v1430 = vadd.f32 %v1283, %v1363
        %v1431 = vadd.f32 %v1284, %v1365
        %v1432 = vadd.f32 %v1285, %v1416
        %v1433 = vadd.f32 %v1286, %v1367
        %v1434 = vadd.f32 %v1287, %v1369
        %v1435 = vadd.f32 %v1288, %v1419
        %v1436 = vadd.f32 %v1289, %v1373
        %v1437 = vadd.f32 %v1290, %v1375
        %v1438 = vadd.f32 %v1291, %v1424
        %v1439 = vadd.f32 %v1292, %v1377
        %v1440 = vadd.f32 %v1293, %v1379
        %v1441 = vadd.f32 %v1294, %v1427
        %s1442 = scalar_lea.vmem %s2, 80
        %v1443 = vld [vmem:[%s1442] sm:$0xf]
        %v1444 = vld [vmem:[%s1442 + $0x4] sm:$0xf]
        %v1445 = vld [vmem:[%s1442 + $0x8] sm:$0xf]
        %v1446 = vld [vmem:[%s1442 + $0xc] sm:$0xf]
        %1447 = vrot.lane.b32.xlu0 %v683, 127
        %v1448 = vpop.permute.xlu0 %1447
        %1449 = vrot.lane.b32.xlu0 %v690, 127
        %v1450 = vpop.permute.xlu0 %1449
        %1451 = vrot.lane.b32.xlu0 %v684, 127
        %v1452 = vpop.permute.xlu0 %1451
        %vm1453 = vcmp.lt.s32.totalorder %v699, 127
        %v1454 = vsel %vm1453, %v1450, %v1452
        %v1455 = vsel %vm1453, %v1448, %v1450
        %v1456 = vsel %vm1453, %v1452, %v1448
        %v1457 = vpack.c.bf16 %v1455, %v1455
        %v1458 = vpack.c.bf16 %v1454, %v1454
        %v1459 = vpack.c.bf16 %v1456, %v1456
        %v1464 = vunpack.c.l.b16 %v1443
        %v1465 = vunpack.c.l.b16 %v1444
        %v1466 = vunpack.c.l.b16 %v1445
        %v1467 = vunpack.c.l.b16 %v1446
        %v1468 = vpack.c.b16 %v1465, %v1464
        %v1469 = vpack.c.b16 %v1467, %v1466
        %v1471 = vsel %vm735, %v1468, 0
        %v1474 = vsel %vm735, %v1469, 0
        %v1477 = vsel %vm742, %v1457, 0
        %v1480 = vsel %vm742, %v1458, 0
        %v1483 = vsel %vm742, %v1459, 0
        %1485 = vmatprep.subr.bf16.mxu0 %v1480
        %1486 = vmatpush1.bf16.msra.mxu0 %v1477
        %1487 = vmatprep.subr.bf16.mxu0 0
        %1488 = vmatpush1.bf16.msra.mxu0 0
        %1489 = vmatprep.subr.bf16.mxu0 0
        %1490 = vmatpush1.bf16.msra.mxu0 0
        %1491 = vmatprep.subr.bf16.mxu0 0
        %1492 = vmatpush1.bf16.msra.mxu0 0
        %1493 = vmatprep.subr.bf16.mxu0 0
        %1494 = vmatpush1.bf16.msra.mxu0 0
        %1495 = vmatprep.subr.bf16.mxu0 0
        %1496 = vmatpush1.bf16.msra.mxu0 0
        %1497 = vmatprep.subr.bf16.mxu0 0
        %1498 = vmatpush1.bf16.msra.mxu0 0
        %1499 = vmatprep.subr.bf16.mxu0 0
        %1500 = vmatpush1.bf16.msra.mxu0 0
        %1501 = vmatprep.subr.bf16.mxu0 0
        %1502 = vmatpush1.bf16.msra.mxu0 0
        %1503 = vmatprep.subr.bf16.mxu0 0
        %1504 = vmatpush1.bf16.msra.mxu0 0
        %1505 = vmatprep.subr.bf16.mxu0 0
        %1506 = vmatpush1.bf16.msra.mxu0 0
        %1507 = vmatprep.subr.bf16.mxu0 0
        %1508 = vmatpush1.bf16.msra.mxu0 0
        %1509 = vmatprep.subr.bf16.mxu0 0
        %1510 = vmatpush1.bf16.msra.mxu0 0
        %1511 = vmatprep.subr.bf16.mxu0 0
        %1512 = vmatpush1.bf16.msra.mxu0 0
        %1513 = vmatprep.subr.bf16.mxu0 0
        %1514 = vmatpush1.bf16.msra.mxu0 0
        %1515 = vmatprep.subr.bf16.mxu0 0
        %1516 = vmatpush1.bf16.msra.mxu0 0
        %1517 = vmatprep.mubr.bf16.mxu0 0
        %1518 = vmatmul.mubr.bf16.gmra.mrb[0].mxu0 %v1471
        %v1519 = vpop.f32.mrb[0].mxu0
        %v1520 = vadd.f32 0.0, %v1519
        %v1521 = vpop.f32.mrb[0].mxu0
        %v1522 = vadd.f32 0.0, %v1521
        %v1523 = vpop.f32.mrb[0].mxu0
        %v1524 = vadd.f32 0.0, %v1523
        %v1525 = vpop.f32.mrb[0].mxu0
        %v1526 = vadd.f32 0.0, %v1525
        %1527 = vmatprep.mubr.bf16.mxu0 0
        %1528 = vmatmul.mubr.bf16.gmra.mrb[0].mxu0 %v1474
        %v1529 = vpop.f32.mrb[0].mxu0
        %v1530 = vadd.f32 0.0, %v1529
        %v1531 = vpop.f32.mrb[0].mxu0
        %v1532 = vadd.f32 0.0, %v1531
        %v1533 = vpop.f32.mrb[0].mxu0
        %v1534 = vadd.f32 0.0, %v1533
        %v1535 = vpop.f32.mrb[0].mxu0
        %v1536 = vadd.f32 0.0, %v1535
        %1537 = vdwg.mxu0
        %1538 = vmatprep.subr.bf16.mxu0 0
        %1539 = vmatpush1.bf16.msra.mxu0 %v1483
        %1540 = vmatprep.subr.bf16.mxu0 0
        %1541 = vmatpush1.bf16.msra.mxu0 0
        %1542 = vmatprep.subr.bf16.mxu0 0
        %1543 = vmatpush1.bf16.msra.mxu0 0
        %1544 = vmatprep.subr.bf16.mxu0 0
        %1545 = vmatpush1.bf16.msra.mxu0 0
        %1546 = vmatprep.subr.bf16.mxu0 0
        %1547 = vmatpush1.bf16.msra.mxu0 0
        %1548 = vmatprep.subr.bf16.mxu0 0
        %1549 = vmatpush1.bf16.msra.mxu0 0
        %1550 = vmatprep.subr.bf16.mxu0 0
        %1551 = vmatpush1.bf16.msra.mxu0 0
        %1552 = vmatprep.subr.bf16.mxu0 0
        %1553 = vmatpush1.bf16.msra.mxu0 0
        %1554 = vmatprep.subr.bf16.mxu0 0
        %1555 = vmatpush1.bf16.msra.mxu0 0
        %1556 = vmatprep.subr.bf16.mxu0 0
        %1557 = vmatpush1.bf16.msra.mxu0 0
        %1558 = vmatprep.subr.bf16.mxu0 0
        %1559 = vmatpush1.bf16.msra.mxu0 0
        %1560 = vmatprep.subr.bf16.mxu0 0
        %1561 = vmatpush1.bf16.msra.mxu0 0
        %1562 = vmatprep.subr.bf16.mxu0 0
        %1563 = vmatpush1.bf16.msra.mxu0 0
        %1564 = vmatprep.subr.bf16.mxu0 0
        %1565 = vmatpush1.bf16.msra.mxu0 0
        %1566 = vmatprep.subr.bf16.mxu0 0
        %1567 = vmatpush1.bf16.msra.mxu0 0
        %1568 = vmatprep.subr.bf16.mxu0 0
        %1569 = vmatpush1.bf16.msra.mxu0 0
        %1570 = vmatprep.mubr.bf16.mxu0 0
        %1571 = vmatmul.mubr.bf16.gmra.mrb[0].mxu0 %v1471
        %v1572 = vpop.f32.mrb[0].mxu0
        %v1573 = vadd.f32 0.0, %v1572
        %v1574 = vpop.f32.mrb[0].mxu0
        %v1575 = vpop.f32.mrb[0].mxu0
        %v1576 = vadd.f32 0.0, %v1575
        %v1577 = vpop.f32.mrb[0].mxu0
        %1578 = vmatprep.mubr.bf16.mxu0 0
        %1579 = vmatmul.mubr.bf16.gmra.mrb[0].mxu0 %v1474
        %v1580 = vpop.f32.mrb[0].mxu0
        %v1581 = vadd.f32 0.0, %v1580
        %v1582 = vpop.f32.mrb[0].mxu0
        %v1583 = vpop.f32.mrb[0].mxu0
        %v1584 = vadd.f32 0.0, %v1583
        %v1585 = vpop.f32.mrb[0].mxu0
        %1586 = vdwg.mxu0
        %v1587 = vadd.f32 %v1430, %v1520
        %v1588 = vadd.f32 %v1431, %v1522
        %v1589 = vadd.f32 %v1432, %v1573
        %v1590 = vadd.f32 %v1433, %v1524
        %v1591 = vadd.f32 %v1434, %v1526
        %v1592 = vadd.f32 %v1435, %v1576
        %v1593 = vadd.f32 %v1436, %v1530
        %v1594 = vadd.f32 %v1437, %v1532
        %v1595 = vadd.f32 %v1438, %v1581
        %v1596 = vadd.f32 %v1439, %v1534
        %v1597 = vadd.f32 %v1440, %v1536
        %v1598 = vadd.f32 %v1441, %v1584
        %s1599 = scalar_lea.vmem %s2, 96
        %v1600 = vld [vmem:[%s1599] sm:$0xf]
        %v1601 = vld [vmem:[%s1599 + $0x4] sm:$0xf]
        %v1602 = vld [vmem:[%s1599 + $0x8] sm:$0xf]
        %v1603 = vld [vmem:[%s1599 + $0xc] sm:$0xf]
        %1604 = vrot.lane.b32.xlu0 %v683, 111
        %v1605 = vpop.permute.xlu0 %1604
        %1606 = vrot.lane.b32.xlu0 %v690, 111
        %v1607 = vpop.permute.xlu0 %1606
        %1608 = vrot.lane.b32.xlu0 %v684, 111
        %v1609 = vpop.permute.xlu0 %1608
        %vm1610 = vcmp.lt.s32.totalorder %v699, 111
        %v1611 = vsel %vm1610, %v1607, %v1609
        %v1612 = vsel %vm1610, %v1605, %v1607
        %v1613 = vsel %vm1610, %v1609, %v1605
        %v1614 = vpack.c.bf16 %v1612, %v1612
        %v1615 = vpack.c.bf16 %v1611, %v1611
        %v1616 = vpack.c.bf16 %v1613, %v1613
        %v1621 = vunpack.c.l.b16 %v1600
        %v1622 = vunpack.c.l.b16 %v1601
        %v1623 = vunpack.c.l.b16 %v1602
        %v1624 = vunpack.c.l.b16 %v1603
        %v1625 = vpack.c.b16 %v1622, %v1621
        %v1626 = vpack.c.b16 %v1624, %v1623
        %v1628 = vsel %vm735, %v1625, 0
        %v1631 = vsel %vm735, %v1626, 0
        %v1634 = vsel %vm742, %v1614, 0
        %v1637 = vsel %vm742, %v1615, 0
        %v1640 = vsel %vm742, %v1616, 0
        %1642 = vmatprep.subr.bf16.mxu0 %v1637
        %1643 = vmatpush1.bf16.msra.mxu0 %v1634
        %1644 = vmatprep.subr.bf16.mxu0 0
        %1645 = vmatpush1.bf16.msra.mxu0 0
        %1646 = vmatprep.subr.bf16.mxu0 0
        %1647 = vmatpush1.bf16.msra.mxu0 0
        %1648 = vmatprep.subr.bf16.mxu0 0
        %1649 = vmatpush1.bf16.msra.mxu0 0
        %1650 = vmatprep.subr.bf16.mxu0 0
        %1651 = vmatpush1.bf16.msra.mxu0 0
        %1652 = vmatprep.subr.bf16.mxu0 0
        %1653 = vmatpush1.bf16.msra.mxu0 0
        %1654 = vmatprep.subr.bf16.mxu0 0
        %1655 = vmatpush1.bf16.msra.mxu0 0
        %1656 = vmatprep.subr.bf16.mxu0 0
        %1657 = vmatpush1.bf16.msra.mxu0 0
        %1658 = vmatprep.subr.bf16.mxu0 0
        %1659 = vmatpush1.bf16.msra.mxu0 0
        %1660 = vmatprep.subr.bf16.mxu0 0
        %1661 = vmatpush1.bf16.msra.mxu0 0
        %1662 = vmatprep.subr.bf16.mxu0 0
        %1663 = vmatpush1.bf16.msra.mxu0 0
        %1664 = vmatprep.subr.bf16.mxu0 0
        %1665 = vmatpush1.bf16.msra.mxu0 0
        %1666 = vmatprep.subr.bf16.mxu0 0
        %1667 = vmatpush1.bf16.msra.mxu0 0
        %1668 = vmatprep.subr.bf16.mxu0 0
        %1669 = vmatpush1.bf16.msra.mxu0 0
        %1670 = vmatprep.subr.bf16.mxu0 0
        %1671 = vmatpush1.bf16.msra.mxu0 0
        %1672 = vmatprep.subr.bf16.mxu0 0
        %1673 = vmatpush1.bf16.msra.mxu0 0
        %1674 = vmatprep.mubr.bf16.mxu0 0
        %1675 = vmatmul.mubr.bf16.gmra.mrb[0].mxu0 %v1628
        %v1676 = vpop.f32.mrb[0].mxu0
        %v1677 = vadd.f32 0.0, %v1676
        %v1678 = vpop.f32.mrb[0].mxu0
        %v1679 = vadd.f32 0.0, %v1678
        %v1680 = vpop.f32.mrb[0].mxu0
        %v1681 = vadd.f32 0.0, %v1680
        %v1682 = vpop.f32.mrb[0].mxu0
        %v1683 = vadd.f32 0.0, %v1682
        %1684 = vmatprep.mubr.bf16.mxu0 0
        %1685 = vmatmul.mubr.bf16.gmra.mrb[0].mxu0 %v1631
        %v1686 = vpop.f32.mrb[0].mxu0
        %v1687 = vadd.f32 0.0, %v1686
        %v1688 = vpop.f32.mrb[0].mxu0
        %v1689 = vadd.f32 0.0, %v1688
        %v1690 = vpop.f32.mrb[0].mxu0
        %v1691 = vadd.f32 0.0, %v1690
        %v1692 = vpop.f32.mrb[0].mxu0
        %v1693 = vadd.f32 0.0, %v1692
        %1694 = vdwg.mxu0
        %1695 = vmatprep.subr.bf16.mxu0 0
        %1696 = vmatpush1.bf16.msra.mxu0 %v1640
        %1697 = vmatprep.subr.bf16.mxu0 0
        %1698 = vmatpush1.bf16.msra.mxu0 0
        %1699 = vmatprep.subr.bf16.mxu0 0
        %1700 = vmatpush1.bf16.msra.mxu0 0
        %1701 = vmatprep.subr.bf16.mxu0 0
        %1702 = vmatpush1.bf16.msra.mxu0 0
        %1703 = vmatprep.subr.bf16.mxu0 0
        %1704 = vmatpush1.bf16.msra.mxu0 0
        %1705 = vmatprep.subr.bf16.mxu0 0
        %1706 = vmatpush1.bf16.msra.mxu0 0
        %1707 = vmatprep.subr.bf16.mxu0 0
        %1708 = vmatpush1.bf16.msra.mxu0 0
        %1709 = vmatprep.subr.bf16.mxu0 0
        %1710 = vmatpush1.bf16.msra.mxu0 0
        %1711 = vmatprep.subr.bf16.mxu0 0
        %1712 = vmatpush1.bf16.msra.mxu0 0
        %1713 = vmatprep.subr.bf16.mxu0 0
        %1714 = vmatpush1.bf16.msra.mxu0 0
        %1715 = vmatprep.subr.bf16.mxu0 0
        %1716 = vmatpush1.bf16.msra.mxu0 0
        %1717 = vmatprep.subr.bf16.mxu0 0
        %1718 = vmatpush1.bf16.msra.mxu0 0
        %1719 = vmatprep.subr.bf16.mxu0 0
        %1720 = vmatpush1.bf16.msra.mxu0 0
        %1721 = vmatprep.subr.bf16.mxu0 0
        %1722 = vmatpush1.bf16.msra.mxu0 0
        %1723 = vmatprep.subr.bf16.mxu0 0
        %1724 = vmatpush1.bf16.msra.mxu0 0
        %1725 = vmatprep.subr.bf16.mxu0 0
        %1726 = vmatpush1.bf16.msra.mxu0 0
        %1727 = vmatprep.mubr.bf16.mxu0 0
        %1728 = vmatmul.mubr.bf16.gmra.mrb[0].mxu0 %v1628
        %v1729 = vpop.f32.mrb[0].mxu0
        %v1730 = vadd.f32 0.0, %v1729
        %v1731 = vpop.f32.mrb[0].mxu0
        %v1732 = vpop.f32.mrb[0].mxu0
        %v1733 = vadd.f32 0.0, %v1732
        %v1734 = vpop.f32.mrb[0].mxu0
        %1735 = vmatprep.mubr.bf16.mxu0 0
        %1736 = vmatmul.mubr.bf16.gmra.mrb[0].mxu0 %v1631
        %v1737 = vpop.f32.mrb[0].mxu0
        %v1738 = vadd.f32 0.0, %v1737
        %v1739 = vpop.f32.mrb[0].mxu0
        %v1740 = vpop.f32.mrb[0].mxu0
        %v1741 = vadd.f32 0.0, %v1740
        %v1742 = vpop.f32.mrb[0].mxu0
        %1743 = vdwg.mxu0
        %v1744 = vadd.f32 %v1587, %v1677
        %v1745 = vadd.f32 %v1588, %v1679
        %v1746 = vadd.f32 %v1589, %v1730
        %v1747 = vadd.f32 %v1590, %v1681
        %v1748 = vadd.f32 %v1591, %v1683
        %v1749 = vadd.f32 %v1592, %v1733
        %v1750 = vadd.f32 %v1593, %v1687
        %v1751 = vadd.f32 %v1594, %v1689
        %v1752 = vadd.f32 %v1595, %v1738
        %v1753 = vadd.f32 %v1596, %v1691
        %v1754 = vadd.f32 %v1597, %v1693
        %v1755 = vadd.f32 %v1598, %v1741
        %s1756 = scalar_lea.vmem %s2, 112
        %v1757 = vld [vmem:[%s1756] sm:$0xf]
        %v1758 = vld [vmem:[%s1756 + $0x4] sm:$0xf]
        %v1759 = vld [vmem:[%s1756 + $0x8] sm:$0xf]
        %v1760 = vld [vmem:[%s1756 + $0xc] sm:$0xf]
        %1761 = vrot.lane.b32.xlu0 %v683, 110
        %v1762 = vpop.permute.xlu0 %1761
        %1763 = vrot.lane.b32.xlu0 %v690, 110
        %v1764 = vpop.permute.xlu0 %1763
        %1765 = vrot.lane.b32.xlu0 %v684, 110
        %v1766 = vpop.permute.xlu0 %1765
        %vm1767 = vcmp.lt.s32.totalorder %v699, 110
        %v1768 = vsel %vm1767, %v1764, %v1766
        %v1769 = vsel %vm1767, %v1762, %v1764
        %v1770 = vsel %vm1767, %v1766, %v1762
        %v1771 = vpack.c.bf16 %v1769, %v1769
        %v1772 = vpack.c.bf16 %v1768, %v1768
        %v1773 = vpack.c.bf16 %v1770, %v1770
        %v1778 = vunpack.c.l.b16 %v1757
        %v1779 = vunpack.c.l.b16 %v1758
        %v1780 = vunpack.c.l.b16 %v1759
        %v1781 = vunpack.c.l.b16 %v1760
        %v1782 = vpack.c.b16 %v1779, %v1778
        %v1783 = vpack.c.b16 %v1781, %v1780
        %v1785 = vsel %vm735, %v1782, 0
        %v1788 = vsel %vm735, %v1783, 0
        %v1791 = vsel %vm742, %v1771, 0
        %v1794 = vsel %vm742, %v1772, 0
        %v1797 = vsel %vm742, %v1773, 0
        %1799 = vmatprep.subr.bf16.mxu0 %v1794
        %1800 = vmatpush1.bf16.msra.mxu0 %v1791
        %1801 = vmatprep.subr.bf16.mxu0 0
        %1802 = vmatpush1.bf16.msra.mxu0 0
        %1803 = vmatprep.subr.bf16.mxu0 0
        %1804 = vmatpush1.bf16.msra.mxu0 0
        %1805 = vmatprep.subr.bf16.mxu0 0
        %1806 = vmatpush1.bf16.msra.mxu0 0
        %1807 = vmatprep.subr.bf16.mxu0 0
        %1808 = vmatpush1.bf16.msra.mxu0 0
        %1809 = vmatprep.subr.bf16.mxu0 0
        %1810 = vmatpush1.bf16.msra.mxu0 0
        %1811 = vmatprep.subr.bf16.mxu0 0
        %1812 = vmatpush1.bf16.msra.mxu0 0
        %1813 = vmatprep.subr.bf16.mxu0 0
        %1814 = vmatpush1.bf16.msra.mxu0 0
        %1815 = vmatprep.subr.bf16.mxu0 0
        %1816 = vmatpush1.bf16.msra.mxu0 0
        %1817 = vmatprep.subr.bf16.mxu0 0
        %1818 = vmatpush1.bf16.msra.mxu0 0
        %1819 = vmatprep.subr.bf16.mxu0 0
        %1820 = vmatpush1.bf16.msra.mxu0 0
        %1821 = vmatprep.subr.bf16.mxu0 0
        %1822 = vmatpush1.bf16.msra.mxu0 0
        %1823 = vmatprep.subr.bf16.mxu0 0
        %1824 = vmatpush1.bf16.msra.mxu0 0
        %1825 = vmatprep.subr.bf16.mxu0 0
        %1826 = vmatpush1.bf16.msra.mxu0 0
        %1827 = vmatprep.subr.bf16.mxu0 0
        %1828 = vmatpush1.bf16.msra.mxu0 0
        %1829 = vmatprep.subr.bf16.mxu0 0
        %1830 = vmatpush1.bf16.msra.mxu0 0
        %1831 = vmatprep.mubr.bf16.mxu0 0
        %1832 = vmatmul.mubr.bf16.gmra.mrb[0].mxu0 %v1785
        %v1833 = vpop.f32.mrb[0].mxu0
        %v1834 = vadd.f32 0.0, %v1833
        %v1835 = vpop.f32.mrb[0].mxu0
        %v1836 = vadd.f32 0.0, %v1835
        %v1837 = vpop.f32.mrb[0].mxu0
        %v1838 = vadd.f32 0.0, %v1837
        %v1839 = vpop.f32.mrb[0].mxu0
        %v1840 = vadd.f32 0.0, %v1839
        %1841 = vmatprep.mubr.bf16.mxu0 0
        %1842 = vmatmul.mubr.bf16.gmra.mrb[0].mxu0 %v1788
        %v1843 = vpop.f32.mrb[0].mxu0
        %v1844 = vadd.f32 0.0, %v1843
        %v1845 = vpop.f32.mrb[0].mxu0
        %v1846 = vadd.f32 0.0, %v1845
        %v1847 = vpop.f32.mrb[0].mxu0
        %v1848 = vadd.f32 0.0, %v1847
        %v1849 = vpop.f32.mrb[0].mxu0
        %v1850 = vadd.f32 0.0, %v1849
        %1851 = vdwg.mxu0
        %1852 = vmatprep.subr.bf16.mxu0 0
        %1853 = vmatpush1.bf16.msra.mxu0 %v1797
        %1854 = vmatprep.subr.bf16.mxu0 0
        %1855 = vmatpush1.bf16.msra.mxu0 0
        %1856 = vmatprep.subr.bf16.mxu0 0
        %1857 = vmatpush1.bf16.msra.mxu0 0
        %1858 = vmatprep.subr.bf16.mxu0 0
        %1859 = vmatpush1.bf16.msra.mxu0 0
        %1860 = vmatprep.subr.bf16.mxu0 0
        %1861 = vmatpush1.bf16.msra.mxu0 0
        %1862 = vmatprep.subr.bf16.mxu0 0
        %1863 = vmatpush1.bf16.msra.mxu0 0
        %1864 = vmatprep.subr.bf16.mxu0 0
        %1865 = vmatpush1.bf16.msra.mxu0 0
        %1866 = vmatprep.subr.bf16.mxu0 0
        %1867 = vmatpush1.bf16.msra.mxu0 0
        %1868 = vmatprep.subr.bf16.mxu0 0
        %1869 = vmatpush1.bf16.msra.mxu0 0
        %1870 = vmatprep.subr.bf16.mxu0 0
        %1871 = vmatpush1.bf16.msra.mxu0 0
        %1872 = vmatprep.subr.bf16.mxu0 0
        %1873 = vmatpush1.bf16.msra.mxu0 0
        %1874 = vmatprep.subr.bf16.mxu0 0
        %1875 = vmatpush1.bf16.msra.mxu0 0
        %1876 = vmatprep.subr.bf16.mxu0 0
        %1877 = vmatpush1.bf16.msra.mxu0 0
        %1878 = vmatprep.subr.bf16.mxu0 0
        %1879 = vmatpush1.bf16.msra.mxu0 0
        %1880 = vmatprep.subr.bf16.mxu0 0
        %1881 = vmatpush1.bf16.msra.mxu0 0
        %1882 = vmatprep.subr.bf16.mxu0 0
        %1883 = vmatpush1.bf16.msra.mxu0 0
        %1884 = vmatprep.mubr.bf16.mxu0 0
        %1885 = vmatmul.mubr.bf16.gmra.mrb[0].mxu0 %v1785
        %v1886 = vpop.f32.mrb[0].mxu0
        %v1887 = vadd.f32 0.0, %v1886
        %v1888 = vpop.f32.mrb[0].mxu0
        %v1889 = vpop.f32.mrb[0].mxu0
        %v1890 = vadd.f32 0.0, %v1889
        %v1891 = vpop.f32.mrb[0].mxu0
        %1892 = vmatprep.mubr.bf16.mxu0 0
        %1893 = vmatmul.mubr.bf16.gmra.mrb[0].mxu0 %v1788
        %v1894 = vpop.f32.mrb[0].mxu0
        %v1895 = vadd.f32 0.0, %v1894
        %v1896 = vpop.f32.mrb[0].mxu0
        %v1897 = vpop.f32.mrb[0].mxu0
        %v1898 = vadd.f32 0.0, %v1897
        %v1899 = vpop.f32.mrb[0].mxu0
        %1900 = vdwg.mxu0
        %v1901 = vadd.f32 %v1744, %v1834
        %v1902 = vadd.f32 %v1745, %v1836
        %v1903 = vadd.f32 %v1746, %v1887
        %v1904 = vadd.f32 %v1747, %v1838
        %v1905 = vadd.f32 %v1748, %v1840
        %v1906 = vadd.f32 %v1749, %v1890
        %v1907 = vadd.f32 %v1750, %v1844
        %v1908 = vadd.f32 %v1751, %v1846
        %v1909 = vadd.f32 %v1752, %v1895
        %v1910 = vadd.f32 %v1753, %v1848
        %v1911 = vadd.f32 %v1754, %v1850
        %v1912 = vadd.f32 %v1755, %v1898
        %s1913 = scalar_lea.vmem %s2, 128
        %v1914 = vld [vmem:[%s1913] sm:$0xf]
        %v1915 = vld [vmem:[%s1913 + $0x4] sm:$0xf]
        %v1916 = vld [vmem:[%s1913 + $0x8] sm:$0xf]
        %v1917 = vld [vmem:[%s1913 + $0xc] sm:$0xf]
        %1918 = vrot.lane.b32.xlu0 %v683, 109
        %v1919 = vpop.permute.xlu0 %1918
        %1920 = vrot.lane.b32.xlu0 %v690, 109
        %v1921 = vpop.permute.xlu0 %1920
        %1922 = vrot.lane.b32.xlu0 %v684, 109
        %v1923 = vpop.permute.xlu0 %1922
        %vm1924 = vcmp.lt.s32.totalorder %v699, 109
        %v1925 = vsel %vm1924, %v1921, %v1923
        %v1926 = vsel %vm1924, %v1919, %v1921
        %v1927 = vsel %vm1924, %v1923, %v1919
        %v1928 = vpack.c.bf16 %v1926, %v1926
        %v1929 = vpack.c.bf16 %v1925, %v1925
        %v1930 = vpack.c.bf16 %v1927, %v1927
        %v1935 = vunpack.c.l.b16 %v1914
        %v1936 = vunpack.c.l.b16 %v1915
        %v1937 = vunpack.c.l.b16 %v1916
        %v1938 = vunpack.c.l.b16 %v1917
        %v1939 = vpack.c.b16 %v1936, %v1935
        %v1940 = vpack.c.b16 %v1938, %v1937
        %v1942 = vsel %vm735, %v1939, 0
        %v1945 = vsel %vm735, %v1940, 0
        %v1948 = vsel %vm742, %v1928, 0
        %v1951 = vsel %vm742, %v1929, 0
        %v1954 = vsel %vm742, %v1930, 0
        %1956 = vmatprep.subr.bf16.mxu0 %v1951
        %1957 = vmatpush1.bf16.msra.mxu0 %v1948
        %1958 = vmatprep.subr.bf16.mxu0 0
        %1959 = vmatpush1.bf16.msra.mxu0 0
        %1960 = vmatprep.subr.bf16.mxu0 0
        %1961 = vmatpush1.bf16.msra.mxu0 0
        %1962 = vmatprep.subr.bf16.mxu0 0
        %1963 = vmatpush1.bf16.msra.mxu0 0
        %1964 = vmatprep.subr.bf16.mxu0 0
        %1965 = vmatpush1.bf16.msra.mxu0 0
        %1966 = vmatprep.subr.bf16.mxu0 0
        %1967 = vmatpush1.bf16.msra.mxu0 0
        %1968 = vmatprep.subr.bf16.mxu0 0
        %1969 = vmatpush1.bf16.msra.mxu0 0
        %1970 = vmatprep.subr.bf16.mxu0 0
        %1971 = vmatpush1.bf16.msra.mxu0 0
        %1972 = vmatprep.subr.bf16.mxu0 0
        %1973 = vmatpush1.bf16.msra.mxu0 0
        %1974 = vmatprep.subr.bf16.mxu0 0
        %1975 = vmatpush1.bf16.msra.mxu0 0
        %1976 = vmatprep.subr.bf16.mxu0 0
        %1977 = vmatpush1.bf16.msra.mxu0 0
        %1978 = vmatprep.subr.bf16.mxu0 0
        %1979 = vmatpush1.bf16.msra.mxu0 0
        %1980 = vmatprep.subr.bf16.mxu0 0
        %1981 = vmatpush1.bf16.msra.mxu0 0
        %1982 = vmatprep.subr.bf16.mxu0 0
        %1983 = vmatpush1.bf16.msra.mxu0 0
        %1984 = vmatprep.subr.bf16.mxu0 0
        %1985 = vmatpush1.bf16.msra.mxu0 0
        %1986 = vmatprep.subr.bf16.mxu0 0
        %1987 = vmatpush1.bf16.msra.mxu0 0
        %1988 = vmatprep.mubr.bf16.mxu0 0
        %1989 = vmatmul.mubr.bf16.gmra.mrb[0].mxu0 %v1942
        %v1990 = vpop.f32.mrb[0].mxu0
        %v1991 = vadd.f32 0.0, %v1990
        %v1992 = vpop.f32.mrb[0].mxu0
        %v1993 = vadd.f32 0.0, %v1992
        %v1994 = vpop.f32.mrb[0].mxu0
        %v1995 = vadd.f32 0.0, %v1994
        %v1996 = vpop.f32.mrb[0].mxu0
        %v1997 = vadd.f32 0.0, %v1996
        %1998 = vmatprep.mubr.bf16.mxu0 0
        %1999 = vmatmul.mubr.bf16.gmra.mrb[0].mxu0 %v1945
        %v2000 = vpop.f32.mrb[0].mxu0
        %v2001 = vadd.f32 0.0, %v2000
        %v2002 = vpop.f32.mrb[0].mxu0
        %v2003 = vadd.f32 0.0, %v2002
        %v2004 = vpop.f32.mrb[0].mxu0
        %v2005 = vadd.f32 0.0, %v2004
        %v2006 = vpop.f32.mrb[0].mxu0
        %v2007 = vadd.f32 0.0, %v2006
        %2008 = vdwg.mxu0
        %2009 = vmatprep.subr.bf16.mxu0 0
        %2010 = vmatpush1.bf16.msra.mxu0 %v1954
        %2011 = vmatprep.subr.bf16.mxu0 0
        %2012 = vmatpush1.bf16.msra.mxu0 0
        %2013 = vmatprep.subr.bf16.mxu0 0
        %2014 = vmatpush1.bf16.msra.mxu0 0
        %2015 = vmatprep.subr.bf16.mxu0 0
        %2016 = vmatpush1.bf16.msra.mxu0 0
        %2017 = vmatprep.subr.bf16.mxu0 0
        %2018 = vmatpush1.bf16.msra.mxu0 0
        %2019 = vmatprep.subr.bf16.mxu0 0
        %2020 = vmatpush1.bf16.msra.mxu0 0
        %2021 = vmatprep.subr.bf16.mxu0 0
        %2022 = vmatpush1.bf16.msra.mxu0 0
        %2023 = vmatprep.subr.bf16.mxu0 0
        %2024 = vmatpush1.bf16.msra.mxu0 0
        %2025 = vmatprep.subr.bf16.mxu0 0
        %2026 = vmatpush1.bf16.msra.mxu0 0
        %2027 = vmatprep.subr.bf16.mxu0 0
        %2028 = vmatpush1.bf16.msra.mxu0 0
        %2029 = vmatprep.subr.bf16.mxu0 0
        %2030 = vmatpush1.bf16.msra.mxu0 0
        %2031 = vmatprep.subr.bf16.mxu0 0
        %2032 = vmatpush1.bf16.msra.mxu0 0
        %2033 = vmatprep.subr.bf16.mxu0 0
        %2034 = vmatpush1.bf16.msra.mxu0 0
        %2035 = vmatprep.subr.bf16.mxu0 0
        %2036 = vmatpush1.bf16.msra.mxu0 0
        %2037 = vmatprep.subr.bf16.mxu0 0
        %2038 = vmatpush1.bf16.msra.mxu0 0
        %2039 = vmatprep.subr.bf16.mxu0 0
        %2040 = vmatpush1.bf16.msra.mxu0 0
        %2041 = vmatprep.mubr.bf16.mxu0 0
        %2042 = vmatmul.mubr.bf16.gmra.mrb[0].mxu0 %v1942
        %v2043 = vpop.f32.mrb[0].mxu0
        %v2044 = vadd.f32 0.0, %v2043
        %v2045 = vpop.f32.mrb[0].mxu0
        %v2046 = vpop.f32.mrb[0].mxu0
        %v2047 = vadd.f32 0.0, %v2046
        %v2048 = vpop.f32.mrb[0].mxu0
        %2049 = vmatprep.mubr.bf16.mxu0 0
        %2050 = vmatmul.mubr.bf16.gmra.mrb[0].mxu0 %v1945
        %v2051 = vpop.f32.mrb[0].mxu0
        %v2052 = vadd.f32 0.0, %v2051
        %v2053 = vpop.f32.mrb[0].mxu0
        %v2054 = vpop.f32.mrb[0].mxu0
        %v2055 = vadd.f32 0.0, %v2054
        %v2056 = vpop.f32.mrb[0].mxu0
        %2057 = vdwg.mxu0
        %v2058 = vadd.f32 %v1901, %v1991
        %v2059 = vadd.f32 %v1902, %v1993
        %v2060 = vadd.f32 %v1903, %v2044
        %v2061 = vadd.f32 %v1904, %v1995
        %v2062 = vadd.f32 %v1905, %v1997
        %v2063 = vadd.f32 %v1906, %v2047
        %v2064 = vadd.f32 %v1907, %v2001
        %v2065 = vadd.f32 %v1908, %v2003
        %v2066 = vadd.f32 %v1909, %v2052
        %v2067 = vadd.f32 %v1910, %v2005
        %v2068 = vadd.f32 %v1911, %v2007
        %v2069 = vadd.f32 %v1912, %v2055
        %v2070 = vld [vmem:[%s3] sm:$0xff]
        %v2071 = vld [vmem:[%s3 + $0x8] sm:$0xff]
        %v2072 = vld [vmem:[%s3 + $0x10] sm:$0xff]
        %v2073 = vld [vmem:[%s3 + $0x18] sm:$0xff]
        %2075 = vset.pattern.permute.xlu0 0
        %2076 = vperm.xlu0 %2075, %v2070
        %v2077 = vpop.permute.xlu0 %2076
        %2080 = vset.pattern.permute.xlu0 0
        %2081 = vperm.xlu0 %2080, %v2071
        %v2082 = vpop.permute.xlu0 %2081
        %2085 = vset.pattern.permute.xlu0 0
        %2086 = vperm.xlu0 %2085, %v2072
        %v2087 = vpop.permute.xlu0 %2086
        %2090 = vset.pattern.permute.xlu0 0
        %2091 = vperm.xlu0 %2090, %v2073
        %v2092 = vpop.permute.xlu0 %2091
        %v2094 = vadd.f32 %v2058, %v2077
        %v2095 = vadd.f32 %v2059, %v2077
        %v2096 = vadd.f32 %v2060, %v2077
        %v2097 = vadd.f32 %v2061, %v2082
        %v2098 = vadd.f32 %v2062, %v2082
        %v2099 = vadd.f32 %v2063, %v2082
        %v2100 = vadd.f32 %v2064, %v2087
        %v2101 = vadd.f32 %v2065, %v2087
        %v2102 = vadd.f32 %v2066, %v2087
        %v2103 = vadd.f32 %v2067, %v2092
        %v2104 = vadd.f32 %v2068, %v2092
        %v2105 = vadd.f32 %v2069, %v2092
        %v2106 = vmax.f32 %v2094, 0.0
        %v2107 = vmax.f32 %v2095, 0.0
        %v2108 = vmax.f32 %v2096, 0.0
        %v2109 = vmax.f32 %v2097, 0.0
        %v2110 = vmax.f32 %v2098, 0.0
        %v2111 = vmax.f32 %v2099, 0.0
        %v2112 = vmax.f32 %v2100, 0.0
        %v2113 = vmax.f32 %v2101, 0.0
        %v2114 = vmax.f32 %v2102, 0.0
        %v2115 = vmax.f32 %v2103, 0.0
        %v2116 = vmax.f32 %v2104, 0.0
        %v2117 = vmax.f32 %v2105, 0.0
        %v2119 = vlaneseq
        %v2120 = vshrl.u32 %v2119, 7
        %v2121 = vsub.s32 0, %v2120
        %v2122 = vrot.slane %v682, %v2121
        %v2123 = vlaneseq
        %v2124 = vshrl.u32 %v2123, 7
        %v2125 = vsub.s32 1, %v2124
        %v2126 = vrot.slane %v682, %v2125
        %v2127 = vlaneseq
        %v2128 = vshrl.u32 %v2127, 7
        %v2129 = vsub.s32 2, %v2128
        %v2130 = vrot.slane %v682, %v2129
        %v2134 = vmul.f32 %v2106, %v2122
        %v2135 = vmul.f32 %v2107, %v2126
        %v2136 = vmul.f32 %v2108, %v2130
        %v2137 = vmul.f32 %v2109, %v2122
        %v2138 = vmul.f32 %v2110, %v2126
        %v2139 = vmul.f32 %v2111, %v2130
        %v2140 = vmul.f32 %v2112, %v2122
        %v2141 = vmul.f32 %v2113, %v2126
        %v2142 = vmul.f32 %v2114, %v2130
        %v2143 = vmul.f32 %v2115, %v2122
        %v2144 = vmul.f32 %v2116, %v2126
        %v2145 = vmul.f32 %v2117, %v2130
        %2146 = vrot.lane.b32.xlu0 %v2134, 19
        %v2147 = vpop.permute.xlu0 %2146
        %2148 = vrot.lane.b32.xlu0 %v2137, 19
        %v2149 = vpop.permute.xlu0 %2148
        %2150 = vrot.lane.b32.xlu0 %v2140, 19
        %v2151 = vpop.permute.xlu0 %2150
        %2152 = vrot.lane.b32.xlu0 %v2143, 19
        %v2153 = vpop.permute.xlu0 %2152
        %2154 = vrot.lane.b32.xlu0 %v2135, 19
        %v2155 = vpop.permute.xlu0 %2154
        %2156 = vrot.lane.b32.xlu0 %v2138, 19
        %v2157 = vpop.permute.xlu0 %2156
        %2158 = vrot.lane.b32.xlu0 %v2141, 19
        %v2159 = vpop.permute.xlu0 %2158
        %2160 = vrot.lane.b32.xlu0 %v2144, 19
        %v2161 = vpop.permute.xlu0 %2160
        %2162 = vrot.lane.b32.xlu0 %v2136, 19
        %v2163 = vpop.permute.xlu0 %2162
        %2164 = vrot.lane.b32.xlu0 %v2139, 19
        %v2165 = vpop.permute.xlu0 %2164
        %2166 = vrot.lane.b32.xlu0 %v2142, 19
        %v2167 = vpop.permute.xlu0 %2166
        %2168 = vrot.lane.b32.xlu0 %v2145, 19
        %v2169 = vpop.permute.xlu0 %2168
        %v2170 = vsel %vm700, %v2155, %v2163
        %v2171 = vsel %vm700, %v2157, %v2165
        %v2172 = vsel %vm700, %v2159, %v2167
        %v2173 = vsel %vm700, %v2161, %v2169
        %v2174 = vsel %vm700, %v2147, %v2155
        %v2175 = vsel %vm700, %v2149, %v2157
        %v2176 = vsel %vm700, %v2151, %v2159
        %v2177 = vsel %vm700, %v2153, %v2161
        %v2178 = vsel %vm700, %v2163, %v2147
        %v2179 = vsel %vm700, %v2165, %v2149
        %v2180 = vsel %vm700, %v2167, %v2151
        %v2181 = vsel %vm700, %v2169, %v2153
        %v2182 = vpack.c.bf16 %v2179, %v2178
        %v2183 = vpack.c.bf16 %v2175, %v2174
        %v2184 = vpack.c.bf16 %v2171, %v2170
        %v2185 = vpack.c.bf16 %v2181, %v2180
        %v2186 = vpack.c.bf16 %v2177, %v2176
        %v2187 = vpack.c.bf16 %v2173, %v2172
        %2188 = vst [vmem:[#allocation2] sm:$0xff] %v2182
        %2189 = vst [vmem:[#allocation2 + $0x8] sm:$0xff] %v2183
        %2190 = vst [vmem:[#allocation2 + $0x10] sm:$0xff] %v2184
        %2191 = vst [vmem:[#allocation2 + $0x18] sm:$0xff] %v2185
        %2192 = vst [vmem:[#allocation2 + $0x20] sm:$0xff] %v2186
        %2193 = vst [vmem:[#allocation2 + $0x28] sm:$0xff] %v2187
        %2194 = vrot.lane.b32.xlu0 %v2134, 18
        %v2195 = vpop.permute.xlu0 %2194
        %2196 = vrot.lane.b32.xlu0 %v2137, 18
        %v2197 = vpop.permute.xlu0 %2196
        %2198 = vrot.lane.b32.xlu0 %v2140, 18
        %v2199 = vpop.permute.xlu0 %2198
        %2200 = vrot.lane.b32.xlu0 %v2143, 18
        %v2201 = vpop.permute.xlu0 %2200
        %2202 = vrot.lane.b32.xlu0 %v2135, 18
        %v2203 = vpop.permute.xlu0 %2202
        %2204 = vrot.lane.b32.xlu0 %v2138, 18
        %v2205 = vpop.permute.xlu0 %2204
        %2206 = vrot.lane.b32.xlu0 %v2141, 18
        %v2207 = vpop.permute.xlu0 %2206
        %2208 = vrot.lane.b32.xlu0 %v2144, 18
        %v2209 = vpop.permute.xlu0 %2208
        %2210 = vrot.lane.b32.xlu0 %v2136, 18
        %v2211 = vpop.permute.xlu0 %2210
        %2212 = vrot.lane.b32.xlu0 %v2139, 18
        %v2213 = vpop.permute.xlu0 %2212
        %2214 = vrot.lane.b32.xlu0 %v2142, 18
        %v2215 = vpop.permute.xlu0 %2214
        %2216 = vrot.lane.b32.xlu0 %v2145, 18
        %v2217 = vpop.permute.xlu0 %2216
        %v2218 = vsel %vm718, %v2203, %v2211
        %v2219 = vsel %vm718, %v2205, %v2213
        %v2220 = vsel %vm718, %v2207, %v2215
        %v2221 = vsel %vm718, %v2209, %v2217
        %v2222 = vsel %vm718, %v2195, %v2203
        %v2223 = vsel %vm718, %v2197, %v2205
        %v2224 = vsel %vm718, %v2199, %v2207
        %v2225 = vsel %vm718, %v2201, %v2209
        %v2226 = vsel %vm718, %v2211, %v2195
        %v2227 = vsel %vm718, %v2213, %v2197
        %v2228 = vsel %vm718, %v2215, %v2199
        %v2229 = vsel %vm718, %v2217, %v2201
        %v2230 = vpack.c.bf16 %v2227, %v2226
        %v2231 = vpack.c.bf16 %v2223, %v2222
        %v2232 = vpack.c.bf16 %v2219, %v2218
        %v2233 = vpack.c.bf16 %v2229, %v2228
        %v2234 = vpack.c.bf16 %v2225, %v2224
        %v2235 = vpack.c.bf16 %v2221, %v2220
        %2236 = vst [vmem:[#allocation2 + $0x30] sm:$0xff] %v2230
        %2237 = vst [vmem:[#allocation2 + $0x38] sm:$0xff] %v2231
        %2238 = vst [vmem:[#allocation2 + $0x40] sm:$0xff] %v2232
        %2239 = vst [vmem:[#allocation2 + $0x48] sm:$0xff] %v2233
        %2240 = vst [vmem:[#allocation2 + $0x50] sm:$0xff] %v2234
        %2241 = vst [vmem:[#allocation2 + $0x58] sm:$0xff] %v2235
        %2242 = vrot.lane.b32.xlu0 %v2134, 17
        %v2243 = vpop.permute.xlu0 %2242
        %2244 = vrot.lane.b32.xlu0 %v2137, 17
        %v2245 = vpop.permute.xlu0 %2244
        %2246 = vrot.lane.b32.xlu0 %v2140, 17
        %v2247 = vpop.permute.xlu0 %2246
        %2248 = vrot.lane.b32.xlu0 %v2143, 17
        %v2249 = vpop.permute.xlu0 %2248
        %2250 = vrot.lane.b32.xlu0 %v2135, 17
        %v2251 = vpop.permute.xlu0 %2250
        %2252 = vrot.lane.b32.xlu0 %v2138, 17
        %v2253 = vpop.permute.xlu0 %2252
        %2254 = vrot.lane.b32.xlu0 %v2141, 17
        %v2255 = vpop.permute.xlu0 %2254
        %2256 = vrot.lane.b32.xlu0 %v2144, 17
        %v2257 = vpop.permute.xlu0 %2256
        %2258 = vrot.lane.b32.xlu0 %v2136, 17
        %v2259 = vpop.permute.xlu0 %2258
        %2260 = vrot.lane.b32.xlu0 %v2139, 17
        %v2261 = vpop.permute.xlu0 %2260
        %2262 = vrot.lane.b32.xlu0 %v2142, 17
        %v2263 = vpop.permute.xlu0 %2262
        %2264 = vrot.lane.b32.xlu0 %v2145, 17
        %v2265 = vpop.permute.xlu0 %2264
        %v2266 = vsel %vm992, %v2251, %v2259
        %v2267 = vsel %vm992, %v2253, %v2261
        %v2268 = vsel %vm992, %v2255, %v2263
        %v2269 = vsel %vm992, %v2257, %v2265
        %v2270 = vsel %vm992, %v2243, %v2251
        %v2271 = vsel %vm992, %v2245, %v2253
        %v2272 = vsel %vm992, %v2247, %v2255
        %v2273 = vsel %vm992, %v2249, %v2257
        %v2274 = vsel %vm992, %v2259, %v2243
        %v2275 = vsel %vm992, %v2261, %v2245
        %v2276 = vsel %vm992, %v2263, %v2247
        %v2277 = vsel %vm992, %v2265, %v2249
        %v2278 = vpack.c.bf16 %v2275, %v2274
        %v2279 = vpack.c.bf16 %v2271, %v2270
        %v2280 = vpack.c.bf16 %v2267, %v2266
        %v2281 = vpack.c.bf16 %v2277, %v2276
        %v2282 = vpack.c.bf16 %v2273, %v2272
        %v2283 = vpack.c.bf16 %v2269, %v2268
        %2284 = vst [vmem:[#allocation2 + $0x60] sm:$0xff] %v2278
        %2285 = vst [vmem:[#allocation2 + $0x68] sm:$0xff] %v2279
        %2286 = vst [vmem:[#allocation2 + $0x70] sm:$0xff] %v2280
        %2287 = vst [vmem:[#allocation2 + $0x78] sm:$0xff] %v2281
        %2288 = vst [vmem:[#allocation2 + $0x80] sm:$0xff] %v2282
        %2289 = vst [vmem:[#allocation2 + $0x88] sm:$0xff] %v2283
        %2290 = vrot.lane.b32.xlu0 %v2134, 1
        %v2291 = vpop.permute.xlu0 %2290
        %2292 = vrot.lane.b32.xlu0 %v2137, 1
        %v2293 = vpop.permute.xlu0 %2292
        %2294 = vrot.lane.b32.xlu0 %v2140, 1
        %v2295 = vpop.permute.xlu0 %2294
        %2296 = vrot.lane.b32.xlu0 %v2143, 1
        %v2297 = vpop.permute.xlu0 %2296
        %2298 = vrot.lane.b32.xlu0 %v2135, 1
        %v2299 = vpop.permute.xlu0 %2298
        %2300 = vrot.lane.b32.xlu0 %v2138, 1
        %v2301 = vpop.permute.xlu0 %2300
        %2302 = vrot.lane.b32.xlu0 %v2141, 1
        %v2303 = vpop.permute.xlu0 %2302
        %2304 = vrot.lane.b32.xlu0 %v2144, 1
        %v2305 = vpop.permute.xlu0 %2304
        %2306 = vrot.lane.b32.xlu0 %v2136, 1
        %v2307 = vpop.permute.xlu0 %2306
        %2308 = vrot.lane.b32.xlu0 %v2139, 1
        %v2309 = vpop.permute.xlu0 %2308
        %2310 = vrot.lane.b32.xlu0 %v2142, 1
        %v2311 = vpop.permute.xlu0 %2310
        %2312 = vrot.lane.b32.xlu0 %v2145, 1
        %v2313 = vpop.permute.xlu0 %2312
        %v2314 = vsel %vm1149, %v2299, %v2307
        %v2315 = vsel %vm1149, %v2301, %v2309
        %v2316 = vsel %vm1149, %v2303, %v2311
        %v2317 = vsel %vm1149, %v2305, %v2313
        %v2318 = vsel %vm1149, %v2291, %v2299
        %v2319 = vsel %vm1149, %v2293, %v2301
        %v2320 = vsel %vm1149, %v2295, %v2303
        %v2321 = vsel %vm1149, %v2297, %v2305
        %v2322 = vsel %vm1149, %v2307, %v2291
        %v2323 = vsel %vm1149, %v2309, %v2293
        %v2324 = vsel %vm1149, %v2311, %v2295
        %v2325 = vsel %vm1149, %v2313, %v2297
        %v2326 = vpack.c.bf16 %v2323, %v2322
        %v2327 = vpack.c.bf16 %v2319, %v2318
        %v2328 = vpack.c.bf16 %v2315, %v2314
        %v2329 = vpack.c.bf16 %v2325, %v2324
        %v2330 = vpack.c.bf16 %v2321, %v2320
        %v2331 = vpack.c.bf16 %v2317, %v2316
        %2332 = vst [vmem:[#allocation2 + $0x90] sm:$0xff] %v2326
        %2333 = vst [vmem:[#allocation2 + $0x98] sm:$0xff] %v2327
        %2334 = vst [vmem:[#allocation2 + $0xa0] sm:$0xff] %v2328
        %2335 = vst [vmem:[#allocation2 + $0xa8] sm:$0xff] %v2329
        %2336 = vst [vmem:[#allocation2 + $0xb0] sm:$0xff] %v2330
        %2337 = vst [vmem:[#allocation2 + $0xb8] sm:$0xff] %v2331
        %v2338 = vpack.c.bf16 %v2137, %v2134
        %v2339 = vpack.c.bf16 %v2138, %v2135
        %v2340 = vpack.c.bf16 %v2139, %v2136
        %v2341 = vpack.c.bf16 %v2143, %v2140
        %v2342 = vpack.c.bf16 %v2144, %v2141
        %v2343 = vpack.c.bf16 %v2145, %v2142
        %2344 = vst [vmem:[#allocation2 + $0xc0] sm:$0xff] %v2338
        %2345 = vst [vmem:[#allocation2 + $0xc8] sm:$0xff] %v2339
        %2346 = vst [vmem:[#allocation2 + $0xd0] sm:$0xff] %v2340
        %2347 = vst [vmem:[#allocation2 + $0xd8] sm:$0xff] %v2341
        %2348 = vst [vmem:[#allocation2 + $0xe0] sm:$0xff] %v2342
        %2349 = vst [vmem:[#allocation2 + $0xe8] sm:$0xff] %v2343
        %2350 = vrot.lane.b32.xlu0 %v2134, 127
        %v2351 = vpop.permute.xlu0 %2350
        %2352 = vrot.lane.b32.xlu0 %v2137, 127
        %v2353 = vpop.permute.xlu0 %2352
        %2354 = vrot.lane.b32.xlu0 %v2140, 127
        %v2355 = vpop.permute.xlu0 %2354
        %2356 = vrot.lane.b32.xlu0 %v2143, 127
        %v2357 = vpop.permute.xlu0 %2356
        %2358 = vrot.lane.b32.xlu0 %v2135, 127
        %v2359 = vpop.permute.xlu0 %2358
        %2360 = vrot.lane.b32.xlu0 %v2138, 127
        %v2361 = vpop.permute.xlu0 %2360
        %2362 = vrot.lane.b32.xlu0 %v2141, 127
        %v2363 = vpop.permute.xlu0 %2362
        %2364 = vrot.lane.b32.xlu0 %v2144, 127
        %v2365 = vpop.permute.xlu0 %2364
        %2366 = vrot.lane.b32.xlu0 %v2136, 127
        %v2367 = vpop.permute.xlu0 %2366
        %2368 = vrot.lane.b32.xlu0 %v2139, 127
        %v2369 = vpop.permute.xlu0 %2368
        %2370 = vrot.lane.b32.xlu0 %v2142, 127
        %v2371 = vpop.permute.xlu0 %2370
        %2372 = vrot.lane.b32.xlu0 %v2145, 127
        %v2373 = vpop.permute.xlu0 %2372
        %v2374 = vsel %vm1453, %v2359, %v2367
        %v2375 = vsel %vm1453, %v2361, %v2369
        %v2376 = vsel %vm1453, %v2363, %v2371
        %v2377 = vsel %vm1453, %v2365, %v2373
        %v2378 = vsel %vm1453, %v2351, %v2359
        %v2379 = vsel %vm1453, %v2353, %v2361
        %v2380 = vsel %vm1453, %v2355, %v2363
        %v2381 = vsel %vm1453, %v2357, %v2365
        %v2382 = vsel %vm1453, %v2367, %v2351
        %v2383 = vsel %vm1453, %v2369, %v2353
        %v2384 = vsel %vm1453, %v2371, %v2355
        %v2385 = vsel %vm1453, %v2373, %v2357
        %v2386 = vpack.c.bf16 %v2379, %v2378
        %v2387 = vpack.c.bf16 %v2375, %v2374
        %v2388 = vpack.c.bf16 %v2383, %v2382
        %v2389 = vpack.c.bf16 %v2381, %v2380
        %v2390 = vpack.c.bf16 %v2377, %v2376
        %v2391 = vpack.c.bf16 %v2385, %v2384
        %2392 = vst [vmem:[#allocation2 + $0xf0] sm:$0xff] %v2386
        %2393 = vst [vmem:[#allocation2 + $0xf8] sm:$0xff] %v2387
        %2394 = vst [vmem:[#allocation2 + $0x100] sm:$0xff] %v2388
        %2395 = vst [vmem:[#allocation2 + $0x108] sm:$0xff] %v2389
        %2396 = vst [vmem:[#allocation2 + $0x110] sm:$0xff] %v2390
        %2397 = vst [vmem:[#allocation2 + $0x118] sm:$0xff] %v2391
        %2398 = vrot.lane.b32.xlu0 %v2134, 111
        %v2399 = vpop.permute.xlu0 %2398
        %2400 = vrot.lane.b32.xlu0 %v2137, 111
        %v2401 = vpop.permute.xlu0 %2400
        %2402 = vrot.lane.b32.xlu0 %v2140, 111
        %v2403 = vpop.permute.xlu0 %2402
        %2404 = vrot.lane.b32.xlu0 %v2143, 111
        %v2405 = vpop.permute.xlu0 %2404
        %2406 = vrot.lane.b32.xlu0 %v2135, 111
        %v2407 = vpop.permute.xlu0 %2406
        %2408 = vrot.lane.b32.xlu0 %v2138, 111
        %v2409 = vpop.permute.xlu0 %2408
        %2410 = vrot.lane.b32.xlu0 %v2141, 111
        %v2411 = vpop.permute.xlu0 %2410
        %2412 = vrot.lane.b32.xlu0 %v2144, 111
        %v2413 = vpop.permute.xlu0 %2412
        %2414 = vrot.lane.b32.xlu0 %v2136, 111
        %v2415 = vpop.permute.xlu0 %2414
        %2416 = vrot.lane.b32.xlu0 %v2139, 111
        %v2417 = vpop.permute.xlu0 %2416
        %2418 = vrot.lane.b32.xlu0 %v2142, 111
        %v2419 = vpop.permute.xlu0 %2418
        %2420 = vrot.lane.b32.xlu0 %v2145, 111
        %v2421 = vpop.permute.xlu0 %2420
        %v2422 = vsel %vm1610, %v2407, %v2415
        %v2423 = vsel %vm1610, %v2409, %v2417
        %v2424 = vsel %vm1610, %v2411, %v2419
        %v2425 = vsel %vm1610, %v2413, %v2421
        %v2426 = vsel %vm1610, %v2399, %v2407
        %v2427 = vsel %vm1610, %v2401, %v2409
        %v2428 = vsel %vm1610, %v2403, %v2411
        %v2429 = vsel %vm1610, %v2405, %v2413
        %v2430 = vsel %vm1610, %v2415, %v2399
        %v2431 = vsel %vm1610, %v2417, %v2401
        %v2432 = vsel %vm1610, %v2419, %v2403
        %v2433 = vsel %vm1610, %v2421, %v2405
        %v2434 = vpack.c.bf16 %v2427, %v2426
        %v2435 = vpack.c.bf16 %v2423, %v2422
        %v2436 = vpack.c.bf16 %v2431, %v2430
        %v2437 = vpack.c.bf16 %v2429, %v2428
        %v2438 = vpack.c.bf16 %v2425, %v2424
        %v2439 = vpack.c.bf16 %v2433, %v2432
        %2440 = vst [vmem:[#allocation2 + $0x120] sm:$0xff] %v2434
        %2441 = vst [vmem:[#allocation2 + $0x128] sm:$0xff] %v2435
        %2442 = vst [vmem:[#allocation2 + $0x130] sm:$0xff] %v2436
        %2443 = vst [vmem:[#allocation2 + $0x138] sm:$0xff] %v2437
        %2444 = vst [vmem:[#allocation2 + $0x140] sm:$0xff] %v2438
        %2445 = vst [vmem:[#allocation2 + $0x148] sm:$0xff] %v2439
        %2446 = vrot.lane.b32.xlu0 %v2134, 110
        %v2447 = vpop.permute.xlu0 %2446
        %2448 = vrot.lane.b32.xlu0 %v2137, 110
        %v2449 = vpop.permute.xlu0 %2448
        %2450 = vrot.lane.b32.xlu0 %v2140, 110
        %v2451 = vpop.permute.xlu0 %2450
        %2452 = vrot.lane.b32.xlu0 %v2143, 110
        %v2453 = vpop.permute.xlu0 %2452
        %2454 = vrot.lane.b32.xlu0 %v2135, 110
        %v2455 = vpop.permute.xlu0 %2454
        %2456 = vrot.lane.b32.xlu0 %v2138, 110
        %v2457 = vpop.permute.xlu0 %2456
        %2458 = vrot.lane.b32.xlu0 %v2141, 110
        %v2459 = vpop.permute.xlu0 %2458
        %2460 = vrot.lane.b32.xlu0 %v2144, 110
        %v2461 = vpop.permute.xlu0 %2460
        %2462 = vrot.lane.b32.xlu0 %v2136, 110
        %v2463 = vpop.permute.xlu0 %2462
        %2464 = vrot.lane.b32.xlu0 %v2139, 110
        %v2465 = vpop.permute.xlu0 %2464
        %2466 = vrot.lane.b32.xlu0 %v2142, 110
        %v2467 = vpop.permute.xlu0 %2466
        %2468 = vrot.lane.b32.xlu0 %v2145, 110
        %v2469 = vpop.permute.xlu0 %2468
        %v2470 = vsel %vm1767, %v2455, %v2463
        %v2471 = vsel %vm1767, %v2457, %v2465
        %v2472 = vsel %vm1767, %v2459, %v2467
        %v2473 = vsel %vm1767, %v2461, %v2469
        %v2474 = vsel %vm1767, %v2447, %v2455
        %v2475 = vsel %vm1767, %v2449, %v2457
        %v2476 = vsel %vm1767, %v2451, %v2459
        %v2477 = vsel %vm1767, %v2453, %v2461
        %v2478 = vsel %vm1767, %v2463, %v2447
        %v2479 = vsel %vm1767, %v2465, %v2449
        %v2480 = vsel %vm1767, %v2467, %v2451
        %v2481 = vsel %vm1767, %v2469, %v2453
        %v2482 = vpack.c.bf16 %v2475, %v2474
        %v2483 = vpack.c.bf16 %v2471, %v2470
        %v2484 = vpack.c.bf16 %v2479, %v2478
        %v2485 = vpack.c.bf16 %v2477, %v2476
        %v2486 = vpack.c.bf16 %v2473, %v2472
        %v2487 = vpack.c.bf16 %v2481, %v2480
        %2488 = vst [vmem:[#allocation2 + $0x150] sm:$0xff] %v2482
        %2489 = vst [vmem:[#allocation2 + $0x158] sm:$0xff] %v2483
        %2490 = vst [vmem:[#allocation2 + $0x160] sm:$0xff] %v2484
        %2491 = vst [vmem:[#allocation2 + $0x168] sm:$0xff] %v2485
        %2492 = vst [vmem:[#allocation2 + $0x170] sm:$0xff] %v2486
        %2493 = vst [vmem:[#allocation2 + $0x178] sm:$0xff] %v2487
        %2494 = vrot.lane.b32.xlu0 %v2134, 109
        %v2495 = vpop.permute.xlu0 %2494
        %2496 = vrot.lane.b32.xlu0 %v2137, 109
        %v2497 = vpop.permute.xlu0 %2496
        %2498 = vrot.lane.b32.xlu0 %v2140, 109
        %v2499 = vpop.permute.xlu0 %2498
        %2500 = vrot.lane.b32.xlu0 %v2143, 109
        %v2501 = vpop.permute.xlu0 %2500
        %2502 = vrot.lane.b32.xlu0 %v2135, 109
        %v2503 = vpop.permute.xlu0 %2502
        %2504 = vrot.lane.b32.xlu0 %v2138, 109
        %v2505 = vpop.permute.xlu0 %2504
        %2506 = vrot.lane.b32.xlu0 %v2141, 109
        %v2507 = vpop.permute.xlu0 %2506
        %2508 = vrot.lane.b32.xlu0 %v2144, 109
        %v2509 = vpop.permute.xlu0 %2508
        %2510 = vrot.lane.b32.xlu0 %v2136, 109
        %v2511 = vpop.permute.xlu0 %2510
        %2512 = vrot.lane.b32.xlu0 %v2139, 109
        %v2513 = vpop.permute.xlu0 %2512
        %2514 = vrot.lane.b32.xlu0 %v2142, 109
        %v2515 = vpop.permute.xlu0 %2514
        %2516 = vrot.lane.b32.xlu0 %v2145, 109
        %v2517 = vpop.permute.xlu0 %2516
        %v2518 = vsel %vm1924, %v2503, %v2511
        %v2519 = vsel %vm1924, %v2505, %v2513
        %v2520 = vsel %vm1924, %v2507, %v2515
        %v2521 = vsel %vm1924, %v2509, %v2517
        %v2522 = vsel %vm1924, %v2495, %v2503
        %v2523 = vsel %vm1924, %v2497, %v2505
        %v2524 = vsel %vm1924, %v2499, %v2507
        %v2525 = vsel %vm1924, %v2501, %v2509
        %v2526 = vsel %vm1924, %v2511, %v2495
        %v2527 = vsel %vm1924, %v2513, %v2497
        %v2528 = vsel %vm1924, %v2515, %v2499
        %v2529 = vsel %vm1924, %v2517, %v2501
        %v2530 = vpack.c.bf16 %v2523, %v2522
        %v2531 = vpack.c.bf16 %v2519, %v2518
        %v2532 = vpack.c.bf16 %v2527, %v2526
        %v2533 = vpack.c.bf16 %v2525, %v2524
        %v2534 = vpack.c.bf16 %v2521, %v2520
        %v2535 = vpack.c.bf16 %v2529, %v2528
        %2536 = vst [vmem:[#allocation2 + $0x180] sm:$0xff] %v2530
        %2537 = vst [vmem:[#allocation2 + $0x188] sm:$0xff] %v2531
        %2538 = vst [vmem:[#allocation2 + $0x190] sm:$0xff] %v2532
        %2539 = vst [vmem:[#allocation2 + $0x198] sm:$0xff] %v2533
        %2540 = vst [vmem:[#allocation2 + $0x1a0] sm:$0xff] %v2534
        %2541 = vst [vmem:[#allocation2 + $0x1a8] sm:$0xff] %v2535
        %v2542 = vld [vmem:[%s4] sm:$0xff]
        %v2543 = vld [vmem:[%s4 + $0x8] sm:$0xf]
        %v2544 = vld [vmem:[%s4 + $0xc] sm:$0xff]
        %v2545 = vld [vmem:[%s4 + $0x14] sm:$0xf]
        %v2546 = vld [vmem:[%s4 + $0x18] sm:$0xff]
        %v2547 = vld [vmem:[%s4 + $0x20] sm:$0xf]
        %v2548 = vld [vmem:[%s4 + $0x24] sm:$0xff]
        %v2549 = vld [vmem:[%s4 + $0x2c] sm:$0xf]
        %v2550 = vld [vmem:[#allocation2] sm:$0xff]
        %v2551 = vld [vmem:[#allocation2 + $0x8] sm:$0xff]
        %v2552 = vld [vmem:[#allocation2 + $0x10] sm:$0xff]
        %v2553 = vld [vmem:[#allocation2 + $0x18] sm:$0xff]
        %v2554 = vld [vmem:[#allocation2 + $0x20] sm:$0xff]
        %v2555 = vld [vmem:[#allocation2 + $0x28] sm:$0xff]
        %v2556 = vld [vmem:[#allocation2 + $0x30] sm:$0xff]
        %v2557 = vld [vmem:[#allocation2 + $0x38] sm:$0xff]
        %v2558 = vld [vmem:[#allocation2 + $0x40] sm:$0xff]
        %v2559 = vld [vmem:[#allocation2 + $0x48] sm:$0xff]
        %v2560 = vld [vmem:[#allocation2 + $0x50] sm:$0xff]
        %v2561 = vld [vmem:[#allocation2 + $0x58] sm:$0xff]
        %v2562 = vld [vmem:[#allocation2 + $0x60] sm:$0xff]
        %v2563 = vld [vmem:[#allocation2 + $0x68] sm:$0xff]
        %v2564 = vld [vmem:[#allocation2 + $0x70] sm:$0xff]
        %v2565 = vld [vmem:[#allocation2 + $0x78] sm:$0xff]
        %v2566 = vld [vmem:[#allocation2 + $0x80] sm:$0xff]
        %v2567 = vld [vmem:[#allocation2 + $0x88] sm:$0xff]
        %v2568 = vld [vmem:[#allocation2 + $0x90] sm:$0xff]
        %v2569 = vld [vmem:[#allocation2 + $0x98] sm:$0xff]
        %v2570 = vld [vmem:[#allocation2 + $0xa0] sm:$0xff]
        %v2571 = vld [vmem:[#allocation2 + $0xa8] sm:$0xff]
        %v2572 = vld [vmem:[#allocation2 + $0xb0] sm:$0xff]
        %v2573 = vld [vmem:[#allocation2 + $0xb8] sm:$0xff]
        %v2574 = vld [vmem:[#allocation2 + $0xc0] sm:$0xff]
        %v2575 = vld [vmem:[#allocation2 + $0xc8] sm:$0xff]
        %v2576 = vld [vmem:[#allocation2 + $0xd0] sm:$0xff]
        %v2577 = vld [vmem:[#allocation2 + $0xd8] sm:$0xff]
        %v2578 = vld [vmem:[#allocation2 + $0xe0] sm:$0xff]
        %v2579 = vld [vmem:[#allocation2 + $0xe8] sm:$0xff]
        %v2580 = vld [vmem:[#allocation2 + $0xf0] sm:$0xff]
        %v2581 = vld [vmem:[#allocation2 + $0xf8] sm:$0xff]
        %v2582 = vld [vmem:[#allocation2 + $0x100] sm:$0xff]
        %v2583 = vld [vmem:[#allocation2 + $0x108] sm:$0xff]
        %v2584 = vld [vmem:[#allocation2 + $0x110] sm:$0xff]
        %v2585 = vld [vmem:[#allocation2 + $0x118] sm:$0xff]
        %v2586 = vld [vmem:[#allocation2 + $0x120] sm:$0xff]
        %v2587 = vld [vmem:[#allocation2 + $0x128] sm:$0xff]
        %v2588 = vld [vmem:[#allocation2 + $0x130] sm:$0xff]
        %v2589 = vld [vmem:[#allocation2 + $0x138] sm:$0xff]
        %v2590 = vld [vmem:[#allocation2 + $0x140] sm:$0xff]
        %v2591 = vld [vmem:[#allocation2 + $0x148] sm:$0xff]
        %v2592 = vld [vmem:[#allocation2 + $0x150] sm:$0xff]
        %v2593 = vld [vmem:[#allocation2 + $0x158] sm:$0xff]
        %v2594 = vld [vmem:[#allocation2 + $0x160] sm:$0xff]
        %v2595 = vld [vmem:[#allocation2 + $0x168] sm:$0xff]
        %v2596 = vld [vmem:[#allocation2 + $0x170] sm:$0xff]
        %v2597 = vld [vmem:[#allocation2 + $0x178] sm:$0xff]
        %v2598 = vld [vmem:[#allocation2 + $0x180] sm:$0xff]
        %v2599 = vld [vmem:[#allocation2 + $0x188] sm:$0xff]
        %v2600 = vld [vmem:[#allocation2 + $0x190] sm:$0xff]
        %v2601 = vld [vmem:[#allocation2 + $0x198] sm:$0xff]
        %v2602 = vld [vmem:[#allocation2 + $0x1a0] sm:$0xff]
        %v2603 = vld [vmem:[#allocation2 + $0x1a8] sm:$0xff]
        %v2604 = vld [vmem:[%s5] sm:$0xff]
        %v2605 = vld [vmem:[%s5 + $0x8] sm:$0xff]
        %v2606 = vld [vmem:[%s5 + $0x10] sm:$0xff]
        %v2607 = vld [vmem:[%s5 + $0x18] sm:$0xff]
        %2609 = vset.pattern.permute.xlu0 0
        %2610 = vperm.xlu0 %2609, %v2604
        %v2611 = vpop.permute.xlu0 %2610
        %2614 = vset.pattern.permute.xlu0 0
        %2615 = vperm.xlu0 %2614, %v2605
        %v2616 = vpop.permute.xlu0 %2615
        %2619 = vset.pattern.permute.xlu0 0
        %2620 = vperm.xlu0 %2619, %v2606
        %v2621 = vpop.permute.xlu0 %2620
        %2624 = vset.pattern.permute.xlu0 0
        %2625 = vperm.xlu0 %2624, %v2607
        %v2626 = vpop.permute.xlu0 %2625
        %v2636 = vunpack.c.l.b16 %v2542
        %v2637 = vunpack.c.h.b16 %v2542
        %v2638 = vunpack.c.l.b16 %v2543
        %v2639 = vunpack.c.l.b16 %v2544
        %v2640 = vunpack.c.h.b16 %v2544
        %v2641 = vunpack.c.l.b16 %v2545
        %v2642 = vunpack.c.l.b16 %v2546
        %v2643 = vunpack.c.h.b16 %v2546
        %v2644 = vunpack.c.l.b16 %v2547
        %v2645 = vunpack.c.l.b16 %v2548
        %v2646 = vunpack.c.h.b16 %v2548
        %v2647 = vunpack.c.l.b16 %v2549
        %v2648 = vpack.c.b16 %v2639, %v2636
        %v2649 = vpack.c.b16 %v2640, %v2637
        %v2650 = vpack.c.b16 %v2641, %v2638
        %v2651 = vpack.c.b16 %v2645, %v2642
        %v2652 = vpack.c.b16 %v2646, %v2643
        %v2653 = vpack.c.b16 %v2647, %v2644
        %vm2658 = vcmask 261120
        %v2660 = vsel %vm2658, %v2650, 0
        %v2663 = vsel %vm2658, %v2653, 0
        %2665 = vmatprep.subr.bf16.mxu0 %v2551
        %2666 = vmatpush1.bf16.msra.mxu0 %v2550
        %2667 = vmatprep.subr.bf16.mxu0 %v2554
        %2668 = vmatpush1.bf16.msra.mxu0 %v2553
        %2669 = vmatprep.subr.bf16.mxu0 %v2557
        %2670 = vmatpush1.bf16.msra.mxu0 %v2556
        %2671 = vmatprep.subr.bf16.mxu0 %v2560
        %2672 = vmatpush1.bf16.msra.mxu0 %v2559
        %2673 = vmatprep.subr.bf16.mxu0 %v2563
        %2674 = vmatpush1.bf16.msra.mxu0 %v2562
        %2675 = vmatprep.subr.bf16.mxu0 %v2566
        %2676 = vmatpush1.bf16.msra.mxu0 %v2565
        %2677 = vmatprep.subr.bf16.mxu0 %v2569
        %2678 = vmatpush1.bf16.msra.mxu0 %v2568
        %2679 = vmatprep.subr.bf16.mxu0 %v2572
        %2680 = vmatpush1.bf16.msra.mxu0 %v2571
        %2681 = vmatprep.subr.bf16.mxu0 %v2575
        %2682 = vmatpush1.bf16.msra.mxu0 %v2574
        %2683 = vmatprep.subr.bf16.mxu0 %v2578
        %2684 = vmatpush1.bf16.msra.mxu0 %v2577
        %2685 = vmatprep.subr.bf16.mxu0 %v2581
        %2686 = vmatpush1.bf16.msra.mxu0 %v2580
        %2687 = vmatprep.subr.bf16.mxu0 %v2584
        %2688 = vmatpush1.bf16.msra.mxu0 %v2583
        %2689 = vmatprep.subr.bf16.mxu0 %v2587
        %2690 = vmatpush1.bf16.msra.mxu0 %v2586
        %2691 = vmatprep.subr.bf16.mxu0 %v2590
        %2692 = vmatpush1.bf16.msra.mxu0 %v2589
        %2693 = vmatprep.subr.bf16.mxu0 %v2593
        %2694 = vmatpush1.bf16.msra.mxu0 %v2592
        %2695 = vmatprep.subr.bf16.mxu0 %v2596
        %2696 = vmatpush1.bf16.msra.mxu0 %v2595
        %2697 = vmatprep.mubr.bf16.mxu0 %v2649
        %2698 = vmatmul.mubr.bf16.gmra.mrb[0].mxu0 %v2648
        %v2699 = vpop.f32.mrb[0].mxu0
        %v2700 = vadd.f32 %v2611, %v2699
        %v2701 = vpop.f32.mrb[0].mxu0
        %v2702 = vadd.f32 %v2611, %v2701
        %v2703 = vpop.f32.mrb[0].mxu0
        %v2704 = vadd.f32 %v2616, %v2703
        %v2705 = vpop.f32.mrb[0].mxu0
        %v2706 = vadd.f32 %v2616, %v2705
        %2707 = vmatprep.mubr.bf16.mxu0 %v2652
        %2708 = vmatmul.mubr.bf16.gmra.mrb[0].mxu0 %v2651
        %v2709 = vpop.f32.mrb[0].mxu0
        %v2710 = vadd.f32 %v2621, %v2709
        %v2711 = vpop.f32.mrb[0].mxu0
        %v2712 = vadd.f32 %v2621, %v2711
        %v2713 = vpop.f32.mrb[0].mxu0
        %v2714 = vadd.f32 %v2626, %v2713
        %v2715 = vpop.f32.mrb[0].mxu0
        %v2716 = vadd.f32 %v2626, %v2715
        %2717 = vdwg.mxu0
        %2718 = vmatprep.subr.bf16.mxu0 %v2599
        %2719 = vmatpush1.bf16.msra.mxu0 %v2598
        %2720 = vmatprep.subr.bf16.mxu0 %v2602
        %2721 = vmatpush1.bf16.msra.mxu0 %v2601
        %2722 = vmatprep.subr.bf16.mxu0 0
        %2723 = vmatpush1.bf16.msra.mxu0 0
        %2724 = vmatprep.subr.bf16.mxu0 0
        %2725 = vmatpush1.bf16.msra.mxu0 0
        %2726 = vmatprep.subr.bf16.mxu0 0
        %2727 = vmatpush1.bf16.msra.mxu0 0
        %2728 = vmatprep.subr.bf16.mxu0 0
        %2729 = vmatpush1.bf16.msra.mxu0 0
        %2730 = vmatprep.subr.bf16.mxu0 0
        %2731 = vmatpush1.bf16.msra.mxu0 0
        %2732 = vmatprep.subr.bf16.mxu0 0
        %2733 = vmatpush1.bf16.msra.mxu0 0
        %2734 = vmatprep.subr.bf16.mxu0 0
        %2735 = vmatpush1.bf16.msra.mxu0 0
        %2736 = vmatprep.subr.bf16.mxu0 0
        %2737 = vmatpush1.bf16.msra.mxu0 0
        %2738 = vmatprep.subr.bf16.mxu0 0
        %2739 = vmatpush1.bf16.msra.mxu0 0
        %2740 = vmatprep.subr.bf16.mxu0 0
        %2741 = vmatpush1.bf16.msra.mxu0 0
        %2742 = vmatprep.subr.bf16.mxu0 0
        %2743 = vmatpush1.bf16.msra.mxu0 0
        %2744 = vmatprep.subr.bf16.mxu0 0
        %2745 = vmatpush1.bf16.msra.mxu0 0
        %2746 = vmatprep.subr.bf16.mxu0 0
        %2747 = vmatpush1.bf16.msra.mxu0 0
        %2748 = vmatprep.subr.bf16.mxu0 0
        %2749 = vmatpush1.bf16.msra.mxu0 0
        %2750 = vmatprep.mubr.bf16.mxu0 0
        %2751 = vmatmul.mubr.bf16.gmra.mrb[0].mxu0 %v2660
        %v2752 = vpop.f32.mrb[0].mxu0
        %v2753 = vadd.f32 %v2700, %v2752
        %v2754 = vpop.f32.mrb[0].mxu0
        %v2755 = vadd.f32 %v2702, %v2754
        %v2756 = vpop.f32.mrb[0].mxu0
        %v2757 = vadd.f32 %v2704, %v2756
        %v2758 = vpop.f32.mrb[0].mxu0
        %v2759 = vadd.f32 %v2706, %v2758
        %2760 = vmatprep.mubr.bf16.mxu0 0
        %2761 = vmatmul.mubr.bf16.gmra.mrb[0].mxu0 %v2663
        %v2762 = vpop.f32.mrb[0].mxu0
        %v2763 = vadd.f32 %v2710, %v2762
        %v2764 = vpop.f32.mrb[0].mxu0
        %v2765 = vadd.f32 %v2712, %v2764
        %v2766 = vpop.f32.mrb[0].mxu0
        %v2767 = vadd.f32 %v2714, %v2766
        %v2768 = vpop.f32.mrb[0].mxu0
        %v2769 = vadd.f32 %v2716, %v2768
        %2770 = vdwg.mxu0
        %2771 = vmatprep.subr.bf16.mxu0 0
        %2772 = vmatpush1.bf16.msra.mxu0 %v2552
        %2773 = vmatprep.subr.bf16.mxu0 0
        %2774 = vmatpush1.bf16.msra.mxu0 %v2555
        %2775 = vmatprep.subr.bf16.mxu0 0
        %2776 = vmatpush1.bf16.msra.mxu0 %v2558
        %2777 = vmatprep.subr.bf16.mxu0 0
        %2778 = vmatpush1.bf16.msra.mxu0 %v2561
        %2779 = vmatprep.subr.bf16.mxu0 0
        %2780 = vmatpush1.bf16.msra.mxu0 %v2564
        %2781 = vmatprep.subr.bf16.mxu0 0
        %2782 = vmatpush1.bf16.msra.mxu0 %v2567
        %2783 = vmatprep.subr.bf16.mxu0 0
        %2784 = vmatpush1.bf16.msra.mxu0 %v2570
        %2785 = vmatprep.subr.bf16.mxu0 0
        %2786 = vmatpush1.bf16.msra.mxu0 %v2573
        %2787 = vmatprep.subr.bf16.mxu0 0
        %2788 = vmatpush1.bf16.msra.mxu0 %v2576
        %2789 = vmatprep.subr.bf16.mxu0 0
        %2790 = vmatpush1.bf16.msra.mxu0 %v2579
        %2791 = vmatprep.subr.bf16.mxu0 0
        %2792 = vmatpush1.bf16.msra.mxu0 %v2582
        %2793 = vmatprep.subr.bf16.mxu0 0
        %2794 = vmatpush1.bf16.msra.mxu0 %v2585
        %2795 = vmatprep.subr.bf16.mxu0 0
        %2796 = vmatpush1.bf16.msra.mxu0 %v2588
        %2797 = vmatprep.subr.bf16.mxu0 0
        %2798 = vmatpush1.bf16.msra.mxu0 %v2591
        %2799 = vmatprep.subr.bf16.mxu0 0
        %2800 = vmatpush1.bf16.msra.mxu0 %v2594
        %2801 = vmatprep.subr.bf16.mxu0 0
        %2802 = vmatpush1.bf16.msra.mxu0 %v2597
        %2803 = vmatprep.mubr.bf16.mxu0 %v2649
        %2804 = vmatmul.mubr.bf16.gmra.mrb[0].mxu0 %v2648
        %v2805 = vpop.f32.mrb[0].mxu0
        %v2806 = vadd.f32 %v2611, %v2805
        %v2807 = vpop.f32.mrb[0].mxu0
        %v2808 = vpop.f32.mrb[0].mxu0
        %v2809 = vadd.f32 %v2616, %v2808
        %v2810 = vpop.f32.mrb[0].mxu0
        %2811 = vmatprep.mubr.bf16.mxu0 %v2652
        %2812 = vmatmul.mubr.bf16.gmra.mrb[0].mxu0 %v2651
        %v2813 = vpop.f32.mrb[0].mxu0
        %v2814 = vadd.f32 %v2621, %v2813
        %v2815 = vpop.f32.mrb[0].mxu0
        %v2816 = vpop.f32.mrb[0].mxu0
        %v2817 = vadd.f32 %v2626, %v2816
        %v2818 = vpop.f32.mrb[0].mxu0
        %2819 = vdwg.mxu0
        %2820 = vmatprep.subr.bf16.mxu0 0
        %2821 = vmatpush1.bf16.msra.mxu0 %v2600
        %2822 = vmatprep.subr.bf16.mxu0 0
        %2823 = vmatpush1.bf16.msra.mxu0 %v2603
        %2824 = vmatprep.subr.bf16.mxu0 0
        %2825 = vmatpush1.bf16.msra.mxu0 0
        %2826 = vmatprep.subr.bf16.mxu0 0
        %2827 = vmatpush1.bf16.msra.mxu0 0
        %2828 = vmatprep.subr.bf16.mxu0 0
        %2829 = vmatpush1.bf16.msra.mxu0 0
        %2830 = vmatprep.subr.bf16.mxu0 0
        %2831 = vmatpush1.bf16.msra.mxu0 0
        %2832 = vmatprep.subr.bf16.mxu0 0
        %2833 = vmatpush1.bf16.msra.mxu0 0
        %2834 = vmatprep.subr.bf16.mxu0 0
        %2835 = vmatpush1.bf16.msra.mxu0 0
        %2836 = vmatprep.subr.bf16.mxu0 0
        %2837 = vmatpush1.bf16.msra.mxu0 0
        %2838 = vmatprep.subr.bf16.mxu0 0
        %2839 = vmatpush1.bf16.msra.mxu0 0
        %2840 = vmatprep.subr.bf16.mxu0 0
        %2841 = vmatpush1.bf16.msra.mxu0 0
        %2842 = vmatprep.subr.bf16.mxu0 0
        %2843 = vmatpush1.bf16.msra.mxu0 0
        %2844 = vmatprep.subr.bf16.mxu0 0
        %2845 = vmatpush1.bf16.msra.mxu0 0
        %2846 = vmatprep.subr.bf16.mxu0 0
        %2847 = vmatpush1.bf16.msra.mxu0 0
        %2848 = vmatprep.subr.bf16.mxu0 0
        %2849 = vmatpush1.bf16.msra.mxu0 0
        %2850 = vmatprep.subr.bf16.mxu0 0
        %2851 = vmatpush1.bf16.msra.mxu0 0
        %2852 = vmatprep.mubr.bf16.mxu0 0
        %2853 = vmatmul.mubr.bf16.gmra.mrb[0].mxu0 %v2660
        %v2854 = vpop.f32.mrb[0].mxu0
        %v2855 = vadd.f32 %v2806, %v2854
        %v2856 = vpop.f32.mrb[0].mxu0
        %v2857 = vpop.f32.mrb[0].mxu0
        %v2858 = vadd.f32 %v2809, %v2857
        %v2859 = vpop.f32.mrb[0].mxu0
        %2860 = vmatprep.mubr.bf16.mxu0 0
        %2861 = vmatmul.mubr.bf16.gmra.mrb[0].mxu0 %v2663
        %v2862 = vpop.f32.mrb[0].mxu0
        %v2863 = vadd.f32 %v2814, %v2862
        %v2864 = vpop.f32.mrb[0].mxu0
        %v2865 = vpop.f32.mrb[0].mxu0
        %v2866 = vadd.f32 %v2817, %v2865
        %v2867 = vpop.f32.mrb[0].mxu0
        %2868 = vdwg.mxu0
        %v2869 = vmax.f32 %v2753, 0.0
        %v2870 = vmax.f32 %v2755, 0.0
        %v2871 = vmax.f32 %v2855, 0.0
        %v2872 = vmax.f32 %v2757, 0.0
        %v2873 = vmax.f32 %v2759, 0.0
        %v2874 = vmax.f32 %v2858, 0.0
        %v2875 = vmax.f32 %v2763, 0.0
        %v2876 = vmax.f32 %v2765, 0.0
        %v2877 = vmax.f32 %v2863, 0.0
        %v2878 = vmax.f32 %v2767, 0.0
        %v2879 = vmax.f32 %v2769, 0.0
        %v2880 = vmax.f32 %v2866, 0.0
        %v2881 = vmul.f32 %v2869, %v2122
        %v2882 = vmul.f32 %v2870, %v2126
        %v2883 = vmul.f32 %v2871, %v2130
        %v2884 = vmul.f32 %v2872, %v2122
        %v2885 = vmul.f32 %v2873, %v2126
        %v2886 = vmul.f32 %v2874, %v2130
        %v2887 = vmul.f32 %v2875, %v2122
        %v2888 = vmul.f32 %v2876, %v2126
        %v2889 = vmul.f32 %v2877, %v2130
        %v2890 = vmul.f32 %v2878, %v2122
        %v2891 = vmul.f32 %v2879, %v2126
        %v2892 = vmul.f32 %v2880, %v2130
        %v2893 = vld [vmem:[%s6] sm:$0xf]
        %v2894 = vld [vmem:[%s6 + $0x4] sm:$0xf]
        %v2895 = vpack.c.bf16 %v2884, %v2881
        %v2896 = vpack.c.bf16 %v2885, %v2882
        %v2897 = vpack.c.bf16 %v2886, %v2883
        %v2898 = vpack.c.bf16 %v2890, %v2887
        %v2899 = vpack.c.bf16 %v2891, %v2888
        %v2900 = vpack.c.bf16 %v2892, %v2889
        %v2901 = vld [vmem:[%s7] sm:$0xff]
        %v2902 = vld [vmem:[%s7 + $0x8] sm:$0xff]
        %2904 = vset.pattern.permute.xlu0 0
        %2905 = vperm.xlu0 %2904, %v2901
        %v2906 = vpop.permute.xlu0 %2905
        %2909 = vset.pattern.permute.xlu0 0
        %2910 = vperm.xlu0 %2909, %v2902
        %v2911 = vpop.permute.xlu0 %2910
        %v2915 = vunpack.c.l.b16 %v2893
        %v2916 = vunpack.c.l.b16 %v2894
        %v2917 = vpack.c.b16 %v2916, %v2915
        %v2919 = vsel %vm2658, %v2917, 0
        %2921 = vmatprep.subr.bf16.mxu0 %v2896
        %2922 = vmatpush1.bf16.msra.mxu0 %v2895
        %2923 = vmatprep.subr.bf16.mxu0 %v2899
        %2924 = vmatpush1.bf16.msra.mxu0 %v2898
        %2925 = vmatprep.subr.bf16.mxu0 0
        %2926 = vmatpush1.bf16.msra.mxu0 0
        %2927 = vmatprep.subr.bf16.mxu0 0
        %2928 = vmatpush1.bf16.msra.mxu0 0
        %2929 = vmatprep.subr.bf16.mxu0 0
        %2930 = vmatpush1.bf16.msra.mxu0 0
        %2931 = vmatprep.subr.bf16.mxu0 0
        %2932 = vmatpush1.bf16.msra.mxu0 0
        %2933 = vmatprep.subr.bf16.mxu0 0
        %2934 = vmatpush1.bf16.msra.mxu0 0
        %2935 = vmatprep.subr.bf16.mxu0 0
        %2936 = vmatpush1.bf16.msra.mxu0 0
        %2937 = vmatprep.subr.bf16.mxu0 0
        %2938 = vmatpush1.bf16.msra.mxu0 0
        %2939 = vmatprep.subr.bf16.mxu0 0
        %2940 = vmatpush1.bf16.msra.mxu0 0
        %2941 = vmatprep.subr.bf16.mxu0 0
        %2942 = vmatpush1.bf16.msra.mxu0 0
        %2943 = vmatprep.subr.bf16.mxu0 0
        %2944 = vmatpush1.bf16.msra.mxu0 0
        %2945 = vmatprep.subr.bf16.mxu0 0
        %2946 = vmatpush1.bf16.msra.mxu0 0
        %2947 = vmatprep.subr.bf16.mxu0 0
        %2948 = vmatpush1.bf16.msra.mxu0 0
        %2949 = vmatprep.subr.bf16.mxu0 0
        %2950 = vmatpush1.bf16.msra.mxu0 0
        %2951 = vmatprep.subr.bf16.mxu0 0
        %2952 = vmatpush1.bf16.msra.mxu0 0
        %2953 = vmatprep.mubr.bf16.mxu0 0
        %2954 = vmatmul.mubr.bf16.gmra.mrb[0].mxu0 %v2919
        %v2955 = vpop.f32.mrb[0].mxu0
        %v2956 = vadd.f32 %v2906, %v2955
        %v2957 = vpop.f32.mrb[0].mxu0
        %v2958 = vadd.f32 %v2906, %v2957
        %v2959 = vpop.f32.mrb[0].mxu0
        %v2960 = vadd.f32 %v2911, %v2959
        %v2961 = vpop.f32.mrb[0].mxu0
        %v2962 = vadd.f32 %v2911, %v2961
        %2963 = vdwg.mxu0
        %2964 = vmatprep.subr.bf16.mxu0 0
        %2965 = vmatpush1.bf16.msra.mxu0 %v2897
        %2966 = vmatprep.subr.bf16.mxu0 0
        %2967 = vmatpush1.bf16.msra.mxu0 %v2900
        %2968 = vmatprep.subr.bf16.mxu0 0
        %2969 = vmatpush1.bf16.msra.mxu0 0
        %2970 = vmatprep.subr.bf16.mxu0 0
        %2971 = vmatpush1.bf16.msra.mxu0 0
        %2972 = vmatprep.subr.bf16.mxu0 0
        %2973 = vmatpush1.bf16.msra.mxu0 0
        %2974 = vmatprep.subr.bf16.mxu0 0
        %2975 = vmatpush1.bf16.msra.mxu0 0
        %2976 = vmatprep.subr.bf16.mxu0 0
        %2977 = vmatpush1.bf16.msra.mxu0 0
        %2978 = vmatprep.subr.bf16.mxu0 0
        %2979 = vmatpush1.bf16.msra.mxu0 0
        %2980 = vmatprep.subr.bf16.mxu0 0
        %2981 = vmatpush1.bf16.msra.mxu0 0
        %2982 = vmatprep.subr.bf16.mxu0 0
        %2983 = vmatpush1.bf16.msra.mxu0 0
        %2984 = vmatprep.subr.bf16.mxu0 0
        %2985 = vmatpush1.bf16.msra.mxu0 0
        %2986 = vmatprep.subr.bf16.mxu0 0
        %2987 = vmatpush1.bf16.msra.mxu0 0
        %2988 = vmatprep.subr.bf16.mxu0 0
        %2989 = vmatpush1.bf16.msra.mxu0 0
        %2990 = vmatprep.subr.bf16.mxu0 0
        %2991 = vmatpush1.bf16.msra.mxu0 0
        %2992 = vmatprep.subr.bf16.mxu0 0
        %2993 = vmatpush1.bf16.msra.mxu0 0
        %2994 = vmatprep.subr.bf16.mxu0 0
        %2995 = vmatpush1.bf16.msra.mxu0 0
        %2996 = vmatprep.mubr.bf16.mxu0 0
        %2997 = vmatmul.mubr.bf16.gmra.mrb[0].mxu0 %v2919
        %v2998 = vpop.f32.mrb[0].mxu0
        %v2999 = vadd.f32 %v2906, %v2998
        %v3000 = vpop.f32.mrb[0].mxu0
        %v3001 = vpop.f32.mrb[0].mxu0
        %v3002 = vadd.f32 %v2911, %v3001
        %v3003 = vpop.f32.mrb[0].mxu0
        %3004 = vdwg.mxu0
        %3005 = vst [vmem:[%s620] sm:$0xff] %v2956
        %3006 = vst [vmem:[%s620 + $0x8] sm:$0xff] %v2958
        %3007 = vst [vmem:[%s620 + $0x10] sm:$0xff] %v2999
        %3008 = vst [vmem:[%s620 + $0x18] sm:$0xff] %v2960
        %3009 = vst [vmem:[%s620 + $0x20] sm:$0xff] %v2962
        %3010 = vst [vmem:[%s620 + $0x28] sm:$0xff] %v3002
        %v3011 = vld [vmem:[%s8] sm:$0xf]
        %v3012 = vld [vmem:[%s8 + $0x4] sm:$0xf]
        %v3013 = vld [vmem:[%s8 + $0x8] sm:$0xf]
        %v3014 = vld [vmem:[%s8 + $0xc] sm:$0xf]
        %v3015 = vpack.c.bf16 %v2960, %v2956
        %v3016 = vpack.c.bf16 %v2962, %v2958
        %v3017 = vpack.c.bf16 %v3002, %v2999
        %v3022 = vunpack.c.l.b16 %v3011
        %v3023 = vunpack.c.l.b16 %v3012
        %v3024 = vunpack.c.l.b16 %v3013
        %v3025 = vunpack.c.l.b16 %v3014
        %v3026 = vpack.c.b16 %v3023, %v3022
        %v3027 = vpack.c.b16 %v3025, %v3024
        %vm3028 = vcmask 130048
        %v3030 = vsel %vm3028, %v3026, 0
        %v3033 = vsel %vm3028, %v3027, 0
        %3035 = vmatprep.subr.bf16.mxu0 %v3016
        %3036 = vmatpush1.bf16.msra.mxu0 %v3015
        %3037 = vmatprep.subr.bf16.mxu0 0
        %3038 = vmatpush1.bf16.msra.mxu0 0
        %3039 = vmatprep.subr.bf16.mxu0 0
        %3040 = vmatpush1.bf16.msra.mxu0 0
        %3041 = vmatprep.subr.bf16.mxu0 0
        %3042 = vmatpush1.bf16.msra.mxu0 0
        %3043 = vmatprep.subr.bf16.mxu0 0
        %3044 = vmatpush1.bf16.msra.mxu0 0
        %3045 = vmatprep.subr.bf16.mxu0 0
        %3046 = vmatpush1.bf16.msra.mxu0 0
        %3047 = vmatprep.subr.bf16.mxu0 0
        %3048 = vmatpush1.bf16.msra.mxu0 0
        %3049 = vmatprep.subr.bf16.mxu0 0
        %3050 = vmatpush1.bf16.msra.mxu0 0
        %3051 = vmatprep.subr.bf16.mxu0 0
        %3052 = vmatpush1.bf16.msra.mxu0 0
        %3053 = vmatprep.subr.bf16.mxu0 0
        %3054 = vmatpush1.bf16.msra.mxu0 0
        %3055 = vmatprep.subr.bf16.mxu0 0
        %3056 = vmatpush1.bf16.msra.mxu0 0
        %3057 = vmatprep.subr.bf16.mxu0 0
        %3058 = vmatpush1.bf16.msra.mxu0 0
        %3059 = vmatprep.subr.bf16.mxu0 0
        %3060 = vmatpush1.bf16.msra.mxu0 0
        %3061 = vmatprep.subr.bf16.mxu0 0
        %3062 = vmatpush1.bf16.msra.mxu0 0
        %3063 = vmatprep.subr.bf16.mxu0 0
        %3064 = vmatpush1.bf16.msra.mxu0 0
        %3065 = vmatprep.subr.bf16.mxu0 0
        %3066 = vmatpush1.bf16.msra.mxu0 0
        %3067 = vmatprep.mubr.bf16.mxu0 0
        %3068 = vmatmul.mubr.bf16.gmra.mrb[0].mxu0 %v3030
        %v3069 = vpop.f32.mrb[0].mxu0
        %v3070 = vadd.f32 0.0, %v3069
        %v3071 = vpop.f32.mrb[0].mxu0
        %v3072 = vadd.f32 0.0, %v3071
        %v3073 = vpop.f32.mrb[0].mxu0
        %v3074 = vadd.f32 0.0, %v3073
        %v3075 = vpop.f32.mrb[0].mxu0
        %v3076 = vadd.f32 0.0, %v3075
        %3077 = vmatprep.mubr.bf16.mxu0 0
        %3078 = vmatmul.mubr.bf16.gmra.mrb[0].mxu0 %v3033
        %v3079 = vpop.f32.mrb[0].mxu0
        %v3080 = vadd.f32 0.0, %v3079
        %v3081 = vpop.f32.mrb[0].mxu0
        %v3082 = vadd.f32 0.0, %v3081
        %v3083 = vpop.f32.mrb[0].mxu0
        %v3084 = vadd.f32 0.0, %v3083
        %v3085 = vpop.f32.mrb[0].mxu0
        %v3086 = vadd.f32 0.0, %v3085
        %3087 = vdwg.mxu0
        %3088 = vmatprep.subr.bf16.mxu0 0
        %3089 = vmatpush1.bf16.msra.mxu0 %v3017
        %3090 = vmatprep.subr.bf16.mxu0 0
        %3091 = vmatpush1.bf16.msra.mxu0 0
        %3092 = vmatprep.subr.bf16.mxu0 0
        %3093 = vmatpush1.bf16.msra.mxu0 0
        %3094 = vmatprep.subr.bf16.mxu0 0
        %3095 = vmatpush1.bf16.msra.mxu0 0
        %3096 = vmatprep.subr.bf16.mxu0 0
        %3097 = vmatpush1.bf16.msra.mxu0 0
        %3098 = vmatprep.subr.bf16.mxu0 0
        %3099 = vmatpush1.bf16.msra.mxu0 0
        %3100 = vmatprep.subr.bf16.mxu0 0
        %3101 = vmatpush1.bf16.msra.mxu0 0
        %3102 = vmatprep.subr.bf16.mxu0 0
        %3103 = vmatpush1.bf16.msra.mxu0 0
        %3104 = vmatprep.subr.bf16.mxu0 0
        %3105 = vmatpush1.bf16.msra.mxu0 0
        %3106 = vmatprep.subr.bf16.mxu0 0
        %3107 = vmatpush1.bf16.msra.mxu0 0
        %3108 = vmatprep.subr.bf16.mxu0 0
        %3109 = vmatpush1.bf16.msra.mxu0 0
        %3110 = vmatprep.subr.bf16.mxu0 0
        %3111 = vmatpush1.bf16.msra.mxu0 0
        %3112 = vmatprep.subr.bf16.mxu0 0
        %3113 = vmatpush1.bf16.msra.mxu0 0
        %3114 = vmatprep.subr.bf16.mxu0 0
        %3115 = vmatpush1.bf16.msra.mxu0 0
        %3116 = vmatprep.subr.bf16.mxu0 0
        %3117 = vmatpush1.bf16.msra.mxu0 0
        %3118 = vmatprep.subr.bf16.mxu0 0
        %3119 = vmatpush1.bf16.msra.mxu0 0
        %3120 = vmatprep.mubr.bf16.mxu0 0
        %3121 = vmatmul.mubr.bf16.gmra.mrb[0].mxu0 %v3030
        %v3122 = vpop.f32.mrb[0].mxu0
        %v3123 = vadd.f32 0.0, %v3122
        %v3124 = vpop.f32.mrb[0].mxu0
        %v3125 = vpop.f32.mrb[0].mxu0
        %v3126 = vadd.f32 0.0, %v3125
        %v3127 = vpop.f32.mrb[0].mxu0
        %3128 = vmatprep.mubr.bf16.mxu0 0
        %3129 = vmatmul.mubr.bf16.gmra.mrb[0].mxu0 %v3033
        %v3130 = vpop.f32.mrb[0].mxu0
        %v3131 = vadd.f32 0.0, %v3130
        %v3132 = vpop.f32.mrb[0].mxu0
        %v3133 = vpop.f32.mrb[0].mxu0
        %v3134 = vadd.f32 0.0, %v3133
        %v3135 = vpop.f32.mrb[0].mxu0
        %3136 = vdwg.mxu0
        %v3137 = vld [vmem:[%s10] sm:$0xff]
        %v3138 = vld [vmem:[%s10 + $0x8] sm:$0xff]
        %v3139 = vld [vmem:[%s10 + $0x10] sm:$0xff]
        %v3140 = vld [vmem:[%s10 + $0x18] sm:$0xff]
        %v3141 = vmul.f32 %v3070, 2.0
        %v3142 = vmul.f32 %v3072, 2.0
        %v3143 = vmul.f32 %v3123, 2.0
        %v3144 = vmul.f32 %v3074, 2.0
        %v3145 = vmul.f32 %v3076, 2.0
        %v3146 = vmul.f32 %v3126, 2.0
        %v3147 = vmul.f32 %v3080, 2.0
        %v3148 = vmul.f32 %v3082, 2.0
        %v3149 = vmul.f32 %v3131, 2.0
        %v3150 = vmul.f32 %v3084, 2.0
        %v3151 = vmul.f32 %v3086, 2.0
        %v3152 = vmul.f32 %v3134, 2.0
        %3154 = vset.pattern.permute.xlu0 0
        %3155 = vperm.xlu0 %3154, %v3137
        %v3156 = vpop.permute.xlu0 %3155
        %3159 = vset.pattern.permute.xlu0 0
        %3160 = vperm.xlu0 %3159, %v3138
        %v3161 = vpop.permute.xlu0 %3160
        %3164 = vset.pattern.permute.xlu0 0
        %3165 = vperm.xlu0 %3164, %v3139
        %v3166 = vpop.permute.xlu0 %3165
        %3169 = vset.pattern.permute.xlu0 0
        %3170 = vperm.xlu0 %3169, %v3140
        %v3171 = vpop.permute.xlu0 %3170
        %v3173 = vsub.f32 %v3156, %v3141
        %v3174 = vsub.f32 %v3156, %v3142
        %v3175 = vsub.f32 %v3156, %v3143
        %v3176 = vsub.f32 %v3161, %v3144
        %v3177 = vsub.f32 %v3161, %v3145
        %v3178 = vsub.f32 %v3161, %v3146
        %v3179 = vsub.f32 %v3166, %v3147
        %v3180 = vsub.f32 %v3166, %v3148
        %v3181 = vsub.f32 %v3166, %v3149
        %v3182 = vsub.f32 %v3171, %v3150
        %v3183 = vsub.f32 %v3171, %v3151
        %v3184 = vsub.f32 %v3171, %v3152
        %v3185 = vmin.f32 %v3173, %v3179
        %v3186 = vmin.f32 %v3176, %v3182
        %v3187 = vmin.f32 %v3185, %v3186
        %v3188 = vrot.slane %v3187, 4
        %v3189 = vmin.f32 %v3187, %v3188
        %v3190 = vrot.slane %v3189, 2
        %v3191 = vmin.f32 %v3189, %v3190
        %v3192 = vrot.slane %v3191, 1
        %v3193 = vmin.f32 %v3191, %v3192
        %v3194 = vmin.f32 %v3174, %v3180
        %v3195 = vmin.f32 %v3177, %v3183
        %v3196 = vmin.f32 %v3194, %v3195
        %v3197 = vrot.slane %v3196, 4
        %v3198 = vmin.f32 %v3196, %v3197
        %v3199 = vrot.slane %v3198, 2
        %v3200 = vmin.f32 %v3198, %v3199
        %v3201 = vrot.slane %v3200, 1
        %v3202 = vmin.f32 %v3200, %v3201
        %v3203 = vmin.f32 %v3175, %v3181
        %v3204 = vmin.f32 %v3178, %v3184
        %v3205 = vmin.f32 %v3203, %v3204
        %v3206 = vrot.slane %v3205, 4
        %v3207 = vmin.f32 %v3205, %v3206
        %v3208 = vrot.slane %v3207, 2
        %v3209 = vmin.f32 %v3207, %v3208
        %v3210 = vrot.slane %v3209, 1
        %v3211 = vmin.f32 %v3209, %v3210
        %v3212 = vlaneseq
        %v3213 = vshrl.u32 %v3212, 7
        %v3214 = vadd.s32 %v3213, 8
        %v3215 = vadd.s32 %v3213, 16
        %v3216 = vadd.s32 %v3213, 24
        %vm3217 = vcmp.le.f32.partialorder %v3173, %v3193
        %vm3218 = vcmp.le.f32.partialorder %v3174, %v3202
        %vm3219 = vcmp.le.f32.partialorder %v3175, %v3211
        %vm3220 = vcmp.le.f32.partialorder %v3176, %v3193
        %vm3221 = vcmp.le.f32.partialorder %v3177, %v3202
        %vm3222 = vcmp.le.f32.partialorder %v3178, %v3211
        %vm3223 = vcmp.le.f32.partialorder %v3179, %v3193
        %vm3224 = vcmp.le.f32.partialorder %v3180, %v3202
        %vm3225 = vcmp.le.f32.partialorder %v3181, %v3211
        %vm3226 = vcmp.le.f32.partialorder %v3182, %v3193
        %vm3227 = vcmp.le.f32.partialorder %v3183, %v3202
        %vm3228 = vcmp.le.f32.partialorder %v3184, %v3211
        %v3229 = vsel %vm3217, %v3213, 32
        %v3230 = vsel %vm3218, %v3213, 32
        %v3231 = vsel %vm3219, %v3213, 32
        %v3232 = vsel %vm3220, %v3214, 32
        %v3233 = vsel %vm3221, %v3214, 32
        %v3234 = vsel %vm3222, %v3214, 32
        %v3235 = vsel %vm3223, %v3215, 32
        %v3236 = vsel %vm3224, %v3215, 32
        %v3237 = vsel %vm3225, %v3215, 32
        %v3238 = vsel %vm3226, %v3216, 32
        %v3239 = vsel %vm3227, %v3216, 32
        %v3240 = vsel %vm3228, %v3216, 32
        %vm3241 = vcmp.lt.s32.totalorder %v3229, %v3235
        %v3242 = vsel %vm3241, %v3229, %v3235
        %vm3243 = vcmp.lt.s32.totalorder %v3232, %v3238
        %v3244 = vsel %vm3243, %v3232, %v3238
        %vm3245 = vcmp.lt.s32.totalorder %v3242, %v3244
        %v3246 = vsel %vm3245, %v3242, %v3244
        %v3247 = vrot.slane %v3246, 4
        %vm3248 = vcmp.lt.s32.totalorder %v3246, %v3247
        %v3249 = vsel %vm3248, %v3246, %v3247
        %v3250 = vrot.slane %v3249, 2
        %vm3251 = vcmp.lt.s32.totalorder %v3249, %v3250
        %v3252 = vsel %vm3251, %v3249, %v3250
        %v3253 = vrot.slane %v3252, 1
        %vm3254 = vcmp.lt.s32.totalorder %v3252, %v3253
        %v3255 = vsel %vm3254, %v3252, %v3253
        %vm3256 = vcmp.lt.s32.totalorder %v3230, %v3236
        %v3257 = vsel %vm3256, %v3230, %v3236
        %vm3258 = vcmp.lt.s32.totalorder %v3233, %v3239
        %v3259 = vsel %vm3258, %v3233, %v3239
        %vm3260 = vcmp.lt.s32.totalorder %v3257, %v3259
        %v3261 = vsel %vm3260, %v3257, %v3259
        %v3262 = vrot.slane %v3261, 4
        %vm3263 = vcmp.lt.s32.totalorder %v3261, %v3262
        %v3264 = vsel %vm3263, %v3261, %v3262
        %v3265 = vrot.slane %v3264, 2
        %vm3266 = vcmp.lt.s32.totalorder %v3264, %v3265
        %v3267 = vsel %vm3266, %v3264, %v3265
        %v3268 = vrot.slane %v3267, 1
        %vm3269 = vcmp.lt.s32.totalorder %v3267, %v3268
        %v3270 = vsel %vm3269, %v3267, %v3268
        %vm3271 = vcmp.lt.s32.totalorder %v3231, %v3237
        %v3272 = vsel %vm3271, %v3231, %v3237
        %vm3273 = vcmp.lt.s32.totalorder %v3234, %v3240
        %v3274 = vsel %vm3273, %v3234, %v3240
        %vm3275 = vcmp.lt.s32.totalorder %v3272, %v3274
        %v3276 = vsel %vm3275, %v3272, %v3274
        %v3277 = vrot.slane %v3276, 4
        %vm3278 = vcmp.lt.s32.totalorder %v3276, %v3277
        %v3279 = vsel %vm3278, %v3276, %v3277
        %v3280 = vrot.slane %v3279, 2
        %vm3281 = vcmp.lt.s32.totalorder %v3279, %v3280
        %v3282 = vsel %vm3281, %v3279, %v3280
        %v3283 = vrot.slane %v3282, 1
        %vm3284 = vcmp.lt.s32.totalorder %v3282, %v3283
        %v3285 = vsel %vm3284, %v3282, %v3283
        %v3286 = vcombine.low %v3255, %v3270
        %v3288 = vunpack.c.l.s4 1966171168
        %v3289 = vunpack.c.0.s8 %v3288
        %v3290 = vlaneseq
        %v3291 = vshrl.u32 %v3290, 7
        %v3292 = vsub.s32 %v3289, %v3291
        %v3293 = vrot.slane %v3286, %v3292
        %v3295 = vunpack.c.l.s4 1966171168
        %v3296 = vunpack.c.0.s8 %v3295
        %v3297 = vlaneseq
        %v3298 = vshrl.u32 %v3297, 7
        %v3299 = vsub.s32 %v3296, %v3298
        %v3300 = vrot.slane %v3285, %v3299
        %v3301 = vcombine.low %v3293, %v3300
        %v3303 = vunpack.c.l.s4 1966171168
        %v3304 = vunpack.c.0.s8 %v3303
        %v3305 = vlaneseq
        %v3306 = vshrl.u32 %v3305, 7
        %v3307 = vsub.s32 %v3304, %v3306
        %v3308 = vrot.slane %v3301, %v3307
        %v3309 = vlaneseq
        %vm3310 = vcmp.ge.s32.totalorder %v3309, 0
        %vm3311 = vcmp.lt.s32.totalorder %v3309, 384
        %vm3312 = vmand %vm3310, %vm3311
        %3313 = vst.msk [vmem:[%s664] sm:$0x7] %vm3312, %v3308
        %vm3314 = vcmp.eq.s32.totalorder %v3213, %v3255
        %vm3315 = vcmp.eq.s32.totalorder %v3213, %v3270
        %vm3316 = vcmp.eq.s32.totalorder %v3213, %v3285
        %vm3317 = vcmp.eq.s32.totalorder %v3214, %v3255
        %vm3318 = vcmp.eq.s32.totalorder %v3214, %v3270
        %vm3319 = vcmp.eq.s32.totalorder %v3214, %v3285
        %vm3320 = vcmp.eq.s32.totalorder %v3215, %v3255
        %vm3321 = vcmp.eq.s32.totalorder %v3215, %v3270
        %vm3322 = vcmp.eq.s32.totalorder %v3215, %v3285
        %vm3323 = vcmp.eq.s32.totalorder %v3216, %v3255
        %vm3324 = vcmp.eq.s32.totalorder %v3216, %v3270
        %vm3325 = vcmp.eq.s32.totalorder %v3216, %v3285
        %v3326 = vsel %vm3314, 1.0, 0.0
        %v3327 = vsel %vm3315, 1.0, 0.0
        %v3328 = vsel %vm3316, 1.0, 0.0
        %v3329 = vsel %vm3317, 1.0, 0.0
        %v3330 = vsel %vm3318, 1.0, 0.0
        %v3331 = vsel %vm3319, 1.0, 0.0
        %v3332 = vsel %vm3320, 1.0, 0.0
        %v3333 = vsel %vm3321, 1.0, 0.0
        %v3334 = vsel %vm3322, 1.0, 0.0
        %v3335 = vsel %vm3323, 1.0, 0.0
        %v3336 = vsel %vm3324, 1.0, 0.0
        %v3337 = vsel %vm3325, 1.0, 0.0
        %v3338 = vmul.f32 %v3326, %v2122
        %v3339 = vmul.f32 %v3327, %v2126
        %v3340 = vmul.f32 %v3328, %v2130
        %v3341 = vmul.f32 %v3329, %v2122
        %v3342 = vmul.f32 %v3330, %v2126
        %v3343 = vmul.f32 %v3331, %v2130
        %v3344 = vmul.f32 %v3332, %v2122
        %v3345 = vmul.f32 %v3333, %v2126
        %v3346 = vmul.f32 %v3334, %v2130
        %v3347 = vmul.f32 %v3335, %v2122
        %v3348 = vmul.f32 %v3336, %v2126
        %v3349 = vmul.f32 %v3337, %v2130
        %v3350 = vld [vmem:[%s9] sm:$0xff]
        %v3351 = vld [vmem:[%s9 + $0x8] sm:$0xff]
        %v3353 = vsel %vm2658, %v3350, 0
        %v3356 = vsel %vm2658, %v3351, 0
        %3358 = vmatprep.subr.mxu0 %v3339
        %3359 = vmatpush1.msra.mxu0 %v3338
        %3360 = vmatprep.subr.mxu0 %v3342
        %3361 = vmatpush1.msra.mxu0 %v3341
        %3362 = vmatprep.subr.mxu0 %v3345
        %3363 = vmatpush1.msra.mxu0 %v3344
        %3364 = vmatprep.subr.mxu0 %v3348
        %3365 = vmatpush1.msra.mxu0 %v3347
        %3366 = vmatprep.subr.mxu0 0.0
        %3367 = vmatpush1.msra.mxu0 0.0
        %3368 = vmatprep.subr.mxu0 0.0
        %3369 = vmatpush1.msra.mxu0 0.0
        %3370 = vmatprep.subr.mxu0 0.0
        %3371 = vmatpush1.msra.mxu0 0.0
        %3372 = vmatprep.subr.mxu0 0.0
        %3373 = vmatpush1.msra.mxu0 0.0
        %3374 = vmatprep.subr.mxu0 0.0
        %3375 = vmatpush1.msra.mxu0 0.0
        %3376 = vmatprep.subr.mxu0 0.0
        %3377 = vmatpush1.msra.mxu0 0.0
        %3378 = vmatprep.subr.mxu0 0.0
        %3379 = vmatpush1.msra.mxu0 0.0
        %3380 = vmatprep.subr.mxu0 0.0
        %3381 = vmatpush1.msra.mxu0 0.0
        %3382 = vmatprep.subr.mxu0 0.0
        %3383 = vmatpush1.msra.mxu0 0.0
        %3384 = vmatprep.subr.mxu0 0.0
        %3385 = vmatpush1.msra.mxu0 0.0
        %3386 = vmatprep.subr.mxu0 0.0
        %3387 = vmatpush1.msra.mxu0 0.0
        %3388 = vmatprep.subr.mxu0 0.0
        %3389 = vmatpush1.msra.mxu0 0.0
        %3390 = vmatprep.subr.mxu0 0.0
        %3391 = vmatpush1.msra.mxu0 0.0
        %3392 = vmatprep.subr.mxu0 0.0
        %3393 = vmatpush1.msra.mxu0 0.0
        %3394 = vmatprep.subr.mxu0 0.0
        %3395 = vmatpush1.msra.mxu0 0.0
        %3396 = vmatprep.subr.mxu0 0.0
        %3397 = vmatpush1.msra.mxu0 0.0
        %3398 = vmatprep.subr.mxu0 0.0
        %3399 = vmatpush1.msra.mxu0 0.0
        %3400 = vmatprep.subr.mxu0 0.0
        %3401 = vmatpush1.msra.mxu0 0.0
        %3402 = vmatprep.subr.mxu0 0.0
        %3403 = vmatpush1.msra.mxu0 0.0
        %3404 = vmatprep.subr.mxu0 0.0
        %3405 = vmatpush1.msra.mxu0 0.0
        %3406 = vmatprep.subr.mxu0 0.0
        %3407 = vmatpush1.msra.mxu0 0.0
        %3408 = vmatprep.subr.mxu0 0.0
        %3409 = vmatpush1.msra.mxu0 0.0
        %3410 = vmatprep.subr.mxu0 0.0
        %3411 = vmatpush1.msra.mxu0 0.0
        %3412 = vmatprep.subr.mxu0 0.0
        %3413 = vmatpush1.msra.mxu0 0.0
        %3414 = vmatprep.subr.mxu0 0.0
        %3415 = vmatpush1.msra.mxu0 0.0
        %3416 = vmatprep.subr.mxu0 0.0
        %3417 = vmatpush1.msra.mxu0 0.0
        %3418 = vmatprep.subr.mxu0 0.0
        %3419 = vmatpush1.msra.mxu0 0.0
        %3420 = vmatprep.subr.mxu0 0.0
        %3421 = vmatpush1.msra.mxu0 0.0
        %3422 = vmatprep.mubr.f32.mxu0 0.0
        %3423 = vmatmul.mubr.f32.gmra.mrb[0].mxu0 %v3353
        %v3424 = vpop.f32.mrb[0].mxu0
        %v3425 = vadd.f32 0.0, %v3424
        %v3426 = vpop.f32.mrb[0].mxu0
        %v3427 = vadd.f32 0.0, %v3426
        %3428 = vmatprep.mubr.f32.mxu0 0.0
        %3429 = vmatmul.mubr.f32.gmra.mrb[0].mxu0 %v3356
        %v3430 = vpop.f32.mrb[0].mxu0
        %v3431 = vadd.f32 0.0, %v3430
        %v3432 = vpop.f32.mrb[0].mxu0
        %v3433 = vadd.f32 0.0, %v3432
        %3434 = vdwg.mxu0
        %3435 = vmatprep.subr.mxu0 0.0
        %3436 = vmatpush1.msra.mxu0 %v3340
        %3437 = vmatprep.subr.mxu0 0.0
        %3438 = vmatpush1.msra.mxu0 %v3343
        %3439 = vmatprep.subr.mxu0 0.0
        %3440 = vmatpush1.msra.mxu0 %v3346
        %3441 = vmatprep.subr.mxu0 0.0
        %3442 = vmatpush1.msra.mxu0 %v3349
        %3443 = vmatprep.subr.mxu0 0.0
        %3444 = vmatpush1.msra.mxu0 0.0
        %3445 = vmatprep.subr.mxu0 0.0
        %3446 = vmatpush1.msra.mxu0 0.0
        %3447 = vmatprep.subr.mxu0 0.0
        %3448 = vmatpush1.msra.mxu0 0.0
        %3449 = vmatprep.subr.mxu0 0.0
        %3450 = vmatpush1.msra.mxu0 0.0
        %3451 = vmatprep.subr.mxu0 0.0
        %3452 = vmatpush1.msra.mxu0 0.0
        %3453 = vmatprep.subr.mxu0 0.0
        %3454 = vmatpush1.msra.mxu0 0.0
        %3455 = vmatprep.subr.mxu0 0.0
        %3456 = vmatpush1.msra.mxu0 0.0
        %3457 = vmatprep.subr.mxu0 0.0
        %3458 = vmatpush1.msra.mxu0 0.0
        %3459 = vmatprep.subr.mxu0 0.0
        %3460 = vmatpush1.msra.mxu0 0.0
        %3461 = vmatprep.subr.mxu0 0.0
        %3462 = vmatpush1.msra.mxu0 0.0
        %3463 = vmatprep.subr.mxu0 0.0
        %3464 = vmatpush1.msra.mxu0 0.0
        %3465 = vmatprep.subr.mxu0 0.0
        %3466 = vmatpush1.msra.mxu0 0.0
        %3467 = vmatprep.subr.mxu0 0.0
        %3468 = vmatpush1.msra.mxu0 0.0
        %3469 = vmatprep.subr.mxu0 0.0
        %3470 = vmatpush1.msra.mxu0 0.0
        %3471 = vmatprep.subr.mxu0 0.0
        %3472 = vmatpush1.msra.mxu0 0.0
        %3473 = vmatprep.subr.mxu0 0.0
        %3474 = vmatpush1.msra.mxu0 0.0
        %3475 = vmatprep.subr.mxu0 0.0
        %3476 = vmatpush1.msra.mxu0 0.0
        %3477 = vmatprep.subr.mxu0 0.0
        %3478 = vmatpush1.msra.mxu0 0.0
        %3479 = vmatprep.subr.mxu0 0.0
        %3480 = vmatpush1.msra.mxu0 0.0
        %3481 = vmatprep.subr.mxu0 0.0
        %3482 = vmatpush1.msra.mxu0 0.0
        %3483 = vmatprep.subr.mxu0 0.0
        %3484 = vmatpush1.msra.mxu0 0.0
        %3485 = vmatprep.subr.mxu0 0.0
        %3486 = vmatpush1.msra.mxu0 0.0
        %3487 = vmatprep.subr.mxu0 0.0
        %3488 = vmatpush1.msra.mxu0 0.0
        %3489 = vmatprep.subr.mxu0 0.0
        %3490 = vmatpush1.msra.mxu0 0.0
        %3491 = vmatprep.subr.mxu0 0.0
        %3492 = vmatpush1.msra.mxu0 0.0
        %3493 = vmatprep.subr.mxu0 0.0
        %3494 = vmatpush1.msra.mxu0 0.0
        %3495 = vmatprep.subr.mxu0 0.0
        %3496 = vmatpush1.msra.mxu0 0.0
        %3497 = vmatprep.subr.mxu0 0.0
        %3498 = vmatpush1.msra.mxu0 0.0
        %3499 = vmatprep.mubr.f32.mxu0 0.0
        %3500 = vmatmul.mubr.f32.gmra.mrb[0].mxu0 %v3353
        %v3501 = vpop.f32.mrb[0].mxu0
        %v3502 = vadd.f32 0.0, %v3501
        %v3503 = vpop.f32.mrb[0].mxu0
        %3504 = vmatprep.mubr.f32.mxu0 0.0
        %3505 = vmatmul.mubr.f32.gmra.mrb[0].mxu0 %v3356
        %v3506 = vpop.f32.mrb[0].mxu0
        %v3507 = vadd.f32 0.0, %v3506
        %v3508 = vpop.f32.mrb[0].mxu0
        %3509 = vdwg.mxu0
        %3510 = vst [vmem:[%s626] sm:$0xff] %v3425
        %3511 = vst [vmem:[%s626 + $0x8] sm:$0xff] %v3427
        %3512 = vst [vmem:[%s626 + $0x10] sm:$0xff] %v3502
        %3513 = vst [vmem:[%s626 + $0x18] sm:$0xff] %v3431
        %3514 = vst [vmem:[%s626 + $0x20] sm:$0xff] %v3433
        %3515 = vst [vmem:[%s626 + $0x28] sm:$0xff] %v3507
        %v3516 = vadd.f32 %v3338, %v3339
        %v3517 = vadd.f32 %v3516, %v3340
        %3518 = vadd.xlane.f32.xlu0 %v3517
        %v3519 = vpop.xlane.xlu0 %3518
        %v3520 = vadd.f32 %v3341, %v3342
        %v3521 = vadd.f32 %v3520, %v3343
        %3522 = vadd.xlane.f32.xlu0 %v3521
        %v3523 = vpop.xlane.xlu0 %3522
        %v3524 = vadd.f32 %v3344, %v3345
        %v3525 = vadd.f32 %v3524, %v3346
        %3526 = vadd.xlane.f32.xlu0 %v3525
        %v3527 = vpop.xlane.xlu0 %3526
        %v3528 = vadd.f32 %v3347, %v3348
        %v3529 = vadd.f32 %v3528, %v3349
        %3530 = vadd.xlane.f32.xlu0 %v3529
        %v3531 = vpop.xlane.xlu0 %3530
        %vm3532 = vcmask 7168
        %3533 = vst.msk [vmem:[%s676] sm:$0xff] %vm3532, %v3519
        %3534 = vst.msk [vmem:[%s676 + $0x8] sm:$0xff] %vm3532, %v3523
        %3535 = vst.msk [vmem:[%s676 + $0x10] sm:$0xff] %vm3532, %v3527
        %3536 = vst.msk [vmem:[%s676 + $0x18] sm:$0xff] %vm3532, %v3531
        %v3537 = vsub.f32 %v3425, %v2956
        %v3538 = vsub.f32 %v3427, %v2958
        %v3539 = vsub.f32 %v3502, %v2999
        %v3540 = vsub.f32 %v3431, %v2960
        %v3541 = vsub.f32 %v3433, %v2962
        %v3542 = vsub.f32 %v3507, %v3002
        %v3543 = vmul.f32 %v3537, %v2122
        %v3544 = vmul.f32 %v3538, %v2126
        %v3545 = vmul.f32 %v3539, %v2130
        %v3546 = vmul.f32 %v3540, %v2122
        %v3547 = vmul.f32 %v3541, %v2126
        %v3548 = vmul.f32 %v3542, %v2130
        %v3549 = vmul.f32 %v3543, %v3543
        %v3550 = vmul.f32 %v3544, %v3544
        %v3551 = vmul.f32 %v3545, %v3545
        %v3552 = vmul.f32 %v3546, %v3546
        %v3553 = vmul.f32 %v3547, %v3547
        %v3554 = vmul.f32 %v3548, %v3548
        %v3555 = vadd.f32 %v3549, %v3550
        %v3556 = vadd.f32 %v3555, %v3551
        %3557 = vadd.xlane.f32.xlu0 %v3556
        %v3558 = vpop.xlane.xlu0 %3557
        %v3559 = vadd.f32 %v3552, %v3553
        %v3560 = vadd.f32 %v3559, %v3554
        %3561 = vadd.xlane.f32.xlu0 %v3560
        %v3562 = vpop.xlane.xlu0 %3561
        %v3563 = vadd.f32 %v3558, %v3562
        %v3564 = vrot.slane %v3563, 4
        %v3565 = vadd.f32 %v3563, %v3564
        %v3566 = vrot.slane %v3565, 2
        %v3567 = vadd.f32 %v3565, %v3566
        %v3568 = vrot.slane %v3567, 1
        %v3569 = vadd.f32 %v3567, %v3568
        %3570 = vrot.lane.b32.xlu0 %v3425, 19
        %v3571 = vpop.permute.xlu0 %3570
        %3572 = vrot.lane.b32.xlu0 %v3431, 19
        %v3573 = vpop.permute.xlu0 %3572
        %3574 = vrot.lane.b32.xlu0 %v3427, 19
        %v3575 = vpop.permute.xlu0 %3574
        %3576 = vrot.lane.b32.xlu0 %v3433, 19
        %v3577 = vpop.permute.xlu0 %3576
        %3578 = vrot.lane.b32.xlu0 %v3502, 19
        %v3579 = vpop.permute.xlu0 %3578
        %3580 = vrot.lane.b32.xlu0 %v3507, 19
        %v3581 = vpop.permute.xlu0 %3580
        %v3582 = vsel %vm700, %v3575, %v3579
        %v3583 = vsel %vm700, %v3577, %v3581
        %v3584 = vsel %vm700, %v3571, %v3575
        %v3585 = vsel %vm700, %v3573, %v3577
        %v3586 = vsel %vm700, %v3579, %v3571
        %v3587 = vsel %vm700, %v3581, %v3573
        %v3588 = vpack.c.bf16 %v3587, %v3586
        %v3589 = vpack.c.bf16 %v3585, %v3584
        %v3590 = vpack.c.bf16 %v3583, %v3582
        %3591 = vst [vmem:[#allocation2] sm:$0xff] %v3588
        %3592 = vst [vmem:[#allocation2 + $0x8] sm:$0xff] %v3589
        %3593 = vst [vmem:[#allocation2 + $0x10] sm:$0xff] %v3590
        %3594 = vrot.lane.b32.xlu0 %v3425, 18
        %v3595 = vpop.permute.xlu0 %3594
        %3596 = vrot.lane.b32.xlu0 %v3431, 18
        %v3597 = vpop.permute.xlu0 %3596
        %3598 = vrot.lane.b32.xlu0 %v3427, 18
        %v3599 = vpop.permute.xlu0 %3598
        %3600 = vrot.lane.b32.xlu0 %v3433, 18
        %v3601 = vpop.permute.xlu0 %3600
        %3602 = vrot.lane.b32.xlu0 %v3502, 18
        %v3603 = vpop.permute.xlu0 %3602
        %3604 = vrot.lane.b32.xlu0 %v3507, 18
        %v3605 = vpop.permute.xlu0 %3604
        %v3606 = vsel %vm718, %v3599, %v3603
        %v3607 = vsel %vm718, %v3601, %v3605
        %v3608 = vsel %vm718, %v3595, %v3599
        %v3609 = vsel %vm718, %v3597, %v3601
        %v3610 = vsel %vm718, %v3603, %v3595
        %v3611 = vsel %vm718, %v3605, %v3597
        %v3612 = vpack.c.bf16 %v3611, %v3610
        %v3613 = vpack.c.bf16 %v3609, %v3608
        %v3614 = vpack.c.bf16 %v3607, %v3606
        %3615 = vst [vmem:[#allocation2 + $0x18] sm:$0xff] %v3612
        %3616 = vst [vmem:[#allocation2 + $0x20] sm:$0xff] %v3613
        %3617 = vst [vmem:[#allocation2 + $0x28] sm:$0xff] %v3614
        %3618 = vrot.lane.b32.xlu0 %v3425, 17
        %v3619 = vpop.permute.xlu0 %3618
        %3620 = vrot.lane.b32.xlu0 %v3431, 17
        %v3621 = vpop.permute.xlu0 %3620
        %3622 = vrot.lane.b32.xlu0 %v3427, 17
        %v3623 = vpop.permute.xlu0 %3622
        %3624 = vrot.lane.b32.xlu0 %v3433, 17
        %v3625 = vpop.permute.xlu0 %3624
        %3626 = vrot.lane.b32.xlu0 %v3502, 17
        %v3627 = vpop.permute.xlu0 %3626
        %3628 = vrot.lane.b32.xlu0 %v3507, 17
        %v3629 = vpop.permute.xlu0 %3628
        %v3630 = vsel %vm992, %v3623, %v3627
        %v3631 = vsel %vm992, %v3625, %v3629
        %v3632 = vsel %vm992, %v3619, %v3623
        %v3633 = vsel %vm992, %v3621, %v3625
        %v3634 = vsel %vm992, %v3627, %v3619
        %v3635 = vsel %vm992, %v3629, %v3621
        %v3636 = vpack.c.bf16 %v3635, %v3634
        %v3637 = vpack.c.bf16 %v3633, %v3632
        %v3638 = vpack.c.bf16 %v3631, %v3630
        %3639 = vst [vmem:[#allocation2 + $0x30] sm:$0xff] %v3636
        %3640 = vst [vmem:[#allocation2 + $0x38] sm:$0xff] %v3637
        %3641 = vst [vmem:[#allocation2 + $0x40] sm:$0xff] %v3638
        %3642 = vrot.lane.b32.xlu0 %v3425, 1
        %v3643 = vpop.permute.xlu0 %3642
        %3644 = vrot.lane.b32.xlu0 %v3431, 1
        %v3645 = vpop.permute.xlu0 %3644
        %3646 = vrot.lane.b32.xlu0 %v3427, 1
        %v3647 = vpop.permute.xlu0 %3646
        %3648 = vrot.lane.b32.xlu0 %v3433, 1
        %v3649 = vpop.permute.xlu0 %3648
        %3650 = vrot.lane.b32.xlu0 %v3502, 1
        %v3651 = vpop.permute.xlu0 %3650
        %3652 = vrot.lane.b32.xlu0 %v3507, 1
        %v3653 = vpop.permute.xlu0 %3652
        %v3654 = vsel %vm1149, %v3647, %v3651
        %v3655 = vsel %vm1149, %v3649, %v3653
        %v3656 = vsel %vm1149, %v3643, %v3647
        %v3657 = vsel %vm1149, %v3645, %v3649
        %v3658 = vsel %vm1149, %v3651, %v3643
        %v3659 = vsel %vm1149, %v3653, %v3645
        %v3660 = vpack.c.bf16 %v3659, %v3658
        %v3661 = vpack.c.bf16 %v3657, %v3656
        %v3662 = vpack.c.bf16 %v3655, %v3654
        %3663 = vst [vmem:[#allocation2 + $0x48] sm:$0xff] %v3660
        %3664 = vst [vmem:[#allocation2 + $0x50] sm:$0xff] %v3661
        %3665 = vst [vmem:[#allocation2 + $0x58] sm:$0xff] %v3662
        %v3666 = vpack.c.bf16 %v3431, %v3425
        %v3667 = vpack.c.bf16 %v3433, %v3427
        %v3668 = vpack.c.bf16 %v3507, %v3502
        %3669 = vst [vmem:[#allocation2 + $0x60] sm:$0xff] %v3666
        %3670 = vst [vmem:[#allocation2 + $0x68] sm:$0xff] %v3667
        %3671 = vst [vmem:[#allocation2 + $0x70] sm:$0xff] %v3668
        %3672 = vrot.lane.b32.xlu0 %v3425, 127
        %v3673 = vpop.permute.xlu0 %3672
        %3674 = vrot.lane.b32.xlu0 %v3431, 127
        %v3675 = vpop.permute.xlu0 %3674
        %3676 = vrot.lane.b32.xlu0 %v3427, 127
        %v3677 = vpop.permute.xlu0 %3676
        %3678 = vrot.lane.b32.xlu0 %v3433, 127
        %v3679 = vpop.permute.xlu0 %3678
        %3680 = vrot.lane.b32.xlu0 %v3502, 127
        %v3681 = vpop.permute.xlu0 %3680
        %3682 = vrot.lane.b32.xlu0 %v3507, 127
        %v3683 = vpop.permute.xlu0 %3682
        %v3684 = vsel %vm1453, %v3677, %v3681
        %v3685 = vsel %vm1453, %v3679, %v3683
        %v3686 = vsel %vm1453, %v3673, %v3677
        %v3687 = vsel %vm1453, %v3675, %v3679
        %v3688 = vsel %vm1453, %v3681, %v3673
        %v3689 = vsel %vm1453, %v3683, %v3675
        %v3690 = vpack.c.bf16 %v3687, %v3686
        %v3691 = vpack.c.bf16 %v3685, %v3684
        %v3692 = vpack.c.bf16 %v3689, %v3688
        %3693 = vst [vmem:[#allocation2 + $0x78] sm:$0xff] %v3690
        %3694 = vst [vmem:[#allocation2 + $0x80] sm:$0xff] %v3691
        %3695 = vst [vmem:[#allocation2 + $0x88] sm:$0xff] %v3692
        %3696 = vrot.lane.b32.xlu0 %v3425, 111
        %v3697 = vpop.permute.xlu0 %3696
        %3698 = vrot.lane.b32.xlu0 %v3431, 111
        %v3699 = vpop.permute.xlu0 %3698
        %3700 = vrot.lane.b32.xlu0 %v3427, 111
        %v3701 = vpop.permute.xlu0 %3700
        %3702 = vrot.lane.b32.xlu0 %v3433, 111
        %v3703 = vpop.permute.xlu0 %3702
        %3704 = vrot.lane.b32.xlu0 %v3502, 111
        %v3705 = vpop.permute.xlu0 %3704
        %3706 = vrot.lane.b32.xlu0 %v3507, 111
        %v3707 = vpop.permute.xlu0 %3706
        %v3708 = vsel %vm1610, %v3701, %v3705
        %v3709 = vsel %vm1610, %v3703, %v3707
        %v3710 = vsel %vm1610, %v3697, %v3701
        %v3711 = vsel %vm1610, %v3699, %v3703
        %v3712 = vsel %vm1610, %v3705, %v3697
        %v3713 = vsel %vm1610, %v3707, %v3699
        %v3714 = vpack.c.bf16 %v3711, %v3710
        %v3715 = vpack.c.bf16 %v3709, %v3708
        %v3716 = vpack.c.bf16 %v3713, %v3712
        %3717 = vst [vmem:[#allocation2 + $0x90] sm:$0xff] %v3714
        %3718 = vst [vmem:[#allocation2 + $0x98] sm:$0xff] %v3715
        %3719 = vst [vmem:[#allocation2 + $0xa0] sm:$0xff] %v3716
        %3720 = vrot.lane.b32.xlu0 %v3425, 110
        %v3721 = vpop.permute.xlu0 %3720
        %3722 = vrot.lane.b32.xlu0 %v3431, 110
        %v3723 = vpop.permute.xlu0 %3722
        %3724 = vrot.lane.b32.xlu0 %v3427, 110
        %v3725 = vpop.permute.xlu0 %3724
        %3726 = vrot.lane.b32.xlu0 %v3433, 110
        %v3727 = vpop.permute.xlu0 %3726
        %3728 = vrot.lane.b32.xlu0 %v3502, 110
        %v3729 = vpop.permute.xlu0 %3728
        %3730 = vrot.lane.b32.xlu0 %v3507, 110
        %v3731 = vpop.permute.xlu0 %3730
        %v3732 = vsel %vm1767, %v3725, %v3729
        %v3733 = vsel %vm1767, %v3727, %v3731
        %v3734 = vsel %vm1767, %v3721, %v3725
        %v3735 = vsel %vm1767, %v3723, %v3727
        %v3736 = vsel %vm1767, %v3729, %v3721
        %v3737 = vsel %vm1767, %v3731, %v3723
        %v3738 = vpack.c.bf16 %v3735, %v3734
        %v3739 = vpack.c.bf16 %v3733, %v3732
        %v3740 = vpack.c.bf16 %v3737, %v3736
        %3741 = vst [vmem:[#allocation2 + $0xa8] sm:$0xff] %v3738
        %3742 = vst [vmem:[#allocation2 + $0xb0] sm:$0xff] %v3739
        %3743 = vst [vmem:[#allocation2 + $0xb8] sm:$0xff] %v3740
        %3744 = vrot.lane.b32.xlu0 %v3425, 109
        %v3745 = vpop.permute.xlu0 %3744
        %3746 = vrot.lane.b32.xlu0 %v3431, 109
        %v3747 = vpop.permute.xlu0 %3746
        %3748 = vrot.lane.b32.xlu0 %v3427, 109
        %v3749 = vpop.permute.xlu0 %3748
        %3750 = vrot.lane.b32.xlu0 %v3433, 109
        %v3751 = vpop.permute.xlu0 %3750
        %3752 = vrot.lane.b32.xlu0 %v3502, 109
        %v3753 = vpop.permute.xlu0 %3752
        %3754 = vrot.lane.b32.xlu0 %v3507, 109
        %v3755 = vpop.permute.xlu0 %3754
        %v3756 = vsel %vm1924, %v3749, %v3753
        %v3757 = vsel %vm1924, %v3751, %v3755
        %v3758 = vsel %vm1924, %v3745, %v3749
        %v3759 = vsel %vm1924, %v3747, %v3751
        %v3760 = vsel %vm1924, %v3753, %v3745
        %v3761 = vsel %vm1924, %v3755, %v3747
        %v3762 = vpack.c.bf16 %v3759, %v3758
        %v3763 = vpack.c.bf16 %v3757, %v3756
        %v3764 = vpack.c.bf16 %v3761, %v3760
        %3765 = vst [vmem:[#allocation2 + $0xc0] sm:$0xff] %v3762
        %3766 = vst [vmem:[#allocation2 + $0xc8] sm:$0xff] %v3763
        %3767 = vst [vmem:[#allocation2 + $0xd0] sm:$0xff] %v3764
        %v3768 = vld [vmem:[%s11] sm:$0xff]
        %v3769 = vld [vmem:[%s11 + $0x8] sm:$0xff]
        %v3770 = vld [vmem:[%s11 + $0x10] sm:$0xff]
        %v3771 = vld [vmem:[%s11 + $0x18] sm:$0xff]
        %v3772 = vld [vmem:[#allocation2] sm:$0xff]
        %v3773 = vld [vmem:[#allocation2 + $0x8] sm:$0xff]
        %v3774 = vld [vmem:[#allocation2 + $0x10] sm:$0xff]
        %v3775 = vld [vmem:[#allocation2 + $0x18] sm:$0xff]
        %v3776 = vld [vmem:[#allocation2 + $0x20] sm:$0xff]
        %v3777 = vld [vmem:[#allocation2 + $0x28] sm:$0xff]
        %v3778 = vld [vmem:[#allocation2 + $0x30] sm:$0xff]
        %v3779 = vld [vmem:[#allocation2 + $0x38] sm:$0xff]
        %v3780 = vld [vmem:[#allocation2 + $0x40] sm:$0xff]
        %v3781 = vld [vmem:[#allocation2 + $0x48] sm:$0xff]
        %v3782 = vld [vmem:[#allocation2 + $0x50] sm:$0xff]
        %v3783 = vld [vmem:[#allocation2 + $0x58] sm:$0xff]
        %v3784 = vld [vmem:[#allocation2 + $0x60] sm:$0xff]
        %v3785 = vld [vmem:[#allocation2 + $0x68] sm:$0xff]
        %v3786 = vld [vmem:[#allocation2 + $0x70] sm:$0xff]
        %v3787 = vld [vmem:[#allocation2 + $0x78] sm:$0xff]
        %v3788 = vld [vmem:[#allocation2 + $0x80] sm:$0xff]
        %v3789 = vld [vmem:[#allocation2 + $0x88] sm:$0xff]
        %v3790 = vld [vmem:[#allocation2 + $0x90] sm:$0xff]
        %v3791 = vld [vmem:[#allocation2 + $0x98] sm:$0xff]
        %v3792 = vld [vmem:[#allocation2 + $0xa0] sm:$0xff]
        %v3793 = vld [vmem:[#allocation2 + $0xa8] sm:$0xff]
        %v3794 = vld [vmem:[#allocation2 + $0xb0] sm:$0xff]
        %v3795 = vld [vmem:[#allocation2 + $0xb8] sm:$0xff]
        %v3796 = vld [vmem:[#allocation2 + $0xc0] sm:$0xff]
        %v3797 = vld [vmem:[#allocation2 + $0xc8] sm:$0xff]
        %v3798 = vld [vmem:[#allocation2 + $0xd0] sm:$0xff]
        %v3799 = vld [vmem:[%s12] sm:$0xff]
        %v3800 = vld [vmem:[%s12 + $0x8] sm:$0xff]
        %v3801 = vld [vmem:[%s12 + $0x10] sm:$0xff]
        %v3802 = vld [vmem:[%s12 + $0x18] sm:$0xff]
        %3804 = vset.pattern.permute.xlu0 0
        %3805 = vperm.xlu0 %3804, %v3799
        %v3806 = vpop.permute.xlu0 %3805
        %3809 = vset.pattern.permute.xlu0 0
        %3810 = vperm.xlu0 %3809, %v3800
        %v3811 = vpop.permute.xlu0 %3810
        %3814 = vset.pattern.permute.xlu0 0
        %3815 = vperm.xlu0 %3814, %v3801
        %v3816 = vpop.permute.xlu0 %3815
        %3819 = vset.pattern.permute.xlu0 0
        %3820 = vperm.xlu0 %3819, %v3802
        %v3821 = vpop.permute.xlu0 %3820
        %v3827 = vunpack.c.l.b16 %v3768
        %v3828 = vunpack.c.h.b16 %v3768
        %v3829 = vunpack.c.l.b16 %v3769
        %v3830 = vunpack.c.h.b16 %v3769
        %v3831 = vunpack.c.l.b16 %v3770
        %v3832 = vunpack.c.h.b16 %v3770
        %v3833 = vunpack.c.l.b16 %v3771
        %v3834 = vunpack.c.h.b16 %v3771
        %v3835 = vpack.c.b16 %v3829, %v3827
        %v3836 = vpack.c.b16 %v3830, %v3828
        %v3837 = vpack.c.b16 %v3833, %v3831
        %v3838 = vpack.c.b16 %v3834, %v3832
        %v3842 = vsel %vm3028, %v3836, 0
        %v3845 = vsel %vm3028, %v3838, 0
        %3847 = vmatprep.subr.bf16.mxu0 %v3773
        %3848 = vmatpush1.bf16.msra.mxu0 %v3772
        %3849 = vmatprep.subr.bf16.mxu0 %v3776
        %3850 = vmatpush1.bf16.msra.mxu0 %v3775
        %3851 = vmatprep.subr.bf16.mxu0 %v3779
        %3852 = vmatpush1.bf16.msra.mxu0 %v3778
        %3853 = vmatprep.subr.bf16.mxu0 %v3782
        %3854 = vmatpush1.bf16.msra.mxu0 %v3781
        %3855 = vmatprep.subr.bf16.mxu0 %v3785
        %3856 = vmatpush1.bf16.msra.mxu0 %v3784
        %3857 = vmatprep.subr.bf16.mxu0 %v3788
        %3858 = vmatpush1.bf16.msra.mxu0 %v3787
        %3859 = vmatprep.subr.bf16.mxu0 %v3791
        %3860 = vmatpush1.bf16.msra.mxu0 %v3790
        %3861 = vmatprep.subr.bf16.mxu0 %v3794
        %3862 = vmatpush1.bf16.msra.mxu0 %v3793
        %3863 = vmatprep.subr.bf16.mxu0 %v3797
        %3864 = vmatpush1.bf16.msra.mxu0 %v3796
        %3865 = vmatprep.subr.bf16.mxu0 0
        %3866 = vmatpush1.bf16.msra.mxu0 0
        %3867 = vmatprep.subr.bf16.mxu0 0
        %3868 = vmatpush1.bf16.msra.mxu0 0
        %3869 = vmatprep.subr.bf16.mxu0 0
        %3870 = vmatpush1.bf16.msra.mxu0 0
        %3871 = vmatprep.subr.bf16.mxu0 0
        %3872 = vmatpush1.bf16.msra.mxu0 0
        %3873 = vmatprep.subr.bf16.mxu0 0
        %3874 = vmatpush1.bf16.msra.mxu0 0
        %3875 = vmatprep.subr.bf16.mxu0 0
        %3876 = vmatpush1.bf16.msra.mxu0 0
        %3877 = vmatprep.subr.bf16.mxu0 0
        %3878 = vmatpush1.bf16.msra.mxu0 0
        %3879 = vmatprep.mubr.bf16.mxu0 %v3842
        %3880 = vmatmul.mubr.bf16.gmra.mrb[0].mxu0 %v3835
        %v3881 = vpop.f32.mrb[0].mxu0
        %v3882 = vadd.f32 %v3806, %v3881
        %v3883 = vpop.f32.mrb[0].mxu0
        %v3884 = vadd.f32 %v3806, %v3883
        %v3885 = vpop.f32.mrb[0].mxu0
        %v3886 = vadd.f32 %v3811, %v3885
        %v3887 = vpop.f32.mrb[0].mxu0
        %v3888 = vadd.f32 %v3811, %v3887
        %3889 = vmatprep.mubr.bf16.mxu0 %v3845
        %3890 = vmatmul.mubr.bf16.gmra.mrb[0].mxu0 %v3837
        %v3891 = vpop.f32.mrb[0].mxu0
        %v3892 = vadd.f32 %v3816, %v3891
        %v3893 = vpop.f32.mrb[0].mxu0
        %v3894 = vadd.f32 %v3816, %v3893
        %v3895 = vpop.f32.mrb[0].mxu0
        %v3896 = vadd.f32 %v3821, %v3895
        %v3897 = vpop.f32.mrb[0].mxu0
        %v3898 = vadd.f32 %v3821, %v3897
        %3899 = vdwg.mxu0
        %3900 = vmatprep.subr.bf16.mxu0 0
        %3901 = vmatpush1.bf16.msra.mxu0 %v3774
        %3902 = vmatprep.subr.bf16.mxu0 0
        %3903 = vmatpush1.bf16.msra.mxu0 %v3777
        %3904 = vmatprep.subr.bf16.mxu0 0
        %3905 = vmatpush1.bf16.msra.mxu0 %v3780
        %3906 = vmatprep.subr.bf16.mxu0 0
        %3907 = vmatpush1.bf16.msra.mxu0 %v3783
        %3908 = vmatprep.subr.bf16.mxu0 0
        %3909 = vmatpush1.bf16.msra.mxu0 %v3786
        %3910 = vmatprep.subr.bf16.mxu0 0
        %3911 = vmatpush1.bf16.msra.mxu0 %v3789
        %3912 = vmatprep.subr.bf16.mxu0 0
        %3913 = vmatpush1.bf16.msra.mxu0 %v3792
        %3914 = vmatprep.subr.bf16.mxu0 0
        %3915 = vmatpush1.bf16.msra.mxu0 %v3795
        %3916 = vmatprep.subr.bf16.mxu0 0
        %3917 = vmatpush1.bf16.msra.mxu0 %v3798
        %3918 = vmatprep.subr.bf16.mxu0 0
        %3919 = vmatpush1.bf16.msra.mxu0 0
        %3920 = vmatprep.subr.bf16.mxu0 0
        %3921 = vmatpush1.bf16.msra.mxu0 0
        %3922 = vmatprep.subr.bf16.mxu0 0
        %3923 = vmatpush1.bf16.msra.mxu0 0
        %3924 = vmatprep.subr.bf16.mxu0 0
        %3925 = vmatpush1.bf16.msra.mxu0 0
        %3926 = vmatprep.subr.bf16.mxu0 0
        %3927 = vmatpush1.bf16.msra.mxu0 0
        %3928 = vmatprep.subr.bf16.mxu0 0
        %3929 = vmatpush1.bf16.msra.mxu0 0
        %3930 = vmatprep.subr.bf16.mxu0 0
        %3931 = vmatpush1.bf16.msra.mxu0 0
        %3932 = vmatprep.mubr.bf16.mxu0 %v3842
        %3933 = vmatmul.mubr.bf16.gmra.mrb[0].mxu0 %v3835
        %v3934 = vpop.f32.mrb[0].mxu0
        %v3935 = vadd.f32 %v3806, %v3934
        %v3936 = vpop.f32.mrb[0].mxu0
        %v3937 = vpop.f32.mrb[0].mxu0
        %v3938 = vadd.f32 %v3811, %v3937
        %v3939 = vpop.f32.mrb[0].mxu0
        %3940 = vmatprep.mubr.bf16.mxu0 %v3845
        %3941 = vmatmul.mubr.bf16.gmra.mrb[0].mxu0 %v3837
        %v3942 = vpop.f32.mrb[0].mxu0
        %v3943 = vadd.f32 %v3816, %v3942
        %v3944 = vpop.f32.mrb[0].mxu0
        %v3945 = vpop.f32.mrb[0].mxu0
        %v3946 = vadd.f32 %v3821, %v3945
        %v3947 = vpop.f32.mrb[0].mxu0
        %3948 = vdwg.mxu0
        %v3949 = vmax.f32 %v3882, 0.0
        %v3950 = vmax.f32 %v3884, 0.0
        %v3951 = vmax.f32 %v3935, 0.0
        %v3952 = vmax.f32 %v3886, 0.0
        %v3953 = vmax.f32 %v3888, 0.0
        %v3954 = vmax.f32 %v3938, 0.0
        %v3955 = vmax.f32 %v3892, 0.0
        %v3956 = vmax.f32 %v3894, 0.0
        %v3957 = vmax.f32 %v3943, 0.0
        %v3958 = vmax.f32 %v3896, 0.0
        %v3959 = vmax.f32 %v3898, 0.0
        %v3960 = vmax.f32 %v3946, 0.0
        %v3961 = vmul.f32 %v3949, %v2122
        %v3962 = vmul.f32 %v3950, %v2126
        %v3963 = vmul.f32 %v3951, %v2130
        %v3964 = vmul.f32 %v3952, %v2122
        %v3965 = vmul.f32 %v3953, %v2126
        %v3966 = vmul.f32 %v3954, %v2130
        %v3967 = vmul.f32 %v3955, %v2122
        %v3968 = vmul.f32 %v3956, %v2126
        %v3969 = vmul.f32 %v3957, %v2130
        %v3970 = vmul.f32 %v3958, %v2122
        %v3971 = vmul.f32 %v3959, %v2126
        %v3972 = vmul.f32 %v3960, %v2130
        %3973 = vrot.lane.b32.xlu0 %v3961, 19
        %v3974 = vpop.permute.xlu0 %3973
        %3975 = vrot.lane.b32.xlu0 %v3964, 19
        %v3976 = vpop.permute.xlu0 %3975
        %3977 = vrot.lane.b32.xlu0 %v3967, 19
        %v3978 = vpop.permute.xlu0 %3977
        %3979 = vrot.lane.b32.xlu0 %v3970, 19
        %v3980 = vpop.permute.xlu0 %3979
        %3981 = vrot.lane.b32.xlu0 %v3962, 19
        %v3982 = vpop.permute.xlu0 %3981
        %3983 = vrot.lane.b32.xlu0 %v3965, 19
        %v3984 = vpop.permute.xlu0 %3983
        %3985 = vrot.lane.b32.xlu0 %v3968, 19
        %v3986 = vpop.permute.xlu0 %3985
        %3987 = vrot.lane.b32.xlu0 %v3971, 19
        %v3988 = vpop.permute.xlu0 %3987
        %3989 = vrot.lane.b32.xlu0 %v3963, 19
        %v3990 = vpop.permute.xlu0 %3989
        %3991 = vrot.lane.b32.xlu0 %v3966, 19
        %v3992 = vpop.permute.xlu0 %3991
        %3993 = vrot.lane.b32.xlu0 %v3969, 19
        %v3994 = vpop.permute.xlu0 %3993
        %3995 = vrot.lane.b32.xlu0 %v3972, 19
        %v3996 = vpop.permute.xlu0 %3995
        %v3997 = vsel %vm700, %v3982, %v3990
        %v3998 = vsel %vm700, %v3984, %v3992
        %v3999 = vsel %vm700, %v3986, %v3994
        %v4000 = vsel %vm700, %v3988, %v3996
        %v4001 = vsel %vm700, %v3974, %v3982
        %v4002 = vsel %vm700, %v3976, %v3984
        %v4003 = vsel %vm700, %v3978, %v3986
        %v4004 = vsel %vm700, %v3980, %v3988
        %v4005 = vsel %vm700, %v3990, %v3974
        %v4006 = vsel %vm700, %v3992, %v3976
        %v4007 = vsel %vm700, %v3994, %v3978
        %v4008 = vsel %vm700, %v3996, %v3980
        %v4009 = vpack.c.bf16 %v4006, %v4005
        %v4010 = vpack.c.bf16 %v4002, %v4001
        %v4011 = vpack.c.bf16 %v3998, %v3997
        %v4012 = vpack.c.bf16 %v4008, %v4007
        %v4013 = vpack.c.bf16 %v4004, %v4003
        %v4014 = vpack.c.bf16 %v4000, %v3999
        %4015 = vst [vmem:[#allocation2] sm:$0xff] %v4009
        %4016 = vst [vmem:[#allocation2 + $0x8] sm:$0xff] %v4010
        %4017 = vst [vmem:[#allocation2 + $0x10] sm:$0xff] %v4011
        %4018 = vst [vmem:[#allocation2 + $0x18] sm:$0xff] %v4012
        %4019 = vst [vmem:[#allocation2 + $0x20] sm:$0xff] %v4013
        %4020 = vst [vmem:[#allocation2 + $0x28] sm:$0xff] %v4014
        %4021 = vrot.lane.b32.xlu0 %v3961, 18
        %v4022 = vpop.permute.xlu0 %4021
        %4023 = vrot.lane.b32.xlu0 %v3964, 18
        %v4024 = vpop.permute.xlu0 %4023
        %4025 = vrot.lane.b32.xlu0 %v3967, 18
        %v4026 = vpop.permute.xlu0 %4025
        %4027 = vrot.lane.b32.xlu0 %v3970, 18
        %v4028 = vpop.permute.xlu0 %4027
        %4029 = vrot.lane.b32.xlu0 %v3962, 18
        %v4030 = vpop.permute.xlu0 %4029
        %4031 = vrot.lane.b32.xlu0 %v3965, 18
        %v4032 = vpop.permute.xlu0 %4031
        %4033 = vrot.lane.b32.xlu0 %v3968, 18
        %v4034 = vpop.permute.xlu0 %4033
        %4035 = vrot.lane.b32.xlu0 %v3971, 18
        %v4036 = vpop.permute.xlu0 %4035
        %4037 = vrot.lane.b32.xlu0 %v3963, 18
        %v4038 = vpop.permute.xlu0 %4037
        %4039 = vrot.lane.b32.xlu0 %v3966, 18
        %v4040 = vpop.permute.xlu0 %4039
        %4041 = vrot.lane.b32.xlu0 %v3969, 18
        %v4042 = vpop.permute.xlu0 %4041
        %4043 = vrot.lane.b32.xlu0 %v3972, 18
        %v4044 = vpop.permute.xlu0 %4043
        %v4045 = vsel %vm718, %v4030, %v4038
        %v4046 = vsel %vm718, %v4032, %v4040
        %v4047 = vsel %vm718, %v4034, %v4042
        %v4048 = vsel %vm718, %v4036, %v4044
        %v4049 = vsel %vm718, %v4022, %v4030
        %v4050 = vsel %vm718, %v4024, %v4032
        %v4051 = vsel %vm718, %v4026, %v4034
        %v4052 = vsel %vm718, %v4028, %v4036
        %v4053 = vsel %vm718, %v4038, %v4022
        %v4054 = vsel %vm718, %v4040, %v4024
        %v4055 = vsel %vm718, %v4042, %v4026
        %v4056 = vsel %vm718, %v4044, %v4028
        %v4057 = vpack.c.bf16 %v4054, %v4053
        %v4058 = vpack.c.bf16 %v4050, %v4049
        %v4059 = vpack.c.bf16 %v4046, %v4045
        %v4060 = vpack.c.bf16 %v4056, %v4055
        %v4061 = vpack.c.bf16 %v4052, %v4051
        %v4062 = vpack.c.bf16 %v4048, %v4047
        %4063 = vst [vmem:[#allocation2 + $0x30] sm:$0xff] %v4057
        %4064 = vst [vmem:[#allocation2 + $0x38] sm:$0xff] %v4058
        %4065 = vst [vmem:[#allocation2 + $0x40] sm:$0xff] %v4059
        %4066 = vst [vmem:[#allocation2 + $0x48] sm:$0xff] %v4060
        %4067 = vst [vmem:[#allocation2 + $0x50] sm:$0xff] %v4061
        %4068 = vst [vmem:[#allocation2 + $0x58] sm:$0xff] %v4062
        %4069 = vrot.lane.b32.xlu0 %v3961, 17
        %v4070 = vpop.permute.xlu0 %4069
        %4071 = vrot.lane.b32.xlu0 %v3964, 17
        %v4072 = vpop.permute.xlu0 %4071
        %4073 = vrot.lane.b32.xlu0 %v3967, 17
        %v4074 = vpop.permute.xlu0 %4073
        %4075 = vrot.lane.b32.xlu0 %v3970, 17
        %v4076 = vpop.permute.xlu0 %4075
        %4077 = vrot.lane.b32.xlu0 %v3962, 17
        %v4078 = vpop.permute.xlu0 %4077
        %4079 = vrot.lane.b32.xlu0 %v3965, 17
        %v4080 = vpop.permute.xlu0 %4079
        %4081 = vrot.lane.b32.xlu0 %v3968, 17
        %v4082 = vpop.permute.xlu0 %4081
        %4083 = vrot.lane.b32.xlu0 %v3971, 17
        %v4084 = vpop.permute.xlu0 %4083
        %4085 = vrot.lane.b32.xlu0 %v3963, 17
        %v4086 = vpop.permute.xlu0 %4085
        %4087 = vrot.lane.b32.xlu0 %v3966, 17
        %v4088 = vpop.permute.xlu0 %4087
        %4089 = vrot.lane.b32.xlu0 %v3969, 17
        %v4090 = vpop.permute.xlu0 %4089
        %4091 = vrot.lane.b32.xlu0 %v3972, 17
        %v4092 = vpop.permute.xlu0 %4091
        %v4093 = vsel %vm992, %v4078, %v4086
        %v4094 = vsel %vm992, %v4080, %v4088
        %v4095 = vsel %vm992, %v4082, %v4090
        %v4096 = vsel %vm992, %v4084, %v4092
        %v4097 = vsel %vm992, %v4070, %v4078
        %v4098 = vsel %vm992, %v4072, %v4080
        %v4099 = vsel %vm992, %v4074, %v4082
        %v4100 = vsel %vm992, %v4076, %v4084
        %v4101 = vsel %vm992, %v4086, %v4070
        %v4102 = vsel %vm992, %v4088, %v4072
        %v4103 = vsel %vm992, %v4090, %v4074
        %v4104 = vsel %vm992, %v4092, %v4076
        %v4105 = vpack.c.bf16 %v4102, %v4101
        %v4106 = vpack.c.bf16 %v4098, %v4097
        %v4107 = vpack.c.bf16 %v4094, %v4093
        %v4108 = vpack.c.bf16 %v4104, %v4103
        %v4109 = vpack.c.bf16 %v4100, %v4099
        %v4110 = vpack.c.bf16 %v4096, %v4095
        %4111 = vst [vmem:[#allocation2 + $0x60] sm:$0xff] %v4105
        %4112 = vst [vmem:[#allocation2 + $0x68] sm:$0xff] %v4106
        %4113 = vst [vmem:[#allocation2 + $0x70] sm:$0xff] %v4107
        %4114 = vst [vmem:[#allocation2 + $0x78] sm:$0xff] %v4108
        %4115 = vst [vmem:[#allocation2 + $0x80] sm:$0xff] %v4109
        %4116 = vst [vmem:[#allocation2 + $0x88] sm:$0xff] %v4110
        %4117 = vrot.lane.b32.xlu0 %v3961, 1
        %v4118 = vpop.permute.xlu0 %4117
        %4119 = vrot.lane.b32.xlu0 %v3964, 1
        %v4120 = vpop.permute.xlu0 %4119
        %4121 = vrot.lane.b32.xlu0 %v3967, 1
        %v4122 = vpop.permute.xlu0 %4121
        %4123 = vrot.lane.b32.xlu0 %v3970, 1
        %v4124 = vpop.permute.xlu0 %4123
        %4125 = vrot.lane.b32.xlu0 %v3962, 1
        %v4126 = vpop.permute.xlu0 %4125
        %4127 = vrot.lane.b32.xlu0 %v3965, 1
        %v4128 = vpop.permute.xlu0 %4127
        %4129 = vrot.lane.b32.xlu0 %v3968, 1
        %v4130 = vpop.permute.xlu0 %4129
        %4131 = vrot.lane.b32.xlu0 %v3971, 1
        %v4132 = vpop.permute.xlu0 %4131
        %4133 = vrot.lane.b32.xlu0 %v3963, 1
        %v4134 = vpop.permute.xlu0 %4133
        %4135 = vrot.lane.b32.xlu0 %v3966, 1
        %v4136 = vpop.permute.xlu0 %4135
        %4137 = vrot.lane.b32.xlu0 %v3969, 1
        %v4138 = vpop.permute.xlu0 %4137
        %4139 = vrot.lane.b32.xlu0 %v3972, 1
        %v4140 = vpop.permute.xlu0 %4139
        %v4141 = vsel %vm1149, %v4126, %v4134
        %v4142 = vsel %vm1149, %v4128, %v4136
        %v4143 = vsel %vm1149, %v4130, %v4138
        %v4144 = vsel %vm1149, %v4132, %v4140
        %v4145 = vsel %vm1149, %v4118, %v4126
        %v4146 = vsel %vm1149, %v4120, %v4128
        %v4147 = vsel %vm1149, %v4122, %v4130
        %v4148 = vsel %vm1149, %v4124, %v4132
        %v4149 = vsel %vm1149, %v4134, %v4118
        %v4150 = vsel %vm1149, %v4136, %v4120
        %v4151 = vsel %vm1149, %v4138, %v4122
        %v4152 = vsel %vm1149, %v4140, %v4124
        %v4153 = vpack.c.bf16 %v4150, %v4149
        %v4154 = vpack.c.bf16 %v4146, %v4145
        %v4155 = vpack.c.bf16 %v4142, %v4141
        %v4156 = vpack.c.bf16 %v4152, %v4151
        %v4157 = vpack.c.bf16 %v4148, %v4147
        %v4158 = vpack.c.bf16 %v4144, %v4143
        %4159 = vst [vmem:[#allocation2 + $0x90] sm:$0xff] %v4153
        %4160 = vst [vmem:[#allocation2 + $0x98] sm:$0xff] %v4154
        %4161 = vst [vmem:[#allocation2 + $0xa0] sm:$0xff] %v4155
        %4162 = vst [vmem:[#allocation2 + $0xa8] sm:$0xff] %v4156
        %4163 = vst [vmem:[#allocation2 + $0xb0] sm:$0xff] %v4157
        %4164 = vst [vmem:[#allocation2 + $0xb8] sm:$0xff] %v4158
        %v4165 = vpack.c.bf16 %v3964, %v3961
        %v4166 = vpack.c.bf16 %v3965, %v3962
        %v4167 = vpack.c.bf16 %v3966, %v3963
        %v4168 = vpack.c.bf16 %v3970, %v3967
        %v4169 = vpack.c.bf16 %v3971, %v3968
        %v4170 = vpack.c.bf16 %v3972, %v3969
        %4171 = vst [vmem:[#allocation2 + $0xc0] sm:$0xff] %v4165
        %4172 = vst [vmem:[#allocation2 + $0xc8] sm:$0xff] %v4166
        %4173 = vst [vmem:[#allocation2 + $0xd0] sm:$0xff] %v4167
        %4174 = vst [vmem:[#allocation2 + $0xd8] sm:$0xff] %v4168
        %4175 = vst [vmem:[#allocation2 + $0xe0] sm:$0xff] %v4169
        %4176 = vst [vmem:[#allocation2 + $0xe8] sm:$0xff] %v4170
        %4177 = vrot.lane.b32.xlu0 %v3961, 127
        %v4178 = vpop.permute.xlu0 %4177
        %4179 = vrot.lane.b32.xlu0 %v3964, 127
        %v4180 = vpop.permute.xlu0 %4179
        %4181 = vrot.lane.b32.xlu0 %v3967, 127
        %v4182 = vpop.permute.xlu0 %4181
        %4183 = vrot.lane.b32.xlu0 %v3970, 127
        %v4184 = vpop.permute.xlu0 %4183
        %4185 = vrot.lane.b32.xlu0 %v3962, 127
        %v4186 = vpop.permute.xlu0 %4185
        %4187 = vrot.lane.b32.xlu0 %v3965, 127
        %v4188 = vpop.permute.xlu0 %4187
        %4189 = vrot.lane.b32.xlu0 %v3968, 127
        %v4190 = vpop.permute.xlu0 %4189
        %4191 = vrot.lane.b32.xlu0 %v3971, 127
        %v4192 = vpop.permute.xlu0 %4191
        %4193 = vrot.lane.b32.xlu0 %v3963, 127
        %v4194 = vpop.permute.xlu0 %4193
        %4195 = vrot.lane.b32.xlu0 %v3966, 127
        %v4196 = vpop.permute.xlu0 %4195
        %4197 = vrot.lane.b32.xlu0 %v3969, 127
        %v4198 = vpop.permute.xlu0 %4197
        %4199 = vrot.lane.b32.xlu0 %v3972, 127
        %v4200 = vpop.permute.xlu0 %4199
        %v4201 = vsel %vm1453, %v4186, %v4194
        %v4202 = vsel %vm1453, %v4188, %v4196
        %v4203 = vsel %vm1453, %v4190, %v4198
        %v4204 = vsel %vm1453, %v4192, %v4200
        %v4205 = vsel %vm1453, %v4178, %v4186
        %v4206 = vsel %vm1453, %v4180, %v4188
        %v4207 = vsel %vm1453, %v4182, %v4190
        %v4208 = vsel %vm1453, %v4184, %v4192
        %v4209 = vsel %vm1453, %v4194, %v4178
        %v4210 = vsel %vm1453, %v4196, %v4180
        %v4211 = vsel %vm1453, %v4198, %v4182
        %v4212 = vsel %vm1453, %v4200, %v4184
        %v4213 = vpack.c.bf16 %v4206, %v4205
        %v4214 = vpack.c.bf16 %v4202, %v4201
        %v4215 = vpack.c.bf16 %v4210, %v4209
        %v4216 = vpack.c.bf16 %v4208, %v4207
        %v4217 = vpack.c.bf16 %v4204, %v4203
        %v4218 = vpack.c.bf16 %v4212, %v4211
        %4219 = vst [vmem:[#allocation2 + $0xf0] sm:$0xff] %v4213
        %4220 = vst [vmem:[#allocation2 + $0xf8] sm:$0xff] %v4214
        %4221 = vst [vmem:[#allocation2 + $0x100] sm:$0xff] %v4215
        %4222 = vst [vmem:[#allocation2 + $0x108] sm:$0xff] %v4216
        %4223 = vst [vmem:[#allocation2 + $0x110] sm:$0xff] %v4217
        %4224 = vst [vmem:[#allocation2 + $0x118] sm:$0xff] %v4218
        %4225 = vrot.lane.b32.xlu0 %v3961, 111
        %v4226 = vpop.permute.xlu0 %4225
        %4227 = vrot.lane.b32.xlu0 %v3964, 111
        %v4228 = vpop.permute.xlu0 %4227
        %4229 = vrot.lane.b32.xlu0 %v3967, 111
        %v4230 = vpop.permute.xlu0 %4229
        %4231 = vrot.lane.b32.xlu0 %v3970, 111
        %v4232 = vpop.permute.xlu0 %4231
        %4233 = vrot.lane.b32.xlu0 %v3962, 111
        %v4234 = vpop.permute.xlu0 %4233
        %4235 = vrot.lane.b32.xlu0 %v3965, 111
        %v4236 = vpop.permute.xlu0 %4235
        %4237 = vrot.lane.b32.xlu0 %v3968, 111
        %v4238 = vpop.permute.xlu0 %4237
        %4239 = vrot.lane.b32.xlu0 %v3971, 111
        %v4240 = vpop.permute.xlu0 %4239
        %4241 = vrot.lane.b32.xlu0 %v3963, 111
        %v4242 = vpop.permute.xlu0 %4241
        %4243 = vrot.lane.b32.xlu0 %v3966, 111
        %v4244 = vpop.permute.xlu0 %4243
        %4245 = vrot.lane.b32.xlu0 %v3969, 111
        %v4246 = vpop.permute.xlu0 %4245
        %4247 = vrot.lane.b32.xlu0 %v3972, 111
        %v4248 = vpop.permute.xlu0 %4247
        %v4249 = vsel %vm1610, %v4234, %v4242
        %v4250 = vsel %vm1610, %v4236, %v4244
        %v4251 = vsel %vm1610, %v4238, %v4246
        %v4252 = vsel %vm1610, %v4240, %v4248
        %v4253 = vsel %vm1610, %v4226, %v4234
        %v4254 = vsel %vm1610, %v4228, %v4236
        %v4255 = vsel %vm1610, %v4230, %v4238
        %v4256 = vsel %vm1610, %v4232, %v4240
        %v4257 = vsel %vm1610, %v4242, %v4226
        %v4258 = vsel %vm1610, %v4244, %v4228
        %v4259 = vsel %vm1610, %v4246, %v4230
        %v4260 = vsel %vm1610, %v4248, %v4232
        %v4261 = vpack.c.bf16 %v4254, %v4253
        %v4262 = vpack.c.bf16 %v4250, %v4249
        %v4263 = vpack.c.bf16 %v4258, %v4257
        %v4264 = vpack.c.bf16 %v4256, %v4255
        %v4265 = vpack.c.bf16 %v4252, %v4251
        %v4266 = vpack.c.bf16 %v4260, %v4259
        %4267 = vst [vmem:[#allocation2 + $0x120] sm:$0xff] %v4261
        %4268 = vst [vmem:[#allocation2 + $0x128] sm:$0xff] %v4262
        %4269 = vst [vmem:[#allocation2 + $0x130] sm:$0xff] %v4263
        %4270 = vst [vmem:[#allocation2 + $0x138] sm:$0xff] %v4264
        %4271 = vst [vmem:[#allocation2 + $0x140] sm:$0xff] %v4265
        %4272 = vst [vmem:[#allocation2 + $0x148] sm:$0xff] %v4266
        %4273 = vrot.lane.b32.xlu0 %v3961, 110
        %v4274 = vpop.permute.xlu0 %4273
        %4275 = vrot.lane.b32.xlu0 %v3964, 110
        %v4276 = vpop.permute.xlu0 %4275
        %4277 = vrot.lane.b32.xlu0 %v3967, 110
        %v4278 = vpop.permute.xlu0 %4277
        %4279 = vrot.lane.b32.xlu0 %v3970, 110
        %v4280 = vpop.permute.xlu0 %4279
        %4281 = vrot.lane.b32.xlu0 %v3962, 110
        %v4282 = vpop.permute.xlu0 %4281
        %4283 = vrot.lane.b32.xlu0 %v3965, 110
        %v4284 = vpop.permute.xlu0 %4283
        %4285 = vrot.lane.b32.xlu0 %v3968, 110
        %v4286 = vpop.permute.xlu0 %4285
        %4287 = vrot.lane.b32.xlu0 %v3971, 110
        %v4288 = vpop.permute.xlu0 %4287
        %4289 = vrot.lane.b32.xlu0 %v3963, 110
        %v4290 = vpop.permute.xlu0 %4289
        %4291 = vrot.lane.b32.xlu0 %v3966, 110
        %v4292 = vpop.permute.xlu0 %4291
        %4293 = vrot.lane.b32.xlu0 %v3969, 110
        %v4294 = vpop.permute.xlu0 %4293
        %4295 = vrot.lane.b32.xlu0 %v3972, 110
        %v4296 = vpop.permute.xlu0 %4295
        %v4297 = vsel %vm1767, %v4282, %v4290
        %v4298 = vsel %vm1767, %v4284, %v4292
        %v4299 = vsel %vm1767, %v4286, %v4294
        %v4300 = vsel %vm1767, %v4288, %v4296
        %v4301 = vsel %vm1767, %v4274, %v4282
        %v4302 = vsel %vm1767, %v4276, %v4284
        %v4303 = vsel %vm1767, %v4278, %v4286
        %v4304 = vsel %vm1767, %v4280, %v4288
        %v4305 = vsel %vm1767, %v4290, %v4274
        %v4306 = vsel %vm1767, %v4292, %v4276
        %v4307 = vsel %vm1767, %v4294, %v4278
        %v4308 = vsel %vm1767, %v4296, %v4280
        %v4309 = vpack.c.bf16 %v4302, %v4301
        %v4310 = vpack.c.bf16 %v4298, %v4297
        %v4311 = vpack.c.bf16 %v4306, %v4305
        %v4312 = vpack.c.bf16 %v4304, %v4303
        %v4313 = vpack.c.bf16 %v4300, %v4299
        %v4314 = vpack.c.bf16 %v4308, %v4307
        %4315 = vst [vmem:[#allocation2 + $0x150] sm:$0xff] %v4309
        %4316 = vst [vmem:[#allocation2 + $0x158] sm:$0xff] %v4310
        %4317 = vst [vmem:[#allocation2 + $0x160] sm:$0xff] %v4311
        %4318 = vst [vmem:[#allocation2 + $0x168] sm:$0xff] %v4312
        %4319 = vst [vmem:[#allocation2 + $0x170] sm:$0xff] %v4313
        %4320 = vst [vmem:[#allocation2 + $0x178] sm:$0xff] %v4314
        %4321 = vrot.lane.b32.xlu0 %v3961, 109
        %v4322 = vpop.permute.xlu0 %4321
        %4323 = vrot.lane.b32.xlu0 %v3964, 109
        %v4324 = vpop.permute.xlu0 %4323
        %4325 = vrot.lane.b32.xlu0 %v3967, 109
        %v4326 = vpop.permute.xlu0 %4325
        %4327 = vrot.lane.b32.xlu0 %v3970, 109
        %v4328 = vpop.permute.xlu0 %4327
        %4329 = vrot.lane.b32.xlu0 %v3962, 109
        %v4330 = vpop.permute.xlu0 %4329
        %4331 = vrot.lane.b32.xlu0 %v3965, 109
        %v4332 = vpop.permute.xlu0 %4331
        %4333 = vrot.lane.b32.xlu0 %v3968, 109
        %v4334 = vpop.permute.xlu0 %4333
        %4335 = vrot.lane.b32.xlu0 %v3971, 109
        %v4336 = vpop.permute.xlu0 %4335
        %4337 = vrot.lane.b32.xlu0 %v3963, 109
        %v4338 = vpop.permute.xlu0 %4337
        %4339 = vrot.lane.b32.xlu0 %v3966, 109
        %v4340 = vpop.permute.xlu0 %4339
        %4341 = vrot.lane.b32.xlu0 %v3969, 109
        %v4342 = vpop.permute.xlu0 %4341
        %4343 = vrot.lane.b32.xlu0 %v3972, 109
        %v4344 = vpop.permute.xlu0 %4343
        %v4345 = vsel %vm1924, %v4330, %v4338
        %v4346 = vsel %vm1924, %v4332, %v4340
        %v4347 = vsel %vm1924, %v4334, %v4342
        %v4348 = vsel %vm1924, %v4336, %v4344
        %v4349 = vsel %vm1924, %v4322, %v4330
        %v4350 = vsel %vm1924, %v4324, %v4332
        %v4351 = vsel %vm1924, %v4326, %v4334
        %v4352 = vsel %vm1924, %v4328, %v4336
        %v4353 = vsel %vm1924, %v4338, %v4322
        %v4354 = vsel %vm1924, %v4340, %v4324
        %v4355 = vsel %vm1924, %v4342, %v4326
        %v4356 = vsel %vm1924, %v4344, %v4328
        %v4357 = vpack.c.bf16 %v4350, %v4349
        %v4358 = vpack.c.bf16 %v4346, %v4345
        %v4359 = vpack.c.bf16 %v4354, %v4353
        %v4360 = vpack.c.bf16 %v4352, %v4351
        %v4361 = vpack.c.bf16 %v4348, %v4347
        %v4362 = vpack.c.bf16 %v4356, %v4355
        %4363 = vst [vmem:[#allocation2 + $0x180] sm:$0xff] %v4357
        %4364 = vst [vmem:[#allocation2 + $0x188] sm:$0xff] %v4358
        %4365 = vst [vmem:[#allocation2 + $0x190] sm:$0xff] %v4359
        %4366 = vst [vmem:[#allocation2 + $0x198] sm:$0xff] %v4360
        %4367 = vst [vmem:[#allocation2 + $0x1a0] sm:$0xff] %v4361
        %4368 = vst [vmem:[#allocation2 + $0x1a8] sm:$0xff] %v4362
        %v4369 = vld [vmem:[%s13] sm:$0x3f]
        %v4370 = vld [vmem:[#allocation2] sm:$0xff]
        %v4371 = vld [vmem:[#allocation2 + $0x8] sm:$0xff]
        %v4372 = vld [vmem:[#allocation2 + $0x10] sm:$0xff]
        %v4373 = vld [vmem:[#allocation2 + $0x18] sm:$0xff]
        %v4374 = vld [vmem:[#allocation2 + $0x20] sm:$0xff]
        %v4375 = vld [vmem:[#allocation2 + $0x28] sm:$0xff]
        %v4376 = vld [vmem:[#allocation2 + $0x30] sm:$0xff]
        %v4377 = vld [vmem:[#allocation2 + $0x38] sm:$0xff]
        %v4378 = vld [vmem:[#allocation2 + $0x40] sm:$0xff]
        %v4379 = vld [vmem:[#allocation2 + $0x48] sm:$0xff]
        %v4380 = vld [vmem:[#allocation2 + $0x50] sm:$0xff]
        %v4381 = vld [vmem:[#allocation2 + $0x58] sm:$0xff]
        %v4382 = vld [vmem:[#allocation2 + $0x60] sm:$0xff]
        %v4383 = vld [vmem:[#allocation2 + $0x68] sm:$0xff]
        %v4384 = vld [vmem:[#allocation2 + $0x70] sm:$0xff]
        %v4385 = vld [vmem:[#allocation2 + $0x78] sm:$0xff]
        %v4386 = vld [vmem:[#allocation2 + $0x80] sm:$0xff]
        %v4387 = vld [vmem:[#allocation2 + $0x88] sm:$0xff]
        %v4388 = vld [vmem:[#allocation2 + $0x90] sm:$0xff]
        %v4389 = vld [vmem:[#allocation2 + $0x98] sm:$0xff]
        %v4390 = vld [vmem:[#allocation2 + $0xa0] sm:$0xff]
        %v4391 = vld [vmem:[#allocation2 + $0xa8] sm:$0xff]
        %v4392 = vld [vmem:[#allocation2 + $0xb0] sm:$0xff]
        %v4393 = vld [vmem:[#allocation2 + $0xb8] sm:$0xff]
        %v4394 = vld [vmem:[#allocation2 + $0xc0] sm:$0xff]
        %v4395 = vld [vmem:[#allocation2 + $0xc8] sm:$0xff]
        %v4396 = vld [vmem:[#allocation2 + $0xd0] sm:$0xff]
        %v4397 = vld [vmem:[#allocation2 + $0xd8] sm:$0xff]
        %v4398 = vld [vmem:[#allocation2 + $0xe0] sm:$0xff]
        %v4399 = vld [vmem:[#allocation2 + $0xe8] sm:$0xff]
        %v4400 = vld [vmem:[#allocation2 + $0xf0] sm:$0xff]
        %v4401 = vld [vmem:[#allocation2 + $0xf8] sm:$0xff]
        %v4402 = vld [vmem:[#allocation2 + $0x100] sm:$0xff]
        %v4403 = vld [vmem:[#allocation2 + $0x108] sm:$0xff]
        %v4404 = vld [vmem:[#allocation2 + $0x110] sm:$0xff]
        %v4405 = vld [vmem:[#allocation2 + $0x118] sm:$0xff]
        %v4406 = vld [vmem:[#allocation2 + $0x120] sm:$0xff]
        %v4407 = vld [vmem:[#allocation2 + $0x128] sm:$0xff]
        %v4408 = vld [vmem:[#allocation2 + $0x130] sm:$0xff]
        %v4409 = vld [vmem:[#allocation2 + $0x138] sm:$0xff]
        %v4410 = vld [vmem:[#allocation2 + $0x140] sm:$0xff]
        %v4411 = vld [vmem:[#allocation2 + $0x148] sm:$0xff]
        %v4412 = vld [vmem:[#allocation2 + $0x150] sm:$0xff]
        %v4413 = vld [vmem:[#allocation2 + $0x158] sm:$0xff]
        %v4414 = vld [vmem:[#allocation2 + $0x160] sm:$0xff]
        %v4415 = vld [vmem:[#allocation2 + $0x168] sm:$0xff]
        %v4416 = vld [vmem:[#allocation2 + $0x170] sm:$0xff]
        %v4417 = vld [vmem:[#allocation2 + $0x178] sm:$0xff]
        %v4418 = vld [vmem:[#allocation2 + $0x180] sm:$0xff]
        %v4419 = vld [vmem:[#allocation2 + $0x188] sm:$0xff]
        %v4420 = vld [vmem:[#allocation2 + $0x190] sm:$0xff]
        %v4421 = vld [vmem:[#allocation2 + $0x198] sm:$0xff]
        %v4422 = vld [vmem:[#allocation2 + $0x1a0] sm:$0xff]
        %v4423 = vld [vmem:[#allocation2 + $0x1a8] sm:$0xff]
        %v4424 = vld [vmem:[%s14] sm:$0xf]
        %4426 = vset.pattern.permute.xlu0 0
        %4427 = vperm.xlu0 %4426, %v4424
        %v4428 = vpop.permute.xlu0 %4427
        %v4431 = vcombine.high %v4369, %v4369
        %v4433 = vunpack.c.l.s4 1983009808
        %v4434 = vunpack.c.0.s8 %v4433
        %v4435 = vlaneseq
        %v4436 = vshrl.u32 %v4435, 7
        %v4437 = vsub.s32 %v4434, %v4436
        %v4438 = vrot.slane %v4369, %v4437
        %v4440 = vunpack.c.l.s4 1983009808
        %v4441 = vunpack.c.0.s8 %v4440
        %v4442 = vlaneseq
        %v4443 = vshrl.u32 %v4442, 7
        %v4444 = vsub.s32 %v4441, %v4443
        %v4445 = vrot.slane %v4431, %v4444
        %v4446 = vcombine.high %v4438, %v4438
        %v4450 = vsel %vm2658, %v4445, 0
        %4452 = vmatprep.subr.bf16.mxu0 %v4371
        %4453 = vmatpush1.bf16.msra.mxu0 %v4370
        %4454 = vmatprep.subr.bf16.mxu0 %v4374
        %4455 = vmatpush1.bf16.msra.mxu0 %v4373
        %4456 = vmatprep.subr.bf16.mxu0 %v4377
        %4457 = vmatpush1.bf16.msra.mxu0 %v4376
        %4458 = vmatprep.subr.bf16.mxu0 %v4380
        %4459 = vmatpush1.bf16.msra.mxu0 %v4379
        %4460 = vmatprep.subr.bf16.mxu0 %v4383
        %4461 = vmatpush1.bf16.msra.mxu0 %v4382
        %4462 = vmatprep.subr.bf16.mxu0 %v4386
        %4463 = vmatpush1.bf16.msra.mxu0 %v4385
        %4464 = vmatprep.subr.bf16.mxu0 %v4389
        %4465 = vmatpush1.bf16.msra.mxu0 %v4388
        %4466 = vmatprep.subr.bf16.mxu0 %v4392
        %4467 = vmatpush1.bf16.msra.mxu0 %v4391
        %4468 = vmatprep.subr.bf16.mxu0 %v4395
        %4469 = vmatpush1.bf16.msra.mxu0 %v4394
        %4470 = vmatprep.subr.bf16.mxu0 %v4398
        %4471 = vmatpush1.bf16.msra.mxu0 %v4397
        %4472 = vmatprep.subr.bf16.mxu0 %v4401
        %4473 = vmatpush1.bf16.msra.mxu0 %v4400
        %4474 = vmatprep.subr.bf16.mxu0 %v4404
        %4475 = vmatpush1.bf16.msra.mxu0 %v4403
        %4476 = vmatprep.subr.bf16.mxu0 %v4407
        %4477 = vmatpush1.bf16.msra.mxu0 %v4406
        %4478 = vmatprep.subr.bf16.mxu0 %v4410
        %4479 = vmatpush1.bf16.msra.mxu0 %v4409
        %4480 = vmatprep.subr.bf16.mxu0 %v4413
        %4481 = vmatpush1.bf16.msra.mxu0 %v4412
        %4482 = vmatprep.subr.bf16.mxu0 %v4416
        %4483 = vmatpush1.bf16.msra.mxu0 %v4415
        %4484 = vmatprep.mubr.bf16.mxu0 %v4446
        %4485 = vmatmul.mubr.bf16.gmra.mrb[0].mxu0 %v4438
        %v4486 = vpop.f32.mrb[0].mxu0
        %v4487 = vadd.f32 %v4428, %v4486
        %v4488 = vpop.f32.mrb[0].mxu0
        %v4489 = vadd.f32 %v4428, %v4488
        %v4490 = vpop.f32.mrb[0].mxu0
        %v4491 = vpop.f32.mrb[0].mxu0
        %4492 = vdwg.mxu0
        %4493 = vmatprep.subr.bf16.mxu0 %v4419
        %4494 = vmatpush1.bf16.msra.mxu0 %v4418
        %4495 = vmatprep.subr.bf16.mxu0 %v4422
        %4496 = vmatpush1.bf16.msra.mxu0 %v4421
        %4497 = vmatprep.subr.bf16.mxu0 0
        %4498 = vmatpush1.bf16.msra.mxu0 0
        %4499 = vmatprep.subr.bf16.mxu0 0
        %4500 = vmatpush1.bf16.msra.mxu0 0
        %4501 = vmatprep.subr.bf16.mxu0 0
        %4502 = vmatpush1.bf16.msra.mxu0 0
        %4503 = vmatprep.subr.bf16.mxu0 0
        %4504 = vmatpush1.bf16.msra.mxu0 0
        %4505 = vmatprep.subr.bf16.mxu0 0
        %4506 = vmatpush1.bf16.msra.mxu0 0
        %4507 = vmatprep.subr.bf16.mxu0 0
        %4508 = vmatpush1.bf16.msra.mxu0 0
        %4509 = vmatprep.subr.bf16.mxu0 0
        %4510 = vmatpush1.bf16.msra.mxu0 0
        %4511 = vmatprep.subr.bf16.mxu0 0
        %4512 = vmatpush1.bf16.msra.mxu0 0
        %4513 = vmatprep.subr.bf16.mxu0 0
        %4514 = vmatpush1.bf16.msra.mxu0 0
        %4515 = vmatprep.subr.bf16.mxu0 0
        %4516 = vmatpush1.bf16.msra.mxu0 0
        %4517 = vmatprep.subr.bf16.mxu0 0
        %4518 = vmatpush1.bf16.msra.mxu0 0
        %4519 = vmatprep.subr.bf16.mxu0 0
        %4520 = vmatpush1.bf16.msra.mxu0 0
        %4521 = vmatprep.subr.bf16.mxu0 0
        %4522 = vmatpush1.bf16.msra.mxu0 0
        %4523 = vmatprep.subr.bf16.mxu0 0
        %4524 = vmatpush1.bf16.msra.mxu0 0
        %4525 = vmatprep.mubr.bf16.mxu0 0
        %4526 = vmatmul.mubr.bf16.gmra.mrb[0].mxu0 %v4450
        %v4527 = vpop.f32.mrb[0].mxu0
        %v4528 = vadd.f32 %v4487, %v4527
        %v4529 = vpop.f32.mrb[0].mxu0
        %v4530 = vadd.f32 %v4489, %v4529
        %v4531 = vpop.f32.mrb[0].mxu0
        %v4532 = vpop.f32.mrb[0].mxu0
        %4533 = vdwg.mxu0
        %4534 = vmatprep.subr.bf16.mxu0 0
        %4535 = vmatpush1.bf16.msra.mxu0 %v4372
        %4536 = vmatprep.subr.bf16.mxu0 0
        %4537 = vmatpush1.bf16.msra.mxu0 %v4375
        %4538 = vmatprep.subr.bf16.mxu0 0
        %4539 = vmatpush1.bf16.msra.mxu0 %v4378
        %4540 = vmatprep.subr.bf16.mxu0 0
        %4541 = vmatpush1.bf16.msra.mxu0 %v4381
        %4542 = vmatprep.subr.bf16.mxu0 0
        %4543 = vmatpush1.bf16.msra.mxu0 %v4384
        %4544 = vmatprep.subr.bf16.mxu0 0
        %4545 = vmatpush1.bf16.msra.mxu0 %v4387
        %4546 = vmatprep.subr.bf16.mxu0 0
        %4547 = vmatpush1.bf16.msra.mxu0 %v4390
        %4548 = vmatprep.subr.bf16.mxu0 0
        %4549 = vmatpush1.bf16.msra.mxu0 %v4393
        %4550 = vmatprep.subr.bf16.mxu0 0
        %4551 = vmatpush1.bf16.msra.mxu0 %v4396
        %4552 = vmatprep.subr.bf16.mxu0 0
        %4553 = vmatpush1.bf16.msra.mxu0 %v4399
        %4554 = vmatprep.subr.bf16.mxu0 0
        %4555 = vmatpush1.bf16.msra.mxu0 %v4402
        %4556 = vmatprep.subr.bf16.mxu0 0
        %4557 = vmatpush1.bf16.msra.mxu0 %v4405
        %4558 = vmatprep.subr.bf16.mxu0 0
        %4559 = vmatpush1.bf16.msra.mxu0 %v4408
        %4560 = vmatprep.subr.bf16.mxu0 0
        %4561 = vmatpush1.bf16.msra.mxu0 %v4411
        %4562 = vmatprep.subr.bf16.mxu0 0
        %4563 = vmatpush1.bf16.msra.mxu0 %v4414
        %4564 = vmatprep.subr.bf16.mxu0 0
        %4565 = vmatpush1.bf16.msra.mxu0 %v4417
        %4566 = vmatprep.mubr.bf16.mxu0 %v4446
        %4567 = vmatmul.mubr.bf16.gmra.mrb[0].mxu0 %v4438
        %v4568 = vpop.f32.mrb[0].mxu0
        %v4569 = vadd.f32 %v4428, %v4568
        %v4570 = vpop.f32.mrb[0].mxu0
        %v4571 = vpop.f32.mrb[0].mxu0
        %v4572 = vpop.f32.mrb[0].mxu0
        %4573 = vdwg.mxu0
        %4574 = vmatprep.subr.bf16.mxu0 0
        %4575 = vmatpush1.bf16.msra.mxu0 %v4420
        %4576 = vmatprep.subr.bf16.mxu0 0
        %4577 = vmatpush1.bf16.msra.mxu0 %v4423
        %4578 = vmatprep.subr.bf16.mxu0 0
        %4579 = vmatpush1.bf16.msra.mxu0 0
        %4580 = vmatprep.subr.bf16.mxu0 0
        %4581 = vmatpush1.bf16.msra.mxu0 0
        %4582 = vmatprep.subr.bf16.mxu0 0
        %4583 = vmatpush1.bf16.msra.mxu0 0
        %4584 = vmatprep.subr.bf16.mxu0 0
        %4585 = vmatpush1.bf16.msra.mxu0 0
        %4586 = vmatprep.subr.bf16.mxu0 0
        %4587 = vmatpush1.bf16.msra.mxu0 0
        %4588 = vmatprep.subr.bf16.mxu0 0
        %4589 = vmatpush1.bf16.msra.mxu0 0
        %4590 = vmatprep.subr.bf16.mxu0 0
        %4591 = vmatpush1.bf16.msra.mxu0 0
        %4592 = vmatprep.subr.bf16.mxu0 0
        %4593 = vmatpush1.bf16.msra.mxu0 0
        %4594 = vmatprep.subr.bf16.mxu0 0
        %4595 = vmatpush1.bf16.msra.mxu0 0
        %4596 = vmatprep.subr.bf16.mxu0 0
        %4597 = vmatpush1.bf16.msra.mxu0 0
        %4598 = vmatprep.subr.bf16.mxu0 0
        %4599 = vmatpush1.bf16.msra.mxu0 0
        %4600 = vmatprep.subr.bf16.mxu0 0
        %4601 = vmatpush1.bf16.msra.mxu0 0
        %4602 = vmatprep.subr.bf16.mxu0 0
        %4603 = vmatpush1.bf16.msra.mxu0 0
        %4604 = vmatprep.subr.bf16.mxu0 0
        %4605 = vmatpush1.bf16.msra.mxu0 0
        %4606 = vmatprep.mubr.bf16.mxu0 0
        %4607 = vmatmul.mubr.bf16.gmra.mrb[0].mxu0 %v4450
        %v4608 = vpop.f32.mrb[0].mxu0
        %v4609 = vadd.f32 %v4569, %v4608
        %v4610 = vpop.f32.mrb[0].mxu0
        %v4611 = vpop.f32.mrb[0].mxu0
        %v4612 = vpop.f32.mrb[0].mxu0
        %4613 = vdwg.mxu0
        %v4614 = vmul.f32 %v4528, %v2122
        %v4615 = vmul.f32 %v4530, %v2126
        %v4616 = vmul.f32 %v4609, %v2130
        %v4619 = vcombine.low %v4614, %v4615
        %4621 = vst [vmem:[%s670] sm:$0xff] %v4619
        %4622 = vst [vmem:[%s670 + $0x8] sm:$0xf] %v4616
        %v4623 = vsub.f32 %v4614, %v683
        %v4624 = vsub.f32 %v4615, %v690
        %v4625 = vsub.f32 %v4616, %v684
        %v4626 = vmul.f32 %v4623, %v2122
        %v4627 = vmul.f32 %v4624, %v2126
        %v4628 = vmul.f32 %v4625, %v2130
        %v4629 = vmul.f32 %v4626, %v4626
        %v4630 = vmul.f32 %v4627, %v4627
        %v4631 = vmul.f32 %v4628, %v4628
        %vm4632 = vcmask 1043456
        %v4633 = vsel %vm4632, %v4629, 0.0
        %v4634 = vsel %vm4632, %v4630, 0.0
        %v4635 = vadd.f32 %v4633, %v4634
        %v4636 = vsel %vm4632, %v4631, 0.0
        %v4637 = vadd.f32 %v4635, %v4636
        %4638 = vadd.xlane.f32.xlu0 %v4637
        %v4639 = vpop.xlane.xlu0 %4638
        %v4640 = vsel %vm4632, %v4639, 0.0
        %v4641 = vrot.slane %v4640, 4
        %v4642 = vadd.f32 %v4640, %v4641
        %v4643 = vrot.slane %v4642, 2
        %v4644 = vadd.f32 %v4642, %v4643
        %v4645 = vrot.slane %v4644, 1
        %v4646 = vadd.f32 %v4644, %v4645
        %vm4647 = vcmp.eq.s32.totalorder %v3213, 0
        %v4648 = vsel %vm4647, %v3569, %v4646
        %vm4649 = vcmask 1024
        %4650 = vst.msk [vmem:[%s680] sm:$0x3] %vm4649, %v4648
        %s4651 = sand.u32 %s360, 1
        %s4652 = sand.u32 %s360, 1
        %s4653 = smul.addr %s4652, 48
        %s4654 = scalar_lea.vmem [#allocation3], %s4653
        %s4655 = sand.u32 %s386, 1
        %s4656 = sand.u32 %s386, 1
        %s4657 = smul.addr %s4656, 48
        %s4658 = scalar_lea.vmem [#allocation4], %s4657
        %s4659 = smul.u32 3, %s32
        %p4660 = scmp.lt.s32.totalorder %s4659, 5
        %s4661 = scalar_select %p4660, %s4659, 5
        %s4662 = scalar_lea.vmem %s17, %s4661
        %s4663 = smul.u32 3, %s32
        %p4664 = scmp.lt.s32.totalorder %s4663, 5
        %s4665 = scalar_select %p4664, %s4663, 5
        %s4666 = smul.addr %s4665, 4
        %s4667 = scalar_lea.vmem %s18, %s4666
        %p4668 = scmp.lt.s32.totalorder %s32, 1
        %s4669 = scalar_select %p4668, %s32, 1
        %s4670 = smul.addr %s4669, 4
        %s4671 = smul.addr %s4670, 8
        %s4672 = scalar_lea.vmem %s19, %s4671
        %p4673 = scmp.lt.s32.totalorder %s32, 1
        %s4674 = scalar_select %p4673, %s32, 1
        %s4675 = smul.addr %s4674, 2
        %s4676 = scalar_lea.vmem %s20, %s4675
        // Predicated region
        $region81: #{vqvae_forward.1} parent=79 // pred_check
          %p4677 = pneg %p370
        $region82: #{vqvae_forward.1} parent=79 // pred_check_branch
          %4679 = sbr.rel (%p4677) target = $region84
        $region83: #{vqvae_forward.1} parent=79 // pred_region
          %s4680 = smul.u32 3, %s32
          %s4681 = smul.addr %s4680, 8
          %s4682 = scalar_lea.vmem %s15, %s4681
          // Predicated region
          $region85: #{vqvae_forward.1} parent=83 // pred_check
            _
          $region86: #{vqvae_forward.1} parent=83 // pred_check_branch
            %4684 = sbr.rel (0) target = $region88
          $region87: #{vqvae_forward.1} parent=83 // pred_region
            // Predicated region
            $region89: #{vqvae_forward.1} parent=87 // pred_check
              _
            $region90: #{vqvae_forward.1} parent=87 // pred_check_branch
              %4686 = sbr.rel (0) target = $region92
            $region91: #{vqvae_forward.1} parent=87 // pred_region
              loop: start=0, step=1, limit=1
              $region93: #{vqvae_forward.1} parent=91 // loop_pre_header
                _
              $region94: #{vqvae_forward.1} parent=91 // loop_header
                %s4688 = sphi 0, %s4692
                %p4689 = scmp.ge.s32.totalorder %s4688, 1
                %s4693 = sphi %s4654, %s4654
                %s4694 = sphi %s4682, %s4682
              $region95: #{vqvae_forward.1} parent=91 // loop_header_branch
                %4691 = sbr.rel (%p4689) target = $region99
              $region96: #{vqvae_forward.1} parent=91 // loop_body
                %v4695 = vld [vmem:[%s4693] sm:$0xff]
                %4696 = vst [vmem:[%s4694] sm:$0xff] %v4695
                %v4697 = vld [vmem:[%s4693 + $0x8] sm:$0xff]
                %4698 = vst [vmem:[%s4694 + $0x8] sm:$0xff] %v4697
                %v4699 = vld [vmem:[%s4693 + $0x10] sm:$0xff]
                %4700 = vst [vmem:[%s4694 + $0x10] sm:$0xff] %v4699
                %v4701 = vld [vmem:[%s4693 + $0x18] sm:$0xff]
                %4702 = vst [vmem:[%s4694 + $0x30] sm:$0xff] %v4701
                %v4703 = vld [vmem:[%s4693 + $0x20] sm:$0xff]
                %4704 = vst [vmem:[%s4694 + $0x38] sm:$0xff] %v4703
                %v4705 = vld [vmem:[%s4693 + $0x28] sm:$0xff]
                %4706 = vst [vmem:[%s4694 + $0x40] sm:$0xff] %v4705
              $region97: #{vqvae_forward.1} parent=91 // loop_footer
                %s4692 = sadd.s32 1, %s4688
              $region98: #{vqvae_forward.1} parent=91 // loop_footer_branch
                %4687 = sbr.rel target = $region94
              $region99: #{vqvae_forward.1} parent=91 // loop_exit
                _
            $region92: #{vqvae_forward.1} parent=87 // pred_fallthru
              _
            // Predicated region
            $region100: #{vqvae_forward.1} parent=87 // pred_check
              _
            $region101: #{vqvae_forward.1} parent=87 // pred_check_branch
              %4708 = sbr.rel target = $region103
            $region102: #{vqvae_forward.1} parent=87 // pred_region
              _
            $region103: #{vqvae_forward.1} parent=87 // pred_fallthru
              _
          $region88: #{vqvae_forward.1} parent=83 // pred_fallthru
            _
          %4709 = vnop
        $region84: #{vqvae_forward.1} parent=79 // pred_fallthru
          _
        // Predicated region
        $region104: #{vqvae_forward.1} parent=79 // pred_check
          %p4710 = pneg %p396
        $region105: #{vqvae_forward.1} parent=79 // pred_check_branch
          %4712 = sbr.rel (%p4710) target = $region107
        $region106: #{vqvae_forward.1} parent=79 // pred_region
          %s4713 = smul.u32 3, %s32
          %s4714 = smul.addr %s4713, 8
          %s4715 = scalar_lea.vmem %s16, %s4714
          // Predicated region
          $region108: #{vqvae_forward.1} parent=106 // pred_check
            _
          $region109: #{vqvae_forward.1} parent=106 // pred_check_branch
            %4717 = sbr.rel (0) target = $region111
          $region110: #{vqvae_forward.1} parent=106 // pred_region
            // Predicated region
            $region112: #{vqvae_forward.1} parent=110 // pred_check
              _
            $region113: #{vqvae_forward.1} parent=110 // pred_check_branch
              %4719 = sbr.rel (0) target = $region115
            $region114: #{vqvae_forward.1} parent=110 // pred_region
              loop: start=0, step=1, limit=1
              $region116: #{vqvae_forward.1} parent=114 // loop_pre_header
                _
              $region117: #{vqvae_forward.1} parent=114 // loop_header
                %s4721 = sphi 0, %s4725
                %p4722 = scmp.ge.s32.totalorder %s4721, 1
                %s4726 = sphi %s4658, %s4658
                %s4727 = sphi %s4715, %s4715
              $region118: #{vqvae_forward.1} parent=114 // loop_header_branch
                %4724 = sbr.rel (%p4722) target = $region122
              $region119: #{vqvae_forward.1} parent=114 // loop_body
                %v4728 = vld [vmem:[%s4726] sm:$0xff]
                %4729 = vst [vmem:[%s4727] sm:$0xff] %v4728
                %v4730 = vld [vmem:[%s4726 + $0x8] sm:$0xff]
                %4731 = vst [vmem:[%s4727 + $0x8] sm:$0xff] %v4730
                %v4732 = vld [vmem:[%s4726 + $0x10] sm:$0xff]
                %4733 = vst [vmem:[%s4727 + $0x10] sm:$0xff] %v4732
                %v4734 = vld [vmem:[%s4726 + $0x18] sm:$0xff]
                %4735 = vst [vmem:[%s4727 + $0x30] sm:$0xff] %v4734
                %v4736 = vld [vmem:[%s4726 + $0x20] sm:$0xff]
                %4737 = vst [vmem:[%s4727 + $0x38] sm:$0xff] %v4736
                %v4738 = vld [vmem:[%s4726 + $0x28] sm:$0xff]
                %4739 = vst [vmem:[%s4727 + $0x40] sm:$0xff] %v4738
              $region120: #{vqvae_forward.1} parent=114 // loop_footer
                %s4725 = sadd.s32 1, %s4721
              $region121: #{vqvae_forward.1} parent=114 // loop_footer_branch
                %4720 = sbr.rel target = $region117
              $region122: #{vqvae_forward.1} parent=114 // loop_exit
                _
            $region115: #{vqvae_forward.1} parent=110 // pred_fallthru
              _
            // Predicated region
            $region123: #{vqvae_forward.1} parent=110 // pred_check
              _
            $region124: #{vqvae_forward.1} parent=110 // pred_check_branch
              %4741 = sbr.rel target = $region126
            $region125: #{vqvae_forward.1} parent=110 // pred_region
              _
            $region126: #{vqvae_forward.1} parent=110 // pred_fallthru
              _
          $region111: #{vqvae_forward.1} parent=106 // pred_fallthru
            _
          %4742 = vnop
        $region107: #{vqvae_forward.1} parent=79 // pred_fallthru
          _
        // Predicated region
        $region127: #{vqvae_forward.1} parent=79 // pred_check
          %p4743 = pneg %p422
        $region128: #{vqvae_forward.1} parent=79 // pred_check_branch
          %4745 = sbr.rel (%p4743) target = $region130
        $region129: #{vqvae_forward.1} parent=79 // pred_region
          %s4746 = smul.u32 3, %s32
        $region130: #{vqvae_forward.1} parent=79 // pred_fallthru
          _
        // Predicated region
        $region131: #{vqvae_forward.1} parent=79 // pred_check
          %p4747 = pneg %p448
        $region132: #{vqvae_forward.1} parent=79 // pred_check_branch
          %4749 = sbr.rel (%p4747) target = $region134
        $region133: #{vqvae_forward.1} parent=79 // pred_region
          %s4750 = smul.u32 3, %s32
        $region134: #{vqvae_forward.1} parent=79 // pred_fallthru
          _
        // Predicated region
        $region135: #{vqvae_forward.1} parent=79 // pred_check
          %p4751 = pneg %p474
        $region136: #{vqvae_forward.1} parent=79 // pred_check_branch
          %4753 = sbr.rel (%p4751) target = $region138
        $region137: #{vqvae_forward.1} parent=79 // pred_region
          _
        $region138: #{vqvae_forward.1} parent=79 // pred_fallthru
          _
        // Predicated region
        $region139: #{vqvae_forward.1} parent=79 // pred_check
          %p4754 = pneg %p500
        $region140: #{vqvae_forward.1} parent=79 // pred_check_branch
          %4756 = sbr.rel (%p4754) target = $region142
        $region141: #{vqvae_forward.1} parent=79 // pred_region
          _
        $region142: #{vqvae_forward.1} parent=79 // pred_fallthru
          _
      $region80: #{vqvae_forward.1} parent=5 // pred_fallthru
        _
      %p4757 = scmp.le.s32.totalorder 2, %s27
      // Predicated region
      $region143: #{vqvae_forward.1} parent=5 // pred_check
        %p4758 = pneg %p4757
      $region144: #{vqvae_forward.1} parent=5 // pred_check_branch
        %4760 = sbr.rel (%p4758) target = $region146
      $region145: #{vqvae_forward.1} parent=5 // pred_region
        %s4761 = ssub.s32 %s27, 2
        // Predicated region
        $region147: #{vqvae_forward.1} parent=145 // pred_check
          %p4762 = pneg %p376
        $region148: #{vqvae_forward.1} parent=145 // pred_check_branch
          %4764 = sbr.rel (%p4762) target = $region150
        $region149: #{vqvae_forward.1} parent=145 // pred_region
          %s4765 = sand.u32 %s361, 1
          %s4766 = sand.u32 %s361, 1
          %s4767 = smul.addr %s4766, 48
          %s4768 = scalar_lea.vmem [#allocation3], %s4767
        $region150: #{vqvae_forward.1} parent=145 // pred_fallthru
          _
        // Predicated region
        $region151: #{vqvae_forward.1} parent=145 // pred_check
          %p4769 = pneg %p402
        $region152: #{vqvae_forward.1} parent=145 // pred_check_branch
          %4771 = sbr.rel (%p4769) target = $region154
        $region153: #{vqvae_forward.1} parent=145 // pred_region
          %s4772 = sand.u32 %s387, 1
          %s4773 = sand.u32 %s387, 1
          %s4774 = smul.addr %s4773, 48
          %s4775 = scalar_lea.vmem [#allocation4], %s4774
        $region154: #{vqvae_forward.1} parent=145 // pred_fallthru
          _
        // Predicated region
        $region155: #{vqvae_forward.1} parent=145 // pred_check
          %p4776 = pneg %p428
        $region156: #{vqvae_forward.1} parent=145 // pred_check_branch
          %4778 = sbr.rel (%p4776) target = $region158
        $region157: #{vqvae_forward.1} parent=145 // pred_region
          %s4779 = smul.u32 3, %s33
          %p4780 = scmp.lt.s32.totalorder %s4779, 5
          %s4781 = scalar_select %p4780, %s4779, 5
          %s4782 = scalar_lea.vmem %s17, %s4781
        $region158: #{vqvae_forward.1} parent=145 // pred_fallthru
          _
        // Predicated region
        $region159: #{vqvae_forward.1} parent=145 // pred_check
          %p4783 = pneg %p454
        $region160: #{vqvae_forward.1} parent=145 // pred_check_branch
          %4785 = sbr.rel (%p4783) target = $region162
        $region161: #{vqvae_forward.1} parent=145 // pred_region
          %s4786 = smul.u32 3, %s33
          %p4787 = scmp.lt.s32.totalorder %s4786, 5
          %s4788 = scalar_select %p4787, %s4786, 5
          %s4789 = smul.addr %s4788, 4
          %s4790 = scalar_lea.vmem %s18, %s4789
        $region162: #{vqvae_forward.1} parent=145 // pred_fallthru
          _
        // Predicated region
        $region163: #{vqvae_forward.1} parent=145 // pred_check
          %p4791 = pneg %p480
        $region164: #{vqvae_forward.1} parent=145 // pred_check_branch
          %4793 = sbr.rel (%p4791) target = $region166
        $region165: #{vqvae_forward.1} parent=145 // pred_region
          %p4794 = scmp.lt.s32.totalorder %s33, 1
          %s4795 = scalar_select %p4794, %s33, 1
          %s4796 = smul.addr %s4795, 4
          %s4797 = smul.addr %s4796, 8
          %s4798 = scalar_lea.vmem %s19, %s4797
        $region166: #{vqvae_forward.1} parent=145 // pred_fallthru
          _
        // Predicated region
        $region167: #{vqvae_forward.1} parent=145 // pred_check
          %p4799 = pneg %p506
        $region168: #{vqvae_forward.1} parent=145 // pred_check_branch
          %4801 = sbr.rel (%p4799) target = $region170
        $region169: #{vqvae_forward.1} parent=145 // pred_region
          %p4802 = scmp.lt.s32.totalorder %s33, 1
          %s4803 = scalar_select %p4802, %s33, 1
          %s4804 = smul.addr %s4803, 2
          %s4805 = scalar_lea.vmem %s20, %s4804
        $region170: #{vqvae_forward.1} parent=145 // pred_fallthru
          _
      $region146: #{vqvae_forward.1} parent=5 // pred_fallthru
        _
    $region6: #{vqvae_forward.1} parent=1 // loop_footer
      %s31 = sadd.s32 1, %s27
    $region7: #{vqvae_forward.1} parent=1 // loop_footer_branch
      %26 = sbr.rel target = $region3
    $region8: #{vqvae_forward.1} parent=1 // loop_exit
      _

</llo_original>
